<compile_context>
chip_gen: v7x
topology: tpu7x:2x2x1
jax: 0.10.0
libtpu: 0.0.40
codegen_flags: <defaults>
</compile_context>

<pallas_src>
import functools
import math

import numpy as np
import jax
import jax.numpy as jnp
from jax import lax
from jax.experimental import pallas as pl
from jax.experimental.pallas import tpu as pltpu


OUT_LANES = 128                                   # lane-dense output slab width
_SIGMA_FLOOR = float(jnp.finfo(jnp.float32).eps) ** 0.5
_HALF_LOG_2PI = 0.5 * math.log(2.0 * math.pi)


# ----------------------------------------------------------------------------
# Small numerically-stable helpers (used both in-kernel and in the reference)
# ----------------------------------------------------------------------------
def _softplus(x):
    return jnp.maximum(x, 0.0) + jnp.log(1.0 + jnp.exp(-jnp.abs(x)))


def _sigmoid(x):
    return 1.0 / (1.0 + jnp.exp(-x))


def _log_softmax(x):
    m = jnp.max(x, axis=-1, keepdims=True)
    s = x - m
    return s - jnp.log(jnp.sum(jnp.exp(s), axis=-1, keepdims=True))


def _sum_all(x):
    """[R, C] -> [1, 1]: lane reduce then sublane reduce (explicit 2-step)."""
    return jnp.sum(jnp.sum(x, axis=-1, keepdims=True), axis=0, keepdims=True)


# ----------------------------------------------------------------------------
# The fused Pallas kernel
# ----------------------------------------------------------------------------
def _msmodel_fused_kernel(
        views_ref, labels_ref,
        enc_w1, enc_b1, enc_w2, enc_b2,
        out_w1, out_b1, out_w2, out_b2, out_w3, out_b3, out_w4, out_b4,
        dec_w1, dec_b1, dec_w2, dec_b2, rec_w,
        slab_ref, loss_ref,
        *, num_views, encode_dim, inv_temperature, rec_loss_weight,
        kl_weight, cl_loss_weight_us):
    f32 = jnp.float32
    V, E = num_views, encode_dim
    B = views_ref.shape[0]
    inv_b = 1.0 / B

    def mm(a, b):
        return jnp.dot(a, b, preferred_element_type=f32)

    x = views_ref[...]                                             # [B, D]

    # ---- fused encoders (shared + 6 per-view): exactly 2 matmuls -------------
    h = jnp.maximum(mm(x, enc_w1[...]) + enc_b1[...], 0.0)         # [B, (1+V)*H]
    encoded = mm(h, enc_w2[...]) + enc_b2[...]                     # [B, (1+V)*E]
    #   lanes [0:E)        -> encoded_share
    #   lanes [E*(1+v), E*(2+v)) -> encoded_view v

    # ---- output head: 4 matmuls (first layer consumes the flat activation) ---
    h1 = jnp.maximum(mm(encoded, out_w1[...]) + out_b1[...], 0.0)  # [B, 7E/2]
    h2 = jnp.maximum(mm(h1, out_w2[...]) + out_b2[...], 0.0)       # [B, 7E/4]
    h3 = jnp.maximum(mm(h2, out_w3[...]) + out_b3[...], 0.0)       # [B, 7E/8]
    logits = mm(h3, out_w4[...]) + out_b4[...]                     # [B, 3]

    # ---- ZILN loss -------------------------------------------------------------
    labels = labels_ref[...]                                       # [B, 1]
    p_pred = logits[:, 0:1]
    mu = logits[:, 1:2]
    s_raw = logits[:, 2:3]
    p_ground = (labels > 0.0).astype(f32)
    cls_loss = (jnp.maximum(p_pred, 0.0) - p_pred * p_ground
                + jnp.log(1.0 + jnp.exp(-jnp.abs(p_pred))))
    sigma = jnp.maximum(_softplus(s_raw), _SIGMA_FLOOR)
    safe_labels = p_ground * labels + (1.0 - p_ground)
    logx = jnp.log(safe_labels)
    log_prob = (-logx - jnp.log(sigma) - _HALF_LOG_2PI
                - (logx - mu) ** 2 / (2.0 * sigma * sigma))
    reg_loss = -p_ground * log_prob
    loss = _sum_all(cls_loss + reg_loss) * inv_b                   # [1, 1]

    # ---- fused decoders: 2 matmuls + 1 lane-weighted reduction ----------------
    dh = jnp.maximum(mm(encoded, dec_w1[...]) + dec_b1[...], 0.0)  # [B, V*H]
    rebuild = mm(dh, dec_w2[...]) + dec_b2[...]                    # [B, D]
    diff = x - rebuild
    rec_total = _sum_all(diff * diff * rec_w[...]) * inv_b         # sum_v mean MSE_v
    loss = loss + rec_loss_weight * rec_total

    # ---- KL(share || view), batchmean (NaN-safe: log_softmax on both sides) ---
    enc_share = encoded[:, 0:E]
    encs = [encoded[:, E * (1 + v):E * (2 + v)] for v in range(V)]
    log_p_share = _log_softmax(enc_share)
    kl_total = jnp.zeros((1, 1), f32)
    for v in range(V):
        log_q = _log_softmax(encs[v])
        q = jnp.exp(log_q)
        kl_total = kl_total + _sum_all(q * (log_q - log_p_share))
    loss = loss + (kl_weight * inv_b) * kl_total

    # ---- InfoNCE: 15 unordered pairs, each Gram reused for both directions ----
    dn = (((1,), (1,)), ((), ()))      # contract both operands on the last (lane) dim
    cl_total = jnp.zeros((1, 1), f32)
    for qi in range(V):
        for ki in range(qi + 1, V):
            s = lax.dot_general(encs[qi], encs[ki], dn,
                                preferred_element_type=f32) * inv_temperature
            pos = jnp.sum(encs[qi] * encs[ki], axis=-1,
                          keepdims=True) * inv_temperature          # diag(s), [B,1]
            # direction (qi -> ki): row logsumexp
            m1 = jnp.max(s, axis=-1, keepdims=True)
            lse1 = jnp.log(jnp.sum(jnp.exp(s - m1), axis=-1, keepdims=True)) + m1
            # direction (ki -> qi): preds = s.T, so column logsumexp of s
            m0 = jnp.max(s, axis=0, keepdims=True)
            lse0 = jnp.log(jnp.sum(jnp.exp(s - m0), axis=0, keepdims=True)) + m0
            cl_total = (cl_total + _sum_all(lse1) + _sum_all(lse0)
                        - 2.0 * _sum_all(pos))
    loss = loss + (cl_loss_weight_us * inv_b) * cl_total

    # ---- ZILN prediction head --------------------------------------------------
    p_out = _sigmoid(p_pred)                                       # [B, 1]
    sigma_pred = _softplus(s_raw)
    value = p_out * jnp.exp(mu + 0.5 * sigma_pred * sigma_pred)    # [B, 1]

    # ---- outputs: lane-dense [B, 128] slab + separate (1,1) scalar loss --------
    lane = lax.broadcasted_iota(jnp.int32, (B, OUT_LANES), 1)
    slab = jnp.where(lane == 0, p_pred,
           jnp.where(lane == 1, mu,
           jnp.where(lane == 2, s_raw,
           jnp.where(lane == 3, p_out,
           jnp.where(lane == 4, value, 0.0)))))
    slab_ref[...] = slab
    loss_ref[...] = loss


# ----------------------------------------------------------------------------
# Parameter init (same structure / init as the unfused version)
# ----------------------------------------------------------------------------
def init_dnn(key, dims):
    params = []
    for i in range(len(dims) - 1):
        key, kw = jax.random.split(key)
        w = jax.random.normal(kw, (dims[i], dims[i + 1]), jnp.float32) * 0.05
        b = jnp.zeros((dims[i + 1],), jnp.float32)
        params.append((w, b))
    return params, key


def init_msmodel_params(key, views_input_dim, hidden_unit, encode_dim):
    params = {"encoders_specific": [], "decoders_specific": []}
    for d in views_input_dim:
        enc, key = init_dnn(key, [d] + hidden_unit + [encode_dim])
        dec, key = init_dnn(key, [2 * encode_dim] + list(reversed(hidden_unit)) + [d])
        params["encoders_specific"].append(enc)
        params["decoders_specific"].append(dec)
    params["encoder_share"], key = init_dnn(
        key, [sum(views_input_dim)] + hidden_unit + [encode_dim])
    params["output_layer"], key = init_dnn(
        key, [7 * encode_dim, 7 * encode_dim // 2, 7 * encode_dim // 4,
              7 * encode_dim // 8, 3])
    return params


# ----------------------------------------------------------------------------
# One-time parameter packing: block-diagonal fusion of all per-view stages
# ----------------------------------------------------------------------------
def pack_msmodel_params(params, views_input_dim, hidden_unit, encode_dim):
    assert len(hidden_unit) == 1, "fused kernel is specialized for one hidden layer"
    V, E, H = len(views_input_dim), encode_dim, hidden_unit[0]
    assert V + 1 == 7, "output layer expects 7 * encode_dim input (6 views + share)"
    D = int(sum(views_input_dim))
    offs = np.concatenate([[0], np.cumsum(views_input_dim)]).astype(int)

    def npf(a):
        return np.asarray(jax.device_get(a), np.float32)

    enc = params["encoders_specific"]
    dec = params["decoders_specific"]
    shr = params["encoder_share"]
    ol = params["output_layer"]

    # encoder layer 1: [D, H + V*H]  (shared dense columns | per-view block-diag)
    enc_w1 = np.zeros((D, (1 + V) * H), np.float32)
    enc_b1 = np.zeros((1, (1 + V) * H), np.float32)
    enc_w1[:, :H] = npf(shr[0][0])
    enc_b1[0, :H] = npf(shr[0][1])

    # encoder layer 2: block-diag [(1+V)*H, (1+V)*E], share block first
    enc_w2 = np.zeros(((1 + V) * H, (1 + V) * E), np.float32)
    enc_b2 = np.zeros((1, (1 + V) * E), np.float32)
    enc_w2[:H, :E] = npf(shr[1][0])
    enc_b2[0, :E] = npf(shr[1][1])

    # decoder layer 1: [(1+V)*E, V*H]  (share rows tiled, view rows block-diag)
    dec_w1 = np.zeros(((1 + V) * E, V * H), np.float32)
    dec_b1 = np.zeros((1, V * H), np.float32)
    # decoder layer 2: block-diag [V*H, D] + reconstruction lane weights
    dec_w2 = np.zeros((V * H, D), np.float32)
    dec_b2 = np.zeros((1, D), np.float32)
    rec_w = np.zeros((1, D), np.float32)

    for v in range(V):
        r0, r1 = int(offs[v]), int(offs[v + 1])
        enc_w1[r0:r1, H + v * H:H + (v + 1) * H] = npf(enc[v][0][0])
        enc_b1[0, H + v * H:H + (v + 1) * H] = npf(enc[v][0][1])
        enc_w2[H + v * H:H + (v + 1) * H, E + v * E:E + (v + 1) * E] = npf(enc[v][1][0])
        enc_b2[0, E + v * E:E + (v + 1) * E] = npf(enc[v][1][1])

        dw1 = npf(dec[v][0][0])                   # [2E, H]: rows = [share | view]
        dec_w1[:E, v * H:(v + 1) * H] = dw1[:E]
        dec_w1[E + v * E:E + (v + 1) * E, v * H:(v + 1) * H] = dw1[E:]
        dec_b1[0, v * H:(v + 1) * H] = npf(dec[v][0][1])
        dec_w2[v * H:(v + 1) * H, r0:r1] = npf(dec[v][1][0])
        dec_b2[0, r0:r1] = npf(dec[v][1][1])
        rec_w[0, r0:r1] = 1.0 / views_input_dim[v]

    ow1 = npf(ol[0][0])
    assert ow1.shape[0] == (1 + V) * E

    packed = {
        "enc_w1": enc_w1, "enc_b1": enc_b1, "enc_w2": enc_w2, "enc_b2": enc_b2,
        "out_w1": ow1, "out_b1": npf(ol[0][1]).reshape(1, -1),
        "out_w2": npf(ol[1][0]), "out_b2": npf(ol[1][1]).reshape(1, -1),
        "out_w3": npf(ol[2][0]), "out_b3": npf(ol[2][1]).reshape(1, -1),
        "out_w4": npf(ol[3][0]), "out_b4": npf(ol[3][1]).reshape(1, -1),
        "dec_w1": dec_w1, "dec_b1": dec_b1, "dec_w2": dec_w2, "dec_b2": dec_b2,
        "rec_w": rec_w,
    }
    return {k: jnp.asarray(v) for k, v in packed.items()}


_PARAM_ORDER = ("enc_w1", "enc_b1", "enc_w2", "enc_b2",
                "out_w1", "out_b1", "out_w2", "out_b2",
                "out_w3", "out_b3", "out_w4", "out_b4",
                "dec_w1", "dec_b1", "dec_w2", "dec_b2", "rec_w")


def pack_views(views):
    """Lane-concatenate the views once, outside the hot path."""
    return jnp.concatenate([v.astype(jnp.float32) for v in views], axis=-1)


# ----------------------------------------------------------------------------
# Fused forward wrapper (exactly one pallas_call)
# ----------------------------------------------------------------------------
def msmodel_forward_fused(packed, views_flat, labels, *, views_input_dim,
                          encode_dim, temperature, rec_loss_weight, kl_weight,
                          cl_loss_weight_us):
    b = views_flat.shape[0]
    V, E = len(views_input_dim), encode_dim
    labels_col = labels.astype(jnp.float32).reshape(b, 1)

    kernel = functools.partial(
        _msmodel_fused_kernel,
        num_views=V,
        encode_dim=E,
        inv_temperature=float(1.0 / temperature),
        rec_loss_weight=float(rec_loss_weight),
        kl_weight=float(kl_weight),
        cl_loss_weight_us=float(cl_loss_weight_us))

    args = [views_flat.astype(jnp.float32), labels_col] + \
           [packed[k] for k in _PARAM_ORDER]

    # Advisory cost estimate: InfoNCE Gram matmuls dominate flops/transcendentals.
    n_pairs = V * (V - 1) // 2
    mm_sizes = sum(int(packed[k].shape[0]) * int(packed[k].shape[1])
                   for k in ("enc_w1", "enc_w2", "out_w1", "out_w2", "out_w3",
                             "out_w4", "dec_w1", "dec_w2"))
    flops = int(2 * b * mm_sizes + 2 * n_pairs * b * b * E + 2 * n_pairs * b * E)
    transcendentals = int(2 * n_pairs * b * b + 2 * V * b * E + 8 * b)
    bytes_accessed = int(4 * (views_flat.size + labels_col.size
                              + sum(int(packed[k].size) for k in _PARAM_ORDER)
                              + b * OUT_LANES + 1))

    vmem = pl.BlockSpec(memory_space=pltpu.MemorySpace.VMEM)
    slab, loss = pl.pallas_call(
        kernel,
        out_shape=(jax.ShapeDtypeStruct((b, OUT_LANES), jnp.float32),
                   jax.ShapeDtypeStruct((1, 1), jnp.float32)),
        in_specs=[vmem] * len(args),
        out_specs=(vmem, vmem),
        cost_estimate=pl.CostEstimate(flops=flops,
                                      transcendentals=transcendentals,
                                      bytes_accessed=bytes_accessed),
    )(*args)

    return {"logit": slab[:, 0:3],
            "loss": loss[0, 0],
            "prediction_p": slab[:, 3],
            "prediction_v": slab[:, 4]}


# ----------------------------------------------------------------------------
# Pure-JAX reference (mirrors the original PyTorch forward) for validation
# ----------------------------------------------------------------------------
def _dnn_ref(params, x):
    n = len(params)
    for i, (w, b) in enumerate(params):
        x = jnp.dot(x, w, precision=lax.Precision.HIGHEST) + b
        if i < n - 1:
            x = jnp.maximum(x, 0.0)
    return x


def msmodel_forward_reference(params, views, labels, *, temperature,
                              rec_loss_weight, kl_weight, cl_loss_weight_us):
    encoded_views = [_dnn_ref(e, v)
                     for v, e in zip(views, params["encoders_specific"])]
    encoded_share = _dnn_ref(params["encoder_share"], jnp.concatenate(views, -1))
    logits = _dnn_ref(params["output_layer"],
                      jnp.concatenate([encoded_share] + encoded_views, -1))
    labels = labels.astype(jnp.float32)

    p_pred, mu = logits[:, 0], logits[:, 1]
    p_ground = (labels > 0.0).astype(jnp.float32)
    cls_loss = (jnp.maximum(p_pred, 0.0) - p_pred * p_ground
                + jnp.log(1.0 + jnp.exp(-jnp.abs(p_pred))))
    sigma = jnp.maximum(_softplus(logits[:, 2]), _SIGMA_FLOOR)
    safe = p_ground * labels + (1.0 - p_ground)
    logx = jnp.log(safe)
    log_prob = (-logx - jnp.log(sigma) - _HALF_LOG_2PI
                - (logx - mu) ** 2 / (2.0 * sigma * sigma))
    loss = jnp.mean(cls_loss - p_ground * log_prob)

    for view, ev, d in zip(views, encoded_views, params["decoders_specific"]):
        rebuild = _dnn_ref(d, jnp.concatenate([encoded_share, ev], -1))
        loss += rec_loss_weight * jnp.mean((view - rebuild) ** 2)

    log_p = _log_softmax(encoded_share)
    for ev in encoded_views:
        log_q = _log_softmax(ev)
        q = jnp.exp(log_q)
        loss += kl_weight * jnp.sum(q * (log_q - log_p)) / encoded_share.shape[0]

    for qi in range(len(encoded_views)):
        for ki in range(len(encoded_views)):
            if qi == ki:
                continue
            s = jnp.matmul(encoded_views[qi], encoded_views[ki].T,
                           precision=lax.Precision.HIGHEST) / temperature
            m = jnp.max(s, -1, keepdims=True)
            lse = jnp.log(jnp.sum(jnp.exp(s - m), -1, keepdims=True)) + m
            pos = jnp.sum(encoded_views[qi] * encoded_views[ki], -1,
                          keepdims=True) / temperature
            loss += cl_loss_weight_us * jnp.mean(lse - pos)

    p = _sigmoid(logits[:, 0])
    sp = _softplus(logits[:, 2])
    value = p * jnp.exp(logits[:, 1] + 0.5 * jnp.square(sp))
    return {"logit": logits, "loss": loss, "prediction_p": p, "prediction_v": value}


# ----------------------------------------------------------------------------
# Driver
# ----------------------------------------------------------------------------
if __name__ == "__main__":
    B = 8
    views_input_dim = [8, 8, 16, 16, 8, 8]      # 6 views -> 7*encode_dim head input
    hidden_unit = [32]
    encode_dim = 16
    temperature = 0.2
    rec_loss_weight = 0.01
    kl_weight = 0.1
    cl_loss_weight_us = 0.1

    key = jax.random.PRNGKey(0)
    key_params, key_mask, key_lab, *view_keys = jax.random.split(
        key, 3 + len(views_input_dim))

    params = init_msmodel_params(key_params, views_input_dim, hidden_unit, encode_dim)
    packed = pack_msmodel_params(params, views_input_dim, hidden_unit, encode_dim)

    views = [jax.random.normal(vk, (B, d), jnp.float32) * 0.5
             for vk, d in zip(view_keys, views_input_dim)]
    mask = jax.random.uniform(key_mask, (B,)) > 0.4
    labels = jnp.where(mask, jnp.exp(jax.random.normal(key_lab, (B,))), 0.0)

    views_flat = pack_views(views)               # layout prep out of the hot path

    fwd = jax.jit(functools.partial(
        msmodel_forward_fused,
        views_input_dim=tuple(views_input_dim),
        encode_dim=encode_dim,
        temperature=temperature,
        rec_loss_weight=rec_loss_weight,
        kl_weight=kl_weight,
        cl_loss_weight_us=cl_loss_weight_us))
    out = jax.block_until_ready(fwd(packed, views_flat, labels))

    ref = jax.jit(functools.partial(
        msmodel_forward_reference,
        temperature=temperature,
        rec_loss_weight=rec_loss_weight,
        kl_weight=kl_weight,
        cl_loss_weight_us=cl_loss_weight_us))(params, views, labels)
    ref = jax.block_until_ready(ref)

    assert out["logit"].shape == (B, 3)
    assert out["loss"].shape == ()
    assert out["prediction_p"].shape == (B,)
    assert out["prediction_v"].shape == (B,)
    assert bool(jnp.isfinite(out["loss"]))
    assert bool(jnp.allclose(out["logit"], ref["logit"], rtol=5e-3, atol=5e-3))
    assert bool(jnp.allclose(out["loss"], ref["loss"], rtol=5e-3, atol=5e-3))
    assert bool(jnp.allclose(out["prediction_p"], ref["prediction_p"],
                             rtol=5e-3, atol=5e-3))
    assert bool(jnp.allclose(out["prediction_v"], ref["prediction_v"],
                             rtol=5e-3, atol=5e-3))

    print("KERNEL_OK")
</pallas_src>

<mosaic_0001>
module attributes {stable_mosaic.version = 11 : i64} {
  func.func @_msmodel_fused_kernel(%arg0: memref<8x64xf32, #tpu.memory_space<vmem>>, %arg1: memref<8x1xf32, #tpu.memory_space<vmem>>, %arg2: memref<64x224xf32, #tpu.memory_space<vmem>>, %arg3: memref<1x224xf32, #tpu.memory_space<vmem>>, %arg4: memref<224x112xf32, #tpu.memory_space<vmem>>, %arg5: memref<1x112xf32, #tpu.memory_space<vmem>>, %arg6: memref<112x56xf32, #tpu.memory_space<vmem>>, %arg7: memref<1x56xf32, #tpu.memory_space<vmem>>, %arg8: memref<56x28xf32, #tpu.memory_space<vmem>>, %arg9: memref<1x28xf32, #tpu.memory_space<vmem>>, %arg10: memref<28x14xf32, #tpu.memory_space<vmem>>, %arg11: memref<1x14xf32, #tpu.memory_space<vmem>>, %arg12: memref<14x3xf32, #tpu.memory_space<vmem>>, %arg13: memref<1x3xf32, #tpu.memory_space<vmem>>, %arg14: memref<112x192xf32, #tpu.memory_space<vmem>>, %arg15: memref<1x192xf32, #tpu.memory_space<vmem>>, %arg16: memref<192x64xf32, #tpu.memory_space<vmem>>, %arg17: memref<1x64xf32, #tpu.memory_space<vmem>>, %arg18: memref<1x64xf32, #tpu.memory_space<vmem>>, %arg19: memref<8x128xf32, #tpu.memory_space<vmem>>, %arg20: memref<1x1xf32, #tpu.memory_space<vmem>>) attributes {dimension_semantics = [], scalar_prefetch = 0 : i64, scratch_operands = 0 : i64, tpu.core_type = #tpu.core_type<tc>} {
    %c0 = arith.constant 0 : index
    %c0_0 = arith.constant 0 : index
    %0 = vector.load %arg0[%c0, %c0_0] : memref<8x64xf32, #tpu.memory_space<vmem>>, vector<8x64xf32>
    %c0_1 = arith.constant 0 : index
    %c0_2 = arith.constant 0 : index
    %1 = vector.load %arg2[%c0_1, %c0_2] : memref<64x224xf32, #tpu.memory_space<vmem>>, vector<64x224xf32>
    %cst = arith.constant dense<0.000000e+00> : vector<8x224xf32>
    %2 = tpu.matmul %0, %1, %cst {dimension_numbers = #tpu.dot_dimension_numbers<[1], [0], [0], [1], [0, 0, 1, 1], [], []>} : vector<8x64xf32>, vector<64x224xf32>, vector<8x224xf32> -> vector<8x224xf32>
    %c0_3 = arith.constant 0 : index
    %c0_4 = arith.constant 0 : index
    %3 = vector.load %arg3[%c0_3, %c0_4] : memref<1x224xf32, #tpu.memory_space<vmem>>, vector<1x224xf32>
    %4 = vector.broadcast %3 : vector<1x224xf32> to vector<8x224xf32>
    %5 = arith.addf %2, %4 : vector<8x224xf32>
    %cst_5 = arith.constant 0.000000e+00 : f32
    %6 = vector.broadcast %cst_5 : f32 to vector<8x224xf32>
    %7 = arith.maximumf %5, %6 : vector<8x224xf32>
    %c0_6 = arith.constant 0 : index
    %c0_7 = arith.constant 0 : index
    %8 = vector.load %arg4[%c0_6, %c0_7] : memref<224x112xf32, #tpu.memory_space<vmem>>, vector<224x112xf32>
    %cst_8 = arith.constant dense<0.000000e+00> : vector<8x112xf32>
    %9 = tpu.matmul %7, %8, %cst_8 {dimension_numbers = #tpu.dot_dimension_numbers<[1], [0], [0], [1], [0, 0, 1, 1], [], []>} : vector<8x224xf32>, vector<224x112xf32>, vector<8x112xf32> -> vector<8x112xf32>
    %c0_9 = arith.constant 0 : index
    %c0_10 = arith.constant 0 : index
    %10 = vector.load %arg5[%c0_9, %c0_10] : memref<1x112xf32, #tpu.memory_space<vmem>>, vector<1x112xf32>
    %11 = vector.broadcast %10 : vector<1x112xf32> to vector<8x112xf32>
    %12 = arith.addf %9, %11 : vector<8x112xf32>
    %c0_11 = arith.constant 0 : index
    %c0_12 = arith.constant 0 : index
    %13 = vector.load %arg6[%c0_11, %c0_12] : memref<112x56xf32, #tpu.memory_space<vmem>>, vector<112x56xf32>
    %cst_13 = arith.constant dense<0.000000e+00> : vector<8x56xf32>
    %14 = tpu.matmul %12, %13, %cst_13 {dimension_numbers = #tpu.dot_dimension_numbers<[1], [0], [0], [1], [0, 0, 1, 1], [], []>} : vector<8x112xf32>, vector<112x56xf32>, vector<8x56xf32> -> vector<8x56xf32>
    %c0_14 = arith.constant 0 : index
    %c0_15 = arith.constant 0 : index
    %15 = vector.load %arg7[%c0_14, %c0_15] : memref<1x56xf32, #tpu.memory_space<vmem>>, vector<1x56xf32>
    %16 = vector.broadcast %15 : vector<1x56xf32> to vector<8x56xf32>
    %17 = arith.addf %14, %16 : vector<8x56xf32>
    %cst_16 = arith.constant 0.000000e+00 : f32
    %18 = vector.broadcast %cst_16 : f32 to vector<8x56xf32>
    %19 = arith.maximumf %17, %18 : vector<8x56xf32>
    %c0_17 = arith.constant 0 : index
    %c0_18 = arith.constant 0 : index
    %20 = vector.load %arg8[%c0_17, %c0_18] : memref<56x28xf32, #tpu.memory_space<vmem>>, vector<56x28xf32>
    %cst_19 = arith.constant dense<0.000000e+00> : vector<8x28xf32>
    %21 = tpu.matmul %19, %20, %cst_19 {dimension_numbers = #tpu.dot_dimension_numbers<[1], [0], [0], [1], [0, 0, 1, 1], [], []>} : vector<8x56xf32>, vector<56x28xf32>, vector<8x28xf32> -> vector<8x28xf32>
    %c0_20 = arith.constant 0 : index
    %c0_21 = arith.constant 0 : index
    %22 = vector.load %arg9[%c0_20, %c0_21] : memref<1x28xf32, #tpu.memory_space<vmem>>, vector<1x28xf32>
    %23 = vector.broadcast %22 : vector<1x28xf32> to vector<8x28xf32>
    %24 = arith.addf %21, %23 : vector<8x28xf32>
    %cst_22 = arith.constant 0.000000e+00 : f32
    %25 = vector.broadcast %cst_22 : f32 to vector<8x28xf32>
    %26 = arith.maximumf %24, %25 : vector<8x28xf32>
    %c0_23 = arith.constant 0 : index
    %c0_24 = arith.constant 0 : index
    %27 = vector.load %arg10[%c0_23, %c0_24] : memref<28x14xf32, #tpu.memory_space<vmem>>, vector<28x14xf32>
    %cst_25 = arith.constant dense<0.000000e+00> : vector<8x14xf32>
    %28 = tpu.matmul %26, %27, %cst_25 {dimension_numbers = #tpu.dot_dimension_numbers<[1], [0], [0], [1], [0, 0, 1, 1], [], []>} : vector<8x28xf32>, vector<28x14xf32>, vector<8x14xf32> -> vector<8x14xf32>
    %c0_26 = arith.constant 0 : index
    %c0_27 = arith.constant 0 : index
    %29 = vector.load %arg11[%c0_26, %c0_27] : memref<1x14xf32, #tpu.memory_space<vmem>>, vector<1x14xf32>
    %30 = vector.broadcast %29 : vector<1x14xf32> to vector<8x14xf32>
    %31 = arith.addf %28, %30 : vector<8x14xf32>
    %cst_28 = arith.constant 0.000000e+00 : f32
    %32 = vector.broadcast %cst_28 : f32 to vector<8x14xf32>
    %33 = arith.maximumf %31, %32 : vector<8x14xf32>
    %c0_29 = arith.constant 0 : index
    %c0_30 = arith.constant 0 : index
    %34 = vector.load %arg12[%c0_29, %c0_30] : memref<14x3xf32, #tpu.memory_space<vmem>>, vector<14x3xf32>
    %cst_31 = arith.constant dense<0.000000e+00> : vector<8x3xf32>
    %35 = tpu.matmul %33, %34, %cst_31 {dimension_numbers = #tpu.dot_dimension_numbers<[1], [0], [0], [1], [0, 0, 1, 1], [], []>} : vector<8x14xf32>, vector<14x3xf32>, vector<8x3xf32> -> vector<8x3xf32>
    %c0_32 = arith.constant 0 : index
    %c0_33 = arith.constant 0 : index
    %36 = vector.load %arg13[%c0_32, %c0_33] : memref<1x3xf32, #tpu.memory_space<vmem>>, vector<1x3xf32>
    %37 = vector.broadcast %36 : vector<1x3xf32> to vector<8x3xf32>
    %38 = arith.addf %35, %37 : vector<8x3xf32>
    %c0_34 = arith.constant 0 : index
    %c0_35 = arith.constant 0 : index
    %39 = vector.load %arg1[%c0_34, %c0_35] : memref<8x1xf32, #tpu.memory_space<vmem>>, vector<8x1xf32>
    %40 = vector.extract_strided_slice %38 {offsets = [0, 0], sizes = [8, 1], strides = [1, 1]} : vector<8x3xf32> to vector<8x1xf32>
    %41 = vector.extract_strided_slice %38 {offsets = [0, 1], sizes = [8, 1], strides = [1, 1]} : vector<8x3xf32> to vector<8x1xf32>
    %42 = vector.extract_strided_slice %38 {offsets = [0, 2], sizes = [8, 1], strides = [1, 1]} : vector<8x3xf32> to vector<8x1xf32>
    %cst_36 = arith.constant 0.000000e+00 : f32
    %43 = vector.broadcast %cst_36 : f32 to vector<8x1xf32>
    %44 = arith.cmpf ogt, %39, %43 : vector<8x1xf32>
    %45 = arith.extui %44 : vector<8x1xi1> to vector<8x1xi32>
    %46 = arith.sitofp %45 : vector<8x1xi32> to vector<8x1xf32>
    %cst_37 = arith.constant 0.000000e+00 : f32
    %47 = vector.broadcast %cst_37 : f32 to vector<8x1xf32>
    %48 = arith.maximumf %40, %47 : vector<8x1xf32>
    %49 = arith.mulf %40, %46 : vector<8x1xf32>
    %50 = arith.subf %48, %49 : vector<8x1xf32>
    %51 = math.absf %40 : vector<8x1xf32>
    %cst_38 = arith.constant 0.000000e+00 : f32
    %52 = vector.broadcast %cst_38 : f32 to vector<8x1xf32>
    %53 = arith.subf %52, %51 : vector<8x1xf32>
    %54 = math.exp %53 : vector<8x1xf32>
    %cst_39 = arith.constant 1.000000e+00 : f32
    %55 = vector.broadcast %cst_39 : f32 to vector<8x1xf32>
    %56 = arith.addf %55, %54 : vector<8x1xf32>
    %57 = math.log %56 : vector<8x1xf32>
    %58 = arith.addf %50, %57 : vector<8x1xf32>
    %cst_40 = arith.constant 0.000000e+00 : f32
    %59 = vector.broadcast %cst_40 : f32 to vector<8x1xf32>
    %60 = arith.maximumf %42, %59 : vector<8x1xf32>
    %61 = math.absf %42 : vector<8x1xf32>
    %cst_41 = arith.constant 0.000000e+00 : f32
    %62 = vector.broadcast %cst_41 : f32 to vector<8x1xf32>
    %63 = arith.subf %62, %61 : vector<8x1xf32>
    %64 = math.exp %63 : vector<8x1xf32>
    %cst_42 = arith.constant 1.000000e+00 : f32
    %65 = vector.broadcast %cst_42 : f32 to vector<8x1xf32>
    %66 = arith.addf %65, %64 : vector<8x1xf32>
    %67 = math.log %66 : vector<8x1xf32>
    %68 = arith.addf %60, %67 : vector<8x1xf32>
    %cst_43 = arith.constant 3.45266977E-4 : f32
    %69 = vector.broadcast %cst_43 : f32 to vector<8x1xf32>
    %70 = arith.maximumf %68, %69 : vector<8x1xf32>
    %71 = arith.mulf %46, %39 : vector<8x1xf32>
    %cst_44 = arith.constant 1.000000e+00 : f32
    %72 = vector.broadcast %cst_44 : f32 to vector<8x1xf32>
    %73 = arith.subf %72, %46 : vector<8x1xf32>
    %74 = arith.addf %71, %73 : vector<8x1xf32>
    %75 = math.log %74 : vector<8x1xf32>
    %cst_45 = arith.constant 0.000000e+00 : f32
    %76 = vector.broadcast %cst_45 : f32 to vector<8x1xf32>
    %77 = arith.subf %76, %75 : vector<8x1xf32>
    %78 = math.log %70 : vector<8x1xf32>
    %79 = arith.subf %77, %78 : vector<8x1xf32>
    %cst_46 = arith.constant 0.918938517 : f32
    %80 = vector.broadcast %cst_46 : f32 to vector<8x1xf32>
    %81 = arith.subf %79, %80 : vector<8x1xf32>
    %82 = arith.subf %75, %41 : vector<8x1xf32>
    %83 = arith.mulf %82, %82 : vector<8x1xf32>
    %cst_47 = arith.constant 2.000000e+00 : f32
    %84 = vector.broadcast %cst_47 : f32 to vector<8x1xf32>
    %85 = arith.mulf %84, %70 : vector<8x1xf32>
    %86 = arith.mulf %85, %70 : vector<8x1xf32>
    %87 = arith.divf %83, %86 : vector<8x1xf32>
    %88 = arith.subf %81, %87 : vector<8x1xf32>
    %cst_48 = arith.constant 0.000000e+00 : f32
    %89 = vector.broadcast %cst_48 : f32 to vector<8x1xf32>
    %90 = arith.subf %89, %46 : vector<8x1xf32>
    %91 = arith.mulf %90, %88 : vector<8x1xf32>
    %92 = arith.addf %58, %91 : vector<8x1xf32>
    %cst_49 = arith.constant dense<0.000000e+00> : vector<8xf32>
    %93 = vector.multi_reduction <add>, %92, %cst_49 [1] : vector<8x1xf32> to vector<8xf32>
    %94 = vector.shape_cast %93 : vector<8xf32> to vector<8x1xf32>
    %cst_50 = arith.constant dense<0.000000e+00> : vector<1xf32>
    %95 = vector.multi_reduction <add>, %94, %cst_50 [0] : vector<8x1xf32> to vector<1xf32>
    %96 = vector.shape_cast %95 : vector<1xf32> to vector<1x1xf32>
    %cst_51 = arith.constant 1.250000e-01 : f32
    %97 = vector.broadcast %cst_51 : f32 to vector<1x1xf32>
    %98 = arith.mulf %96, %97 : vector<1x1xf32>
    %c0_52 = arith.constant 0 : index
    %c0_53 = arith.constant 0 : index
    %99 = vector.load %arg14[%c0_52, %c0_53] : memref<112x192xf32, #tpu.memory_space<vmem>>, vector<112x192xf32>
    %cst_54 = arith.constant dense<0.000000e+00> : vector<8x192xf32>
    %100 = tpu.matmul %12, %99, %cst_54 {dimension_numbers = #tpu.dot_dimension_numbers<[1], [0], [0], [1], [0, 0, 1, 1], [], []>} : vector<8x112xf32>, vector<112x192xf32>, vector<8x192xf32> -> vector<8x192xf32>
    %c0_55 = arith.constant 0 : index
    %c0_56 = arith.constant 0 : index
    %101 = vector.load %arg15[%c0_55, %c0_56] : memref<1x192xf32, #tpu.memory_space<vmem>>, vector<1x192xf32>
    %102 = vector.broadcast %101 : vector<1x192xf32> to vector<8x192xf32>
    %103 = arith.addf %100, %102 : vector<8x192xf32>
    %cst_57 = arith.constant 0.000000e+00 : f32
    %104 = vector.broadcast %cst_57 : f32 to vector<8x192xf32>
    %105 = arith.maximumf %103, %104 : vector<8x192xf32>
    %c0_58 = arith.constant 0 : index
    %c0_59 = arith.constant 0 : index
    %106 = vector.load %arg16[%c0_58, %c0_59] : memref<192x64xf32, #tpu.memory_space<vmem>>, vector<192x64xf32>
    %cst_60 = arith.constant dense<0.000000e+00> : vector<8x64xf32>
    %107 = tpu.matmul %105, %106, %cst_60 {dimension_numbers = #tpu.dot_dimension_numbers<[1], [0], [0], [1], [0, 0, 1, 1], [], []>} : vector<8x192xf32>, vector<192x64xf32>, vector<8x64xf32> -> vector<8x64xf32>
    %c0_61 = arith.constant 0 : index
    %c0_62 = arith.constant 0 : index
    %108 = vector.load %arg17[%c0_61, %c0_62] : memref<1x64xf32, #tpu.memory_space<vmem>>, vector<1x64xf32>
    %109 = vector.broadcast %108 : vector<1x64xf32> to vector<8x64xf32>
    %110 = arith.addf %107, %109 : vector<8x64xf32>
    %111 = arith.subf %0, %110 : vector<8x64xf32>
    %112 = arith.mulf %111, %111 : vector<8x64xf32>
    %c0_63 = arith.constant 0 : index
    %c0_64 = arith.constant 0 : index
    %113 = vector.load %arg18[%c0_63, %c0_64] : memref<1x64xf32, #tpu.memory_space<vmem>>, vector<1x64xf32>
    %114 = vector.broadcast %113 : vector<1x64xf32> to vector<8x64xf32>
    %115 = arith.mulf %112, %114 : vector<8x64xf32>
    %cst_65 = arith.constant dense<0.000000e+00> : vector<8xf32>
    %116 = vector.multi_reduction <add>, %115, %cst_65 [1] : vector<8x64xf32> to vector<8xf32>
    %117 = vector.shape_cast %116 : vector<8xf32> to vector<8x1xf32>
    %cst_66 = arith.constant dense<0.000000e+00> : vector<1xf32>
    %118 = vector.multi_reduction <add>, %117, %cst_66 [0] : vector<8x1xf32> to vector<1xf32>
    %119 = vector.shape_cast %118 : vector<1xf32> to vector<1x1xf32>
    %cst_67 = arith.constant 1.250000e-01 : f32
    %120 = vector.broadcast %cst_67 : f32 to vector<1x1xf32>
    %121 = arith.mulf %119, %120 : vector<1x1xf32>
    %cst_68 = arith.constant 0.00999999977 : f32
    %122 = vector.broadcast %cst_68 : f32 to vector<1x1xf32>
    %123 = arith.mulf %122, %121 : vector<1x1xf32>
    %124 = arith.addf %98, %123 : vector<1x1xf32>
    %125 = vector.extract_strided_slice %12 {offsets = [0, 0], sizes = [8, 16], strides = [1, 1]} : vector<8x112xf32> to vector<8x16xf32>
    %126 = vector.extract_strided_slice %12 {offsets = [0, 16], sizes = [8, 16], strides = [1, 1]} : vector<8x112xf32> to vector<8x16xf32>
    %127 = vector.extract_strided_slice %12 {offsets = [0, 32], sizes = [8, 16], strides = [1, 1]} : vector<8x112xf32> to vector<8x16xf32>
    %128 = vector.extract_strided_slice %12 {offsets = [0, 48], sizes = [8, 16], strides = [1, 1]} : vector<8x112xf32> to vector<8x16xf32>
    %129 = vector.extract_strided_slice %12 {offsets = [0, 64], sizes = [8, 16], strides = [1, 1]} : vector<8x112xf32> to vector<8x16xf32>
    %130 = vector.extract_strided_slice %12 {offsets = [0, 80], sizes = [8, 16], strides = [1, 1]} : vector<8x112xf32> to vector<8x16xf32>
    %131 = vector.extract_strided_slice %12 {offsets = [0, 96], sizes = [8, 16], strides = [1, 1]} : vector<8x112xf32> to vector<8x16xf32>
    %cst_69 = arith.constant dense<0xFF800000> : vector<8xf32>
    %132 = vector.multi_reduction <maximumf>, %125, %cst_69 [1] : vector<8x16xf32> to vector<8xf32>
    %133 = vector.shape_cast %132 : vector<8xf32> to vector<8x1xf32>
    %134 = vector.broadcast %133 : vector<8x1xf32> to vector<8x16xf32>
    %135 = arith.subf %125, %134 : vector<8x16xf32>
    %136 = math.exp %135 : vector<8x16xf32>
    %cst_70 = arith.constant dense<0.000000e+00> : vector<8xf32>
    %137 = vector.multi_reduction <add>, %136, %cst_70 [1] : vector<8x16xf32> to vector<8xf32>
    %138 = vector.shape_cast %137 : vector<8xf32> to vector<8x1xf32>
    %139 = math.log %138 : vector<8x1xf32>
    %140 = vector.broadcast %139 : vector<8x1xf32> to vector<8x16xf32>
    %141 = arith.subf %135, %140 : vector<8x16xf32>
    %cst_71 = arith.constant 0.000000e+00 : f32
    %142 = vector.broadcast %cst_71 : f32 to vector<1x1xf32>
    %cst_72 = arith.constant dense<0xFF800000> : vector<8xf32>
    %143 = vector.multi_reduction <maximumf>, %126, %cst_72 [1] : vector<8x16xf32> to vector<8xf32>
    %144 = vector.shape_cast %143 : vector<8xf32> to vector<8x1xf32>
    %145 = vector.broadcast %144 : vector<8x1xf32> to vector<8x16xf32>
    %146 = arith.subf %126, %145 : vector<8x16xf32>
    %147 = math.exp %146 : vector<8x16xf32>
    %cst_73 = arith.constant dense<0.000000e+00> : vector<8xf32>
    %148 = vector.multi_reduction <add>, %147, %cst_73 [1] : vector<8x16xf32> to vector<8xf32>
    %149 = vector.shape_cast %148 : vector<8xf32> to vector<8x1xf32>
    %150 = math.log %149 : vector<8x1xf32>
    %151 = vector.broadcast %150 : vector<8x1xf32> to vector<8x16xf32>
    %152 = arith.subf %146, %151 : vector<8x16xf32>
    %153 = math.exp %152 : vector<8x16xf32>
    %154 = arith.subf %152, %141 : vector<8x16xf32>
    %155 = arith.mulf %153, %154 : vector<8x16xf32>
    %cst_74 = arith.constant dense<0.000000e+00> : vector<8xf32>
    %156 = vector.multi_reduction <add>, %155, %cst_74 [1] : vector<8x16xf32> to vector<8xf32>
    %157 = vector.shape_cast %156 : vector<8xf32> to vector<8x1xf32>
    %cst_75 = arith.constant dense<0.000000e+00> : vector<1xf32>
    %158 = vector.multi_reduction <add>, %157, %cst_75 [0] : vector<8x1xf32> to vector<1xf32>
    %159 = vector.shape_cast %158 : vector<1xf32> to vector<1x1xf32>
    %160 = arith.addf %142, %159 : vector<1x1xf32>
    %cst_76 = arith.constant dense<0xFF800000> : vector<8xf32>
    %161 = vector.multi_reduction <maximumf>, %127, %cst_76 [1] : vector<8x16xf32> to vector<8xf32>
    %162 = vector.shape_cast %161 : vector<8xf32> to vector<8x1xf32>
    %163 = vector.broadcast %162 : vector<8x1xf32> to vector<8x16xf32>
    %164 = arith.subf %127, %163 : vector<8x16xf32>
    %165 = math.exp %164 : vector<8x16xf32>
    %cst_77 = arith.constant dense<0.000000e+00> : vector<8xf32>
    %166 = vector.multi_reduction <add>, %165, %cst_77 [1] : vector<8x16xf32> to vector<8xf32>
    %167 = vector.shape_cast %166 : vector<8xf32> to vector<8x1xf32>
    %168 = math.log %167 : vector<8x1xf32>
    %169 = vector.broadcast %168 : vector<8x1xf32> to vector<8x16xf32>
    %170 = arith.subf %164, %169 : vector<8x16xf32>
    %171 = math.exp %170 : vector<8x16xf32>
    %172 = arith.subf %170, %141 : vector<8x16xf32>
    %173 = arith.mulf %171, %172 : vector<8x16xf32>
    %cst_78 = arith.constant dense<0.000000e+00> : vector<8xf32>
    %174 = vector.multi_reduction <add>, %173, %cst_78 [1] : vector<8x16xf32> to vector<8xf32>
    %175 = vector.shape_cast %174 : vector<8xf32> to vector<8x1xf32>
    %cst_79 = arith.constant dense<0.000000e+00> : vector<1xf32>
    %176 = vector.multi_reduction <add>, %175, %cst_79 [0] : vector<8x1xf32> to vector<1xf32>
    %177 = vector.shape_cast %176 : vector<1xf32> to vector<1x1xf32>
    %178 = arith.addf %160, %177 : vector<1x1xf32>
    %cst_80 = arith.constant dense<0xFF800000> : vector<8xf32>
    %179 = vector.multi_reduction <maximumf>, %128, %cst_80 [1] : vector<8x16xf32> to vector<8xf32>
    %180 = vector.shape_cast %179 : vector<8xf32> to vector<8x1xf32>
    %181 = vector.broadcast %180 : vector<8x1xf32> to vector<8x16xf32>
    %182 = arith.subf %128, %181 : vector<8x16xf32>
    %183 = math.exp %182 : vector<8x16xf32>
    %cst_81 = arith.constant dense<0.000000e+00> : vector<8xf32>
    %184 = vector.multi_reduction <add>, %183, %cst_81 [1] : vector<8x16xf32> to vector<8xf32>
    %185 = vector.shape_cast %184 : vector<8xf32> to vector<8x1xf32>
    %186 = math.log %185 : vector<8x1xf32>
    %187 = vector.broadcast %186 : vector<8x1xf32> to vector<8x16xf32>
    %188 = arith.subf %182, %187 : vector<8x16xf32>
    %189 = math.exp %188 : vector<8x16xf32>
    %190 = arith.subf %188, %141 : vector<8x16xf32>
    %191 = arith.mulf %189, %190 : vector<8x16xf32>
    %cst_82 = arith.constant dense<0.000000e+00> : vector<8xf32>
    %192 = vector.multi_reduction <add>, %191, %cst_82 [1] : vector<8x16xf32> to vector<8xf32>
    %193 = vector.shape_cast %192 : vector<8xf32> to vector<8x1xf32>
    %cst_83 = arith.constant dense<0.000000e+00> : vector<1xf32>
    %194 = vector.multi_reduction <add>, %193, %cst_83 [0] : vector<8x1xf32> to vector<1xf32>
    %195 = vector.shape_cast %194 : vector<1xf32> to vector<1x1xf32>
    %196 = arith.addf %178, %195 : vector<1x1xf32>
    %cst_84 = arith.constant dense<0xFF800000> : vector<8xf32>
    %197 = vector.multi_reduction <maximumf>, %129, %cst_84 [1] : vector<8x16xf32> to vector<8xf32>
    %198 = vector.shape_cast %197 : vector<8xf32> to vector<8x1xf32>
    %199 = vector.broadcast %198 : vector<8x1xf32> to vector<8x16xf32>
    %200 = arith.subf %129, %199 : vector<8x16xf32>
    %201 = math.exp %200 : vector<8x16xf32>
    %cst_85 = arith.constant dense<0.000000e+00> : vector<8xf32>
    %202 = vector.multi_reduction <add>, %201, %cst_85 [1] : vector<8x16xf32> to vector<8xf32>
    %203 = vector.shape_cast %202 : vector<8xf32> to vector<8x1xf32>
    %204 = math.log %203 : vector<8x1xf32>
    %205 = vector.broadcast %204 : vector<8x1xf32> to vector<8x16xf32>
    %206 = arith.subf %200, %205 : vector<8x16xf32>
    %207 = math.exp %206 : vector<8x16xf32>
    %208 = arith.subf %206, %141 : vector<8x16xf32>
    %209 = arith.mulf %207, %208 : vector<8x16xf32>
    %cst_86 = arith.constant dense<0.000000e+00> : vector<8xf32>
    %210 = vector.multi_reduction <add>, %209, %cst_86 [1] : vector<8x16xf32> to vector<8xf32>
    %211 = vector.shape_cast %210 : vector<8xf32> to vector<8x1xf32>
    %cst_87 = arith.constant dense<0.000000e+00> : vector<1xf32>
    %212 = vector.multi_reduction <add>, %211, %cst_87 [0] : vector<8x1xf32> to vector<1xf32>
    %213 = vector.shape_cast %212 : vector<1xf32> to vector<1x1xf32>
    %214 = arith.addf %196, %213 : vector<1x1xf32>
    %cst_88 = arith.constant dense<0xFF800000> : vector<8xf32>
    %215 = vector.multi_reduction <maximumf>, %130, %cst_88 [1] : vector<8x16xf32> to vector<8xf32>
    %216 = vector.shape_cast %215 : vector<8xf32> to vector<8x1xf32>
    %217 = vector.broadcast %216 : vector<8x1xf32> to vector<8x16xf32>
    %218 = arith.subf %130, %217 : vector<8x16xf32>
    %219 = math.exp %218 : vector<8x16xf32>
    %cst_89 = arith.constant dense<0.000000e+00> : vector<8xf32>
    %220 = vector.multi_reduction <add>, %219, %cst_89 [1] : vector<8x16xf32> to vector<8xf32>
    %221 = vector.shape_cast %220 : vector<8xf32> to vector<8x1xf32>
    %222 = math.log %221 : vector<8x1xf32>
    %223 = vector.broadcast %222 : vector<8x1xf32> to vector<8x16xf32>
    %224 = arith.subf %218, %223 : vector<8x16xf32>
    %225 = math.exp %224 : vector<8x16xf32>
    %226 = arith.subf %224, %141 : vector<8x16xf32>
    %227 = arith.mulf %225, %226 : vector<8x16xf32>
    %cst_90 = arith.constant dense<0.000000e+00> : vector<8xf32>
    %228 = vector.multi_reduction <add>, %227, %cst_90 [1] : vector<8x16xf32> to vector<8xf32>
    %229 = vector.shape_cast %228 : vector<8xf32> to vector<8x1xf32>
    %cst_91 = arith.constant dense<0.000000e+00> : vector<1xf32>
    %230 = vector.multi_reduction <add>, %229, %cst_91 [0] : vector<8x1xf32> to vector<1xf32>
    %231 = vector.shape_cast %230 : vector<1xf32> to vector<1x1xf32>
    %232 = arith.addf %214, %231 : vector<1x1xf32>
    %cst_92 = arith.constant dense<0xFF800000> : vector<8xf32>
    %233 = vector.multi_reduction <maximumf>, %131, %cst_92 [1] : vector<8x16xf32> to vector<8xf32>
    %234 = vector.shape_cast %233 : vector<8xf32> to vector<8x1xf32>
    %235 = vector.broadcast %234 : vector<8x1xf32> to vector<8x16xf32>
    %236 = arith.subf %131, %235 : vector<8x16xf32>
    %237 = math.exp %236 : vector<8x16xf32>
    %cst_93 = arith.constant dense<0.000000e+00> : vector<8xf32>
    %238 = vector.multi_reduction <add>, %237, %cst_93 [1] : vector<8x16xf32> to vector<8xf32>
    %239 = vector.shape_cast %238 : vector<8xf32> to vector<8x1xf32>
    %240 = math.log %239 : vector<8x1xf32>
    %241 = vector.broadcast %240 : vector<8x1xf32> to vector<8x16xf32>
    %242 = arith.subf %236, %241 : vector<8x16xf32>
    %243 = math.exp %242 : vector<8x16xf32>
    %244 = arith.subf %242, %141 : vector<8x16xf32>
    %245 = arith.mulf %243, %244 : vector<8x16xf32>
    %cst_94 = arith.constant dense<0.000000e+00> : vector<8xf32>
    %246 = vector.multi_reduction <add>, %245, %cst_94 [1] : vector<8x16xf32> to vector<8xf32>
    %247 = vector.shape_cast %246 : vector<8xf32> to vector<8x1xf32>
    %cst_95 = arith.constant dense<0.000000e+00> : vector<1xf32>
    %248 = vector.multi_reduction <add>, %247, %cst_95 [0] : vector<8x1xf32> to vector<1xf32>
    %249 = vector.shape_cast %248 : vector<1xf32> to vector<1x1xf32>
    %250 = arith.addf %232, %249 : vector<1x1xf32>
    %cst_96 = arith.constant 1.250000e-02 : f32
    %251 = vector.broadcast %cst_96 : f32 to vector<1x1xf32>
    %252 = arith.mulf %251, %250 : vector<1x1xf32>
    %253 = arith.addf %124, %252 : vector<1x1xf32>
    %cst_97 = arith.constant 0.000000e+00 : f32
    %254 = vector.broadcast %cst_97 : f32 to vector<1x1xf32>
    %cst_98 = arith.constant dense<0.000000e+00> : vector<8x8xf32>
    %255 = tpu.matmul %126, %127, %cst_98 {dimension_numbers = #tpu.dot_dimension_numbers<[1], [1], [0], [0], [0, 0, 1, 0], [], []>} : vector<8x16xf32>, vector<8x16xf32>, vector<8x8xf32> -> vector<8x8xf32>
    %cst_99 = arith.constant 5.000000e+00 : f32
    %256 = vector.broadcast %cst_99 : f32 to vector<8x8xf32>
    %257 = arith.mulf %255, %256 : vector<8x8xf32>
    %258 = arith.mulf %126, %127 : vector<8x16xf32>
    %cst_100 = arith.constant dense<0.000000e+00> : vector<8xf32>
    %259 = vector.multi_reduction <add>, %258, %cst_100 [1] : vector<8x16xf32> to vector<8xf32>
    %260 = vector.shape_cast %259 : vector<8xf32> to vector<8x1xf32>
    %cst_101 = arith.constant 5.000000e+00 : f32
    %261 = vector.broadcast %cst_101 : f32 to vector<8x1xf32>
    %262 = arith.mulf %260, %261 : vector<8x1xf32>
    %cst_102 = arith.constant dense<0xFF800000> : vector<8xf32>
    %263 = vector.multi_reduction <maximumf>, %257, %cst_102 [1] : vector<8x8xf32> to vector<8xf32>
    %264 = vector.shape_cast %263 : vector<8xf32> to vector<8x1xf32>
    %265 = vector.broadcast %264 : vector<8x1xf32> to vector<8x8xf32>
    %266 = arith.subf %257, %265 : vector<8x8xf32>
    %267 = math.exp %266 : vector<8x8xf32>
    %cst_103 = arith.constant dense<0.000000e+00> : vector<8xf32>
    %268 = vector.multi_reduction <add>, %267, %cst_103 [1] : vector<8x8xf32> to vector<8xf32>
    %269 = vector.shape_cast %268 : vector<8xf32> to vector<8x1xf32>
    %270 = math.log %269 : vector<8x1xf32>
    %271 = arith.addf %270, %264 : vector<8x1xf32>
    %cst_104 = arith.constant dense<0xFF800000> : vector<8xf32>
    %272 = vector.multi_reduction <maximumf>, %257, %cst_104 [0] : vector<8x8xf32> to vector<8xf32>
    %273 = vector.shape_cast %272 : vector<8xf32> to vector<1x8xf32>
    %274 = vector.broadcast %273 : vector<1x8xf32> to vector<8x8xf32>
    %275 = arith.subf %257, %274 : vector<8x8xf32>
    %276 = math.exp %275 : vector<8x8xf32>
    %cst_105 = arith.constant dense<0.000000e+00> : vector<8xf32>
    %277 = vector.multi_reduction <add>, %276, %cst_105 [0] : vector<8x8xf32> to vector<8xf32>
    %278 = vector.shape_cast %277 : vector<8xf32> to vector<1x8xf32>
    %279 = math.log %278 : vector<1x8xf32>
    %280 = arith.addf %279, %273 : vector<1x8xf32>
    %cst_106 = arith.constant dense<0.000000e+00> : vector<8xf32>
    %281 = vector.multi_reduction <add>, %271, %cst_106 [1] : vector<8x1xf32> to vector<8xf32>
    %282 = vector.shape_cast %281 : vector<8xf32> to vector<8x1xf32>
    %cst_107 = arith.constant dense<0.000000e+00> : vector<1xf32>
    %283 = vector.multi_reduction <add>, %282, %cst_107 [0] : vector<8x1xf32> to vector<1xf32>
    %284 = vector.shape_cast %283 : vector<1xf32> to vector<1x1xf32>
    %285 = arith.addf %254, %284 : vector<1x1xf32>
    %cst_108 = arith.constant dense<0.000000e+00> : vector<1xf32>
    %286 = vector.multi_reduction <add>, %280, %cst_108 [1] : vector<1x8xf32> to vector<1xf32>
    %287 = vector.shape_cast %286 : vector<1xf32> to vector<1x1xf32>
    %cst_109 = arith.constant dense<0.000000e+00> : vector<1xf32>
    %288 = vector.multi_reduction <add>, %287, %cst_109 [0] : vector<1x1xf32> to vector<1xf32>
    %289 = vector.shape_cast %288 : vector<1xf32> to vector<1x1xf32>
    %290 = arith.addf %285, %289 : vector<1x1xf32>
    %cst_110 = arith.constant dense<0.000000e+00> : vector<8xf32>
    %291 = vector.multi_reduction <add>, %262, %cst_110 [1] : vector<8x1xf32> to vector<8xf32>
    %292 = vector.shape_cast %291 : vector<8xf32> to vector<8x1xf32>
    %cst_111 = arith.constant dense<0.000000e+00> : vector<1xf32>
    %293 = vector.multi_reduction <add>, %292, %cst_111 [0] : vector<8x1xf32> to vector<1xf32>
    %294 = vector.shape_cast %293 : vector<1xf32> to vector<1x1xf32>
    %cst_112 = arith.constant 2.000000e+00 : f32
    %295 = vector.broadcast %cst_112 : f32 to vector<1x1xf32>
    %296 = arith.mulf %295, %294 : vector<1x1xf32>
    %297 = arith.subf %290, %296 : vector<1x1xf32>
    %cst_113 = arith.constant dense<0.000000e+00> : vector<8x8xf32>
    %298 = tpu.matmul %126, %128, %cst_113 {dimension_numbers = #tpu.dot_dimension_numbers<[1], [1], [0], [0], [0, 0, 1, 0], [], []>} : vector<8x16xf32>, vector<8x16xf32>, vector<8x8xf32> -> vector<8x8xf32>
    %cst_114 = arith.constant 5.000000e+00 : f32
    %299 = vector.broadcast %cst_114 : f32 to vector<8x8xf32>
    %300 = arith.mulf %298, %299 : vector<8x8xf32>
    %301 = arith.mulf %126, %128 : vector<8x16xf32>
    %cst_115 = arith.constant dense<0.000000e+00> : vector<8xf32>
    %302 = vector.multi_reduction <add>, %301, %cst_115 [1] : vector<8x16xf32> to vector<8xf32>
    %303 = vector.shape_cast %302 : vector<8xf32> to vector<8x1xf32>
    %cst_116 = arith.constant 5.000000e+00 : f32
    %304 = vector.broadcast %cst_116 : f32 to vector<8x1xf32>
    %305 = arith.mulf %303, %304 : vector<8x1xf32>
    %cst_117 = arith.constant dense<0xFF800000> : vector<8xf32>
    %306 = vector.multi_reduction <maximumf>, %300, %cst_117 [1] : vector<8x8xf32> to vector<8xf32>
    %307 = vector.shape_cast %306 : vector<8xf32> to vector<8x1xf32>
    %308 = vector.broadcast %307 : vector<8x1xf32> to vector<8x8xf32>
    %309 = arith.subf %300, %308 : vector<8x8xf32>
    %310 = math.exp %309 : vector<8x8xf32>
    %cst_118 = arith.constant dense<0.000000e+00> : vector<8xf32>
    %311 = vector.multi_reduction <add>, %310, %cst_118 [1] : vector<8x8xf32> to vector<8xf32>
    %312 = vector.shape_cast %311 : vector<8xf32> to vector<8x1xf32>
    %313 = math.log %312 : vector<8x1xf32>
    %314 = arith.addf %313, %307 : vector<8x1xf32>
    %cst_119 = arith.constant dense<0xFF800000> : vector<8xf32>
    %315 = vector.multi_reduction <maximumf>, %300, %cst_119 [0] : vector<8x8xf32> to vector<8xf32>
    %316 = vector.shape_cast %315 : vector<8xf32> to vector<1x8xf32>
    %317 = vector.broadcast %316 : vector<1x8xf32> to vector<8x8xf32>
    %318 = arith.subf %300, %317 : vector<8x8xf32>
    %319 = math.exp %318 : vector<8x8xf32>
    %cst_120 = arith.constant dense<0.000000e+00> : vector<8xf32>
    %320 = vector.multi_reduction <add>, %319, %cst_120 [0] : vector<8x8xf32> to vector<8xf32>
    %321 = vector.shape_cast %320 : vector<8xf32> to vector<1x8xf32>
    %322 = math.log %321 : vector<1x8xf32>
    %323 = arith.addf %322, %316 : vector<1x8xf32>
    %cst_121 = arith.constant dense<0.000000e+00> : vector<8xf32>
    %324 = vector.multi_reduction <add>, %314, %cst_121 [1] : vector<8x1xf32> to vector<8xf32>
    %325 = vector.shape_cast %324 : vector<8xf32> to vector<8x1xf32>
    %cst_122 = arith.constant dense<0.000000e+00> : vector<1xf32>
    %326 = vector.multi_reduction <add>, %325, %cst_122 [0] : vector<8x1xf32> to vector<1xf32>
    %327 = vector.shape_cast %326 : vector<1xf32> to vector<1x1xf32>
    %328 = arith.addf %297, %327 : vector<1x1xf32>
    %cst_123 = arith.constant dense<0.000000e+00> : vector<1xf32>
    %329 = vector.multi_reduction <add>, %323, %cst_123 [1] : vector<1x8xf32> to vector<1xf32>
    %330 = vector.shape_cast %329 : vector<1xf32> to vector<1x1xf32>
    %cst_124 = arith.constant dense<0.000000e+00> : vector<1xf32>
    %331 = vector.multi_reduction <add>, %330, %cst_124 [0] : vector<1x1xf32> to vector<1xf32>
    %332 = vector.shape_cast %331 : vector<1xf32> to vector<1x1xf32>
    %333 = arith.addf %328, %332 : vector<1x1xf32>
    %cst_125 = arith.constant dense<0.000000e+00> : vector<8xf32>
    %334 = vector.multi_reduction <add>, %305, %cst_125 [1] : vector<8x1xf32> to vector<8xf32>
    %335 = vector.shape_cast %334 : vector<8xf32> to vector<8x1xf32>
    %cst_126 = arith.constant dense<0.000000e+00> : vector<1xf32>
    %336 = vector.multi_reduction <add>, %335, %cst_126 [0] : vector<8x1xf32> to vector<1xf32>
    %337 = vector.shape_cast %336 : vector<1xf32> to vector<1x1xf32>
    %cst_127 = arith.constant 2.000000e+00 : f32
    %338 = vector.broadcast %cst_127 : f32 to vector<1x1xf32>
    %339 = arith.mulf %338, %337 : vector<1x1xf32>
    %340 = arith.subf %333, %339 : vector<1x1xf32>
    %cst_128 = arith.constant dense<0.000000e+00> : vector<8x8xf32>
    %341 = tpu.matmul %126, %129, %cst_128 {dimension_numbers = #tpu.dot_dimension_numbers<[1], [1], [0], [0], [0, 0, 1, 0], [], []>} : vector<8x16xf32>, vector<8x16xf32>, vector<8x8xf32> -> vector<8x8xf32>
    %cst_129 = arith.constant 5.000000e+00 : f32
    %342 = vector.broadcast %cst_129 : f32 to vector<8x8xf32>
    %343 = arith.mulf %341, %342 : vector<8x8xf32>
    %344 = arith.mulf %126, %129 : vector<8x16xf32>
    %cst_130 = arith.constant dense<0.000000e+00> : vector<8xf32>
    %345 = vector.multi_reduction <add>, %344, %cst_130 [1] : vector<8x16xf32> to vector<8xf32>
    %346 = vector.shape_cast %345 : vector<8xf32> to vector<8x1xf32>
    %cst_131 = arith.constant 5.000000e+00 : f32
    %347 = vector.broadcast %cst_131 : f32 to vector<8x1xf32>
    %348 = arith.mulf %346, %347 : vector<8x1xf32>
    %cst_132 = arith.constant dense<0xFF800000> : vector<8xf32>
    %349 = vector.multi_reduction <maximumf>, %343, %cst_132 [1] : vector<8x8xf32> to vector<8xf32>
    %350 = vector.shape_cast %349 : vector<8xf32> to vector<8x1xf32>
    %351 = vector.broadcast %350 : vector<8x1xf32> to vector<8x8xf32>
    %352 = arith.subf %343, %351 : vector<8x8xf32>
    %353 = math.exp %352 : vector<8x8xf32>
    %cst_133 = arith.constant dense<0.000000e+00> : vector<8xf32>
    %354 = vector.multi_reduction <add>, %353, %cst_133 [1] : vector<8x8xf32> to vector<8xf32>
    %355 = vector.shape_cast %354 : vector<8xf32> to vector<8x1xf32>
    %356 = math.log %355 : vector<8x1xf32>
    %357 = arith.addf %356, %350 : vector<8x1xf32>
    %cst_134 = arith.constant dense<0xFF800000> : vector<8xf32>
    %358 = vector.multi_reduction <maximumf>, %343, %cst_134 [0] : vector<8x8xf32> to vector<8xf32>
    %359 = vector.shape_cast %358 : vector<8xf32> to vector<1x8xf32>
    %360 = vector.broadcast %359 : vector<1x8xf32> to vector<8x8xf32>
    %361 = arith.subf %343, %360 : vector<8x8xf32>
    %362 = math.exp %361 : vector<8x8xf32>
    %cst_135 = arith.constant dense<0.000000e+00> : vector<8xf32>
    %363 = vector.multi_reduction <add>, %362, %cst_135 [0] : vector<8x8xf32> to vector<8xf32>
    %364 = vector.shape_cast %363 : vector<8xf32> to vector<1x8xf32>
    %365 = math.log %364 : vector<1x8xf32>
    %366 = arith.addf %365, %359 : vector<1x8xf32>
    %cst_136 = arith.constant dense<0.000000e+00> : vector<8xf32>
    %367 = vector.multi_reduction <add>, %357, %cst_136 [1] : vector<8x1xf32> to vector<8xf32>
    %368 = vector.shape_cast %367 : vector<8xf32> to vector<8x1xf32>
    %cst_137 = arith.constant dense<0.000000e+00> : vector<1xf32>
    %369 = vector.multi_reduction <add>, %368, %cst_137 [0] : vector<8x1xf32> to vector<1xf32>
    %370 = vector.shape_cast %369 : vector<1xf32> to vector<1x1xf32>
    %371 = arith.addf %340, %370 : vector<1x1xf32>
    %cst_138 = arith.constant dense<0.000000e+00> : vector<1xf32>
    %372 = vector.multi_reduction <add>, %366, %cst_138 [1] : vector<1x8xf32> to vector<1xf32>
    %373 = vector.shape_cast %372 : vector<1xf32> to vector<1x1xf32>
    %cst_139 = arith.constant dense<0.000000e+00> : vector<1xf32>
    %374 = vector.multi_reduction <add>, %373, %cst_139 [0] : vector<1x1xf32> to vector<1xf32>
    %375 = vector.shape_cast %374 : vector<1xf32> to vector<1x1xf32>
    %376 = arith.addf %371, %375 : vector<1x1xf32>
    %cst_140 = arith.constant dense<0.000000e+00> : vector<8xf32>
    %377 = vector.multi_reduction <add>, %348, %cst_140 [1] : vector<8x1xf32> to vector<8xf32>
    %378 = vector.shape_cast %377 : vector<8xf32> to vector<8x1xf32>
    %cst_141 = arith.constant dense<0.000000e+00> : vector<1xf32>
    %379 = vector.multi_reduction <add>, %378, %cst_141 [0] : vector<8x1xf32> to vector<1xf32>
    %380 = vector.shape_cast %379 : vector<1xf32> to vector<1x1xf32>
    %cst_142 = arith.constant 2.000000e+00 : f32
    %381 = vector.broadcast %cst_142 : f32 to vector<1x1xf32>
    %382 = arith.mulf %381, %380 : vector<1x1xf32>
    %383 = arith.subf %376, %382 : vector<1x1xf32>
    %cst_143 = arith.constant dense<0.000000e+00> : vector<8x8xf32>
    %384 = tpu.matmul %126, %130, %cst_143 {dimension_numbers = #tpu.dot_dimension_numbers<[1], [1], [0], [0], [0, 0, 1, 0], [], []>} : vector<8x16xf32>, vector<8x16xf32>, vector<8x8xf32> -> vector<8x8xf32>
    %cst_144 = arith.constant 5.000000e+00 : f32
    %385 = vector.broadcast %cst_144 : f32 to vector<8x8xf32>
    %386 = arith.mulf %384, %385 : vector<8x8xf32>
    %387 = arith.mulf %126, %130 : vector<8x16xf32>
    %cst_145 = arith.constant dense<0.000000e+00> : vector<8xf32>
    %388 = vector.multi_reduction <add>, %387, %cst_145 [1] : vector<8x16xf32> to vector<8xf32>
    %389 = vector.shape_cast %388 : vector<8xf32> to vector<8x1xf32>
    %cst_146 = arith.constant 5.000000e+00 : f32
    %390 = vector.broadcast %cst_146 : f32 to vector<8x1xf32>
    %391 = arith.mulf %389, %390 : vector<8x1xf32>
    %cst_147 = arith.constant dense<0xFF800000> : vector<8xf32>
    %392 = vector.multi_reduction <maximumf>, %386, %cst_147 [1] : vector<8x8xf32> to vector<8xf32>
    %393 = vector.shape_cast %392 : vector<8xf32> to vector<8x1xf32>
    %394 = vector.broadcast %393 : vector<8x1xf32> to vector<8x8xf32>
    %395 = arith.subf %386, %394 : vector<8x8xf32>
    %396 = math.exp %395 : vector<8x8xf32>
    %cst_148 = arith.constant dense<0.000000e+00> : vector<8xf32>
    %397 = vector.multi_reduction <add>, %396, %cst_148 [1] : vector<8x8xf32> to vector<8xf32>
    %398 = vector.shape_cast %397 : vector<8xf32> to vector<8x1xf32>
    %399 = math.log %398 : vector<8x1xf32>
    %400 = arith.addf %399, %393 : vector<8x1xf32>
    %cst_149 = arith.constant dense<0xFF800000> : vector<8xf32>
    %401 = vector.multi_reduction <maximumf>, %386, %cst_149 [0] : vector<8x8xf32> to vector<8xf32>
    %402 = vector.shape_cast %401 : vector<8xf32> to vector<1x8xf32>
    %403 = vector.broadcast %402 : vector<1x8xf32> to vector<8x8xf32>
    %404 = arith.subf %386, %403 : vector<8x8xf32>
    %405 = math.exp %404 : vector<8x8xf32>
    %cst_150 = arith.constant dense<0.000000e+00> : vector<8xf32>
    %406 = vector.multi_reduction <add>, %405, %cst_150 [0] : vector<8x8xf32> to vector<8xf32>
    %407 = vector.shape_cast %406 : vector<8xf32> to vector<1x8xf32>
    %408 = math.log %407 : vector<1x8xf32>
    %409 = arith.addf %408, %402 : vector<1x8xf32>
    %cst_151 = arith.constant dense<0.000000e+00> : vector<8xf32>
    %410 = vector.multi_reduction <add>, %400, %cst_151 [1] : vector<8x1xf32> to vector<8xf32>
    %411 = vector.shape_cast %410 : vector<8xf32> to vector<8x1xf32>
    %cst_152 = arith.constant dense<0.000000e+00> : vector<1xf32>
    %412 = vector.multi_reduction <add>, %411, %cst_152 [0] : vector<8x1xf32> to vector<1xf32>
    %413 = vector.shape_cast %412 : vector<1xf32> to vector<1x1xf32>
    %414 = arith.addf %383, %413 : vector<1x1xf32>
    %cst_153 = arith.constant dense<0.000000e+00> : vector<1xf32>
    %415 = vector.multi_reduction <add>, %409, %cst_153 [1] : vector<1x8xf32> to vector<1xf32>
    %416 = vector.shape_cast %415 : vector<1xf32> to vector<1x1xf32>
    %cst_154 = arith.constant dense<0.000000e+00> : vector<1xf32>
    %417 = vector.multi_reduction <add>, %416, %cst_154 [0] : vector<1x1xf32> to vector<1xf32>
    %418 = vector.shape_cast %417 : vector<1xf32> to vector<1x1xf32>
    %419 = arith.addf %414, %418 : vector<1x1xf32>
    %cst_155 = arith.constant dense<0.000000e+00> : vector<8xf32>
    %420 = vector.multi_reduction <add>, %391, %cst_155 [1] : vector<8x1xf32> to vector<8xf32>
    %421 = vector.shape_cast %420 : vector<8xf32> to vector<8x1xf32>
    %cst_156 = arith.constant dense<0.000000e+00> : vector<1xf32>
    %422 = vector.multi_reduction <add>, %421, %cst_156 [0] : vector<8x1xf32> to vector<1xf32>
    %423 = vector.shape_cast %422 : vector<1xf32> to vector<1x1xf32>
    %cst_157 = arith.constant 2.000000e+00 : f32
    %424 = vector.broadcast %cst_157 : f32 to vector<1x1xf32>
    %425 = arith.mulf %424, %423 : vector<1x1xf32>
    %426 = arith.subf %419, %425 : vector<1x1xf32>
    %cst_158 = arith.constant dense<0.000000e+00> : vector<8x8xf32>
    %427 = tpu.matmul %126, %131, %cst_158 {dimension_numbers = #tpu.dot_dimension_numbers<[1], [1], [0], [0], [0, 0, 1, 0], [], []>} : vector<8x16xf32>, vector<8x16xf32>, vector<8x8xf32> -> vector<8x8xf32>
    %cst_159 = arith.constant 5.000000e+00 : f32
    %428 = vector.broadcast %cst_159 : f32 to vector<8x8xf32>
    %429 = arith.mulf %427, %428 : vector<8x8xf32>
    %430 = arith.mulf %126, %131 : vector<8x16xf32>
    %cst_160 = arith.constant dense<0.000000e+00> : vector<8xf32>
    %431 = vector.multi_reduction <add>, %430, %cst_160 [1] : vector<8x16xf32> to vector<8xf32>
    %432 = vector.shape_cast %431 : vector<8xf32> to vector<8x1xf32>
    %cst_161 = arith.constant 5.000000e+00 : f32
    %433 = vector.broadcast %cst_161 : f32 to vector<8x1xf32>
    %434 = arith.mulf %432, %433 : vector<8x1xf32>
    %cst_162 = arith.constant dense<0xFF800000> : vector<8xf32>
    %435 = vector.multi_reduction <maximumf>, %429, %cst_162 [1] : vector<8x8xf32> to vector<8xf32>
    %436 = vector.shape_cast %435 : vector<8xf32> to vector<8x1xf32>
    %437 = vector.broadcast %436 : vector<8x1xf32> to vector<8x8xf32>
    %438 = arith.subf %429, %437 : vector<8x8xf32>
    %439 = math.exp %438 : vector<8x8xf32>
    %cst_163 = arith.constant dense<0.000000e+00> : vector<8xf32>
    %440 = vector.multi_reduction <add>, %439, %cst_163 [1] : vector<8x8xf32> to vector<8xf32>
    %441 = vector.shape_cast %440 : vector<8xf32> to vector<8x1xf32>
    %442 = math.log %441 : vector<8x1xf32>
    %443 = arith.addf %442, %436 : vector<8x1xf32>
    %cst_164 = arith.constant dense<0xFF800000> : vector<8xf32>
    %444 = vector.multi_reduction <maximumf>, %429, %cst_164 [0] : vector<8x8xf32> to vector<8xf32>
    %445 = vector.shape_cast %444 : vector<8xf32> to vector<1x8xf32>
    %446 = vector.broadcast %445 : vector<1x8xf32> to vector<8x8xf32>
    %447 = arith.subf %429, %446 : vector<8x8xf32>
    %448 = math.exp %447 : vector<8x8xf32>
    %cst_165 = arith.constant dense<0.000000e+00> : vector<8xf32>
    %449 = vector.multi_reduction <add>, %448, %cst_165 [0] : vector<8x8xf32> to vector<8xf32>
    %450 = vector.shape_cast %449 : vector<8xf32> to vector<1x8xf32>
    %451 = math.log %450 : vector<1x8xf32>
    %452 = arith.addf %451, %445 : vector<1x8xf32>
    %cst_166 = arith.constant dense<0.000000e+00> : vector<8xf32>
    %453 = vector.multi_reduction <add>, %443, %cst_166 [1] : vector<8x1xf32> to vector<8xf32>
    %454 = vector.shape_cast %453 : vector<8xf32> to vector<8x1xf32>
    %cst_167 = arith.constant dense<0.000000e+00> : vector<1xf32>
    %455 = vector.multi_reduction <add>, %454, %cst_167 [0] : vector<8x1xf32> to vector<1xf32>
    %456 = vector.shape_cast %455 : vector<1xf32> to vector<1x1xf32>
    %457 = arith.addf %426, %456 : vector<1x1xf32>
    %cst_168 = arith.constant dense<0.000000e+00> : vector<1xf32>
    %458 = vector.multi_reduction <add>, %452, %cst_168 [1] : vector<1x8xf32> to vector<1xf32>
    %459 = vector.shape_cast %458 : vector<1xf32> to vector<1x1xf32>
    %cst_169 = arith.constant dense<0.000000e+00> : vector<1xf32>
    %460 = vector.multi_reduction <add>, %459, %cst_169 [0] : vector<1x1xf32> to vector<1xf32>
    %461 = vector.shape_cast %460 : vector<1xf32> to vector<1x1xf32>
    %462 = arith.addf %457, %461 : vector<1x1xf32>
    %cst_170 = arith.constant dense<0.000000e+00> : vector<8xf32>
    %463 = vector.multi_reduction <add>, %434, %cst_170 [1] : vector<8x1xf32> to vector<8xf32>
    %464 = vector.shape_cast %463 : vector<8xf32> to vector<8x1xf32>
    %cst_171 = arith.constant dense<0.000000e+00> : vector<1xf32>
    %465 = vector.multi_reduction <add>, %464, %cst_171 [0] : vector<8x1xf32> to vector<1xf32>
    %466 = vector.shape_cast %465 : vector<1xf32> to vector<1x1xf32>
    %cst_172 = arith.constant 2.000000e+00 : f32
    %467 = vector.broadcast %cst_172 : f32 to vector<1x1xf32>
    %468 = arith.mulf %467, %466 : vector<1x1xf32>
    %469 = arith.subf %462, %468 : vector<1x1xf32>
    %cst_173 = arith.constant dense<0.000000e+00> : vector<8x8xf32>
    %470 = tpu.matmul %127, %128, %cst_173 {dimension_numbers = #tpu.dot_dimension_numbers<[1], [1], [0], [0], [0, 0, 1, 0], [], []>} : vector<8x16xf32>, vector<8x16xf32>, vector<8x8xf32> -> vector<8x8xf32>
    %cst_174 = arith.constant 5.000000e+00 : f32
    %471 = vector.broadcast %cst_174 : f32 to vector<8x8xf32>
    %472 = arith.mulf %470, %471 : vector<8x8xf32>
    %473 = arith.mulf %127, %128 : vector<8x16xf32>
    %cst_175 = arith.constant dense<0.000000e+00> : vector<8xf32>
    %474 = vector.multi_reduction <add>, %473, %cst_175 [1] : vector<8x16xf32> to vector<8xf32>
    %475 = vector.shape_cast %474 : vector<8xf32> to vector<8x1xf32>
    %cst_176 = arith.constant 5.000000e+00 : f32
    %476 = vector.broadcast %cst_176 : f32 to vector<8x1xf32>
    %477 = arith.mulf %475, %476 : vector<8x1xf32>
    %cst_177 = arith.constant dense<0xFF800000> : vector<8xf32>
    %478 = vector.multi_reduction <maximumf>, %472, %cst_177 [1] : vector<8x8xf32> to vector<8xf32>
    %479 = vector.shape_cast %478 : vector<8xf32> to vector<8x1xf32>
    %480 = vector.broadcast %479 : vector<8x1xf32> to vector<8x8xf32>
    %481 = arith.subf %472, %480 : vector<8x8xf32>
    %482 = math.exp %481 : vector<8x8xf32>
    %cst_178 = arith.constant dense<0.000000e+00> : vector<8xf32>
    %483 = vector.multi_reduction <add>, %482, %cst_178 [1] : vector<8x8xf32> to vector<8xf32>
    %484 = vector.shape_cast %483 : vector<8xf32> to vector<8x1xf32>
    %485 = math.log %484 : vector<8x1xf32>
    %486 = arith.addf %485, %479 : vector<8x1xf32>
    %cst_179 = arith.constant dense<0xFF800000> : vector<8xf32>
    %487 = vector.multi_reduction <maximumf>, %472, %cst_179 [0] : vector<8x8xf32> to vector<8xf32>
    %488 = vector.shape_cast %487 : vector<8xf32> to vector<1x8xf32>
    %489 = vector.broadcast %488 : vector<1x8xf32> to vector<8x8xf32>
    %490 = arith.subf %472, %489 : vector<8x8xf32>
    %491 = math.exp %490 : vector<8x8xf32>
    %cst_180 = arith.constant dense<0.000000e+00> : vector<8xf32>
    %492 = vector.multi_reduction <add>, %491, %cst_180 [0] : vector<8x8xf32> to vector<8xf32>
    %493 = vector.shape_cast %492 : vector<8xf32> to vector<1x8xf32>
    %494 = math.log %493 : vector<1x8xf32>
    %495 = arith.addf %494, %488 : vector<1x8xf32>
    %cst_181 = arith.constant dense<0.000000e+00> : vector<8xf32>
    %496 = vector.multi_reduction <add>, %486, %cst_181 [1] : vector<8x1xf32> to vector<8xf32>
    %497 = vector.shape_cast %496 : vector<8xf32> to vector<8x1xf32>
    %cst_182 = arith.constant dense<0.000000e+00> : vector<1xf32>
    %498 = vector.multi_reduction <add>, %497, %cst_182 [0] : vector<8x1xf32> to vector<1xf32>
    %499 = vector.shape_cast %498 : vector<1xf32> to vector<1x1xf32>
    %500 = arith.addf %469, %499 : vector<1x1xf32>
    %cst_183 = arith.constant dense<0.000000e+00> : vector<1xf32>
    %501 = vector.multi_reduction <add>, %495, %cst_183 [1] : vector<1x8xf32> to vector<1xf32>
    %502 = vector.shape_cast %501 : vector<1xf32> to vector<1x1xf32>
    %cst_184 = arith.constant dense<0.000000e+00> : vector<1xf32>
    %503 = vector.multi_reduction <add>, %502, %cst_184 [0] : vector<1x1xf32> to vector<1xf32>
    %504 = vector.shape_cast %503 : vector<1xf32> to vector<1x1xf32>
    %505 = arith.addf %500, %504 : vector<1x1xf32>
    %cst_185 = arith.constant dense<0.000000e+00> : vector<8xf32>
    %506 = vector.multi_reduction <add>, %477, %cst_185 [1] : vector<8x1xf32> to vector<8xf32>
    %507 = vector.shape_cast %506 : vector<8xf32> to vector<8x1xf32>
    %cst_186 = arith.constant dense<0.000000e+00> : vector<1xf32>
    %508 = vector.multi_reduction <add>, %507, %cst_186 [0] : vector<8x1xf32> to vector<1xf32>
    %509 = vector.shape_cast %508 : vector<1xf32> to vector<1x1xf32>
    %cst_187 = arith.constant 2.000000e+00 : f32
    %510 = vector.broadcast %cst_187 : f32 to vector<1x1xf32>
    %511 = arith.mulf %510, %509 : vector<1x1xf32>
    %512 = arith.subf %505, %511 : vector<1x1xf32>
    %cst_188 = arith.constant dense<0.000000e+00> : vector<8x8xf32>
    %513 = tpu.matmul %127, %129, %cst_188 {dimension_numbers = #tpu.dot_dimension_numbers<[1], [1], [0], [0], [0, 0, 1, 0], [], []>} : vector<8x16xf32>, vector<8x16xf32>, vector<8x8xf32> -> vector<8x8xf32>
    %cst_189 = arith.constant 5.000000e+00 : f32
    %514 = vector.broadcast %cst_189 : f32 to vector<8x8xf32>
    %515 = arith.mulf %513, %514 : vector<8x8xf32>
    %516 = arith.mulf %127, %129 : vector<8x16xf32>
    %cst_190 = arith.constant dense<0.000000e+00> : vector<8xf32>
    %517 = vector.multi_reduction <add>, %516, %cst_190 [1] : vector<8x16xf32> to vector<8xf32>
    %518 = vector.shape_cast %517 : vector<8xf32> to vector<8x1xf32>
    %cst_191 = arith.constant 5.000000e+00 : f32
    %519 = vector.broadcast %cst_191 : f32 to vector<8x1xf32>
    %520 = arith.mulf %518, %519 : vector<8x1xf32>
    %cst_192 = arith.constant dense<0xFF800000> : vector<8xf32>
    %521 = vector.multi_reduction <maximumf>, %515, %cst_192 [1] : vector<8x8xf32> to vector<8xf32>
    %522 = vector.shape_cast %521 : vector<8xf32> to vector<8x1xf32>
    %523 = vector.broadcast %522 : vector<8x1xf32> to vector<8x8xf32>
    %524 = arith.subf %515, %523 : vector<8x8xf32>
    %525 = math.exp %524 : vector<8x8xf32>
    %cst_193 = arith.constant dense<0.000000e+00> : vector<8xf32>
    %526 = vector.multi_reduction <add>, %525, %cst_193 [1] : vector<8x8xf32> to vector<8xf32>
    %527 = vector.shape_cast %526 : vector<8xf32> to vector<8x1xf32>
    %528 = math.log %527 : vector<8x1xf32>
    %529 = arith.addf %528, %522 : vector<8x1xf32>
    %cst_194 = arith.constant dense<0xFF800000> : vector<8xf32>
    %530 = vector.multi_reduction <maximumf>, %515, %cst_194 [0] : vector<8x8xf32> to vector<8xf32>
    %531 = vector.shape_cast %530 : vector<8xf32> to vector<1x8xf32>
    %532 = vector.broadcast %531 : vector<1x8xf32> to vector<8x8xf32>
    %533 = arith.subf %515, %532 : vector<8x8xf32>
    %534 = math.exp %533 : vector<8x8xf32>
    %cst_195 = arith.constant dense<0.000000e+00> : vector<8xf32>
    %535 = vector.multi_reduction <add>, %534, %cst_195 [0] : vector<8x8xf32> to vector<8xf32>
    %536 = vector.shape_cast %535 : vector<8xf32> to vector<1x8xf32>
    %537 = math.log %536 : vector<1x8xf32>
    %538 = arith.addf %537, %531 : vector<1x8xf32>
    %cst_196 = arith.constant dense<0.000000e+00> : vector<8xf32>
    %539 = vector.multi_reduction <add>, %529, %cst_196 [1] : vector<8x1xf32> to vector<8xf32>
    %540 = vector.shape_cast %539 : vector<8xf32> to vector<8x1xf32>
    %cst_197 = arith.constant dense<0.000000e+00> : vector<1xf32>
    %541 = vector.multi_reduction <add>, %540, %cst_197 [0] : vector<8x1xf32> to vector<1xf32>
    %542 = vector.shape_cast %541 : vector<1xf32> to vector<1x1xf32>
    %543 = arith.addf %512, %542 : vector<1x1xf32>
    %cst_198 = arith.constant dense<0.000000e+00> : vector<1xf32>
    %544 = vector.multi_reduction <add>, %538, %cst_198 [1] : vector<1x8xf32> to vector<1xf32>
    %545 = vector.shape_cast %544 : vector<1xf32> to vector<1x1xf32>
    %cst_199 = arith.constant dense<0.000000e+00> : vector<1xf32>
    %546 = vector.multi_reduction <add>, %545, %cst_199 [0] : vector<1x1xf32> to vector<1xf32>
    %547 = vector.shape_cast %546 : vector<1xf32> to vector<1x1xf32>
    %548 = arith.addf %543, %547 : vector<1x1xf32>
    %cst_200 = arith.constant dense<0.000000e+00> : vector<8xf32>
    %549 = vector.multi_reduction <add>, %520, %cst_200 [1] : vector<8x1xf32> to vector<8xf32>
    %550 = vector.shape_cast %549 : vector<8xf32> to vector<8x1xf32>
    %cst_201 = arith.constant dense<0.000000e+00> : vector<1xf32>
    %551 = vector.multi_reduction <add>, %550, %cst_201 [0] : vector<8x1xf32> to vector<1xf32>
    %552 = vector.shape_cast %551 : vector<1xf32> to vector<1x1xf32>
    %cst_202 = arith.constant 2.000000e+00 : f32
    %553 = vector.broadcast %cst_202 : f32 to vector<1x1xf32>
    %554 = arith.mulf %553, %552 : vector<1x1xf32>
    %555 = arith.subf %548, %554 : vector<1x1xf32>
    %cst_203 = arith.constant dense<0.000000e+00> : vector<8x8xf32>
    %556 = tpu.matmul %127, %130, %cst_203 {dimension_numbers = #tpu.dot_dimension_numbers<[1], [1], [0], [0], [0, 0, 1, 0], [], []>} : vector<8x16xf32>, vector<8x16xf32>, vector<8x8xf32> -> vector<8x8xf32>
    %cst_204 = arith.constant 5.000000e+00 : f32
    %557 = vector.broadcast %cst_204 : f32 to vector<8x8xf32>
    %558 = arith.mulf %556, %557 : vector<8x8xf32>
    %559 = arith.mulf %127, %130 : vector<8x16xf32>
    %cst_205 = arith.constant dense<0.000000e+00> : vector<8xf32>
    %560 = vector.multi_reduction <add>, %559, %cst_205 [1] : vector<8x16xf32> to vector<8xf32>
    %561 = vector.shape_cast %560 : vector<8xf32> to vector<8x1xf32>
    %cst_206 = arith.constant 5.000000e+00 : f32
    %562 = vector.broadcast %cst_206 : f32 to vector<8x1xf32>
    %563 = arith.mulf %561, %562 : vector<8x1xf32>
    %cst_207 = arith.constant dense<0xFF800000> : vector<8xf32>
    %564 = vector.multi_reduction <maximumf>, %558, %cst_207 [1] : vector<8x8xf32> to vector<8xf32>
    %565 = vector.shape_cast %564 : vector<8xf32> to vector<8x1xf32>
    %566 = vector.broadcast %565 : vector<8x1xf32> to vector<8x8xf32>
    %567 = arith.subf %558, %566 : vector<8x8xf32>
    %568 = math.exp %567 : vector<8x8xf32>
    %cst_208 = arith.constant dense<0.000000e+00> : vector<8xf32>
    %569 = vector.multi_reduction <add>, %568, %cst_208 [1] : vector<8x8xf32> to vector<8xf32>
    %570 = vector.shape_cast %569 : vector<8xf32> to vector<8x1xf32>
    %571 = math.log %570 : vector<8x1xf32>
    %572 = arith.addf %571, %565 : vector<8x1xf32>
    %cst_209 = arith.constant dense<0xFF800000> : vector<8xf32>
    %573 = vector.multi_reduction <maximumf>, %558, %cst_209 [0] : vector<8x8xf32> to vector<8xf32>
    %574 = vector.shape_cast %573 : vector<8xf32> to vector<1x8xf32>
    %575 = vector.broadcast %574 : vector<1x8xf32> to vector<8x8xf32>
    %576 = arith.subf %558, %575 : vector<8x8xf32>
    %577 = math.exp %576 : vector<8x8xf32>
    %cst_210 = arith.constant dense<0.000000e+00> : vector<8xf32>
    %578 = vector.multi_reduction <add>, %577, %cst_210 [0] : vector<8x8xf32> to vector<8xf32>
    %579 = vector.shape_cast %578 : vector<8xf32> to vector<1x8xf32>
    %580 = math.log %579 : vector<1x8xf32>
    %581 = arith.addf %580, %574 : vector<1x8xf32>
    %cst_211 = arith.constant dense<0.000000e+00> : vector<8xf32>
    %582 = vector.multi_reduction <add>, %572, %cst_211 [1] : vector<8x1xf32> to vector<8xf32>
    %583 = vector.shape_cast %582 : vector<8xf32> to vector<8x1xf32>
    %cst_212 = arith.constant dense<0.000000e+00> : vector<1xf32>
    %584 = vector.multi_reduction <add>, %583, %cst_212 [0] : vector<8x1xf32> to vector<1xf32>
    %585 = vector.shape_cast %584 : vector<1xf32> to vector<1x1xf32>
    %586 = arith.addf %555, %585 : vector<1x1xf32>
    %cst_213 = arith.constant dense<0.000000e+00> : vector<1xf32>
    %587 = vector.multi_reduction <add>, %581, %cst_213 [1] : vector<1x8xf32> to vector<1xf32>
    %588 = vector.shape_cast %587 : vector<1xf32> to vector<1x1xf32>
    %cst_214 = arith.constant dense<0.000000e+00> : vector<1xf32>
    %589 = vector.multi_reduction <add>, %588, %cst_214 [0] : vector<1x1xf32> to vector<1xf32>
    %590 = vector.shape_cast %589 : vector<1xf32> to vector<1x1xf32>
    %591 = arith.addf %586, %590 : vector<1x1xf32>
    %cst_215 = arith.constant dense<0.000000e+00> : vector<8xf32>
    %592 = vector.multi_reduction <add>, %563, %cst_215 [1] : vector<8x1xf32> to vector<8xf32>
    %593 = vector.shape_cast %592 : vector<8xf32> to vector<8x1xf32>
    %cst_216 = arith.constant dense<0.000000e+00> : vector<1xf32>
    %594 = vector.multi_reduction <add>, %593, %cst_216 [0] : vector<8x1xf32> to vector<1xf32>
    %595 = vector.shape_cast %594 : vector<1xf32> to vector<1x1xf32>
    %cst_217 = arith.constant 2.000000e+00 : f32
    %596 = vector.broadcast %cst_217 : f32 to vector<1x1xf32>
    %597 = arith.mulf %596, %595 : vector<1x1xf32>
    %598 = arith.subf %591, %597 : vector<1x1xf32>
    %cst_218 = arith.constant dense<0.000000e+00> : vector<8x8xf32>
    %599 = tpu.matmul %127, %131, %cst_218 {dimension_numbers = #tpu.dot_dimension_numbers<[1], [1], [0], [0], [0, 0, 1, 0], [], []>} : vector<8x16xf32>, vector<8x16xf32>, vector<8x8xf32> -> vector<8x8xf32>
    %cst_219 = arith.constant 5.000000e+00 : f32
    %600 = vector.broadcast %cst_219 : f32 to vector<8x8xf32>
    %601 = arith.mulf %599, %600 : vector<8x8xf32>
    %602 = arith.mulf %127, %131 : vector<8x16xf32>
    %cst_220 = arith.constant dense<0.000000e+00> : vector<8xf32>
    %603 = vector.multi_reduction <add>, %602, %cst_220 [1] : vector<8x16xf32> to vector<8xf32>
    %604 = vector.shape_cast %603 : vector<8xf32> to vector<8x1xf32>
    %cst_221 = arith.constant 5.000000e+00 : f32
    %605 = vector.broadcast %cst_221 : f32 to vector<8x1xf32>
    %606 = arith.mulf %604, %605 : vector<8x1xf32>
    %cst_222 = arith.constant dense<0xFF800000> : vector<8xf32>
    %607 = vector.multi_reduction <maximumf>, %601, %cst_222 [1] : vector<8x8xf32> to vector<8xf32>
    %608 = vector.shape_cast %607 : vector<8xf32> to vector<8x1xf32>
    %609 = vector.broadcast %608 : vector<8x1xf32> to vector<8x8xf32>
    %610 = arith.subf %601, %609 : vector<8x8xf32>
    %611 = math.exp %610 : vector<8x8xf32>
    %cst_223 = arith.constant dense<0.000000e+00> : vector<8xf32>
    %612 = vector.multi_reduction <add>, %611, %cst_223 [1] : vector<8x8xf32> to vector<8xf32>
    %613 = vector.shape_cast %612 : vector<8xf32> to vector<8x1xf32>
    %614 = math.log %613 : vector<8x1xf32>
    %615 = arith.addf %614, %608 : vector<8x1xf32>
    %cst_224 = arith.constant dense<0xFF800000> : vector<8xf32>
    %616 = vector.multi_reduction <maximumf>, %601, %cst_224 [0] : vector<8x8xf32> to vector<8xf32>
    %617 = vector.shape_cast %616 : vector<8xf32> to vector<1x8xf32>
    %618 = vector.broadcast %617 : vector<1x8xf32> to vector<8x8xf32>
    %619 = arith.subf %601, %618 : vector<8x8xf32>
    %620 = math.exp %619 : vector<8x8xf32>
    %cst_225 = arith.constant dense<0.000000e+00> : vector<8xf32>
    %621 = vector.multi_reduction <add>, %620, %cst_225 [0] : vector<8x8xf32> to vector<8xf32>
    %622 = vector.shape_cast %621 : vector<8xf32> to vector<1x8xf32>
    %623 = math.log %622 : vector<1x8xf32>
    %624 = arith.addf %623, %617 : vector<1x8xf32>
    %cst_226 = arith.constant dense<0.000000e+00> : vector<8xf32>
    %625 = vector.multi_reduction <add>, %615, %cst_226 [1] : vector<8x1xf32> to vector<8xf32>
    %626 = vector.shape_cast %625 : vector<8xf32> to vector<8x1xf32>
    %cst_227 = arith.constant dense<0.000000e+00> : vector<1xf32>
    %627 = vector.multi_reduction <add>, %626, %cst_227 [0] : vector<8x1xf32> to vector<1xf32>
    %628 = vector.shape_cast %627 : vector<1xf32> to vector<1x1xf32>
    %629 = arith.addf %598, %628 : vector<1x1xf32>
    %cst_228 = arith.constant dense<0.000000e+00> : vector<1xf32>
    %630 = vector.multi_reduction <add>, %624, %cst_228 [1] : vector<1x8xf32> to vector<1xf32>
    %631 = vector.shape_cast %630 : vector<1xf32> to vector<1x1xf32>
    %cst_229 = arith.constant dense<0.000000e+00> : vector<1xf32>
    %632 = vector.multi_reduction <add>, %631, %cst_229 [0] : vector<1x1xf32> to vector<1xf32>
    %633 = vector.shape_cast %632 : vector<1xf32> to vector<1x1xf32>
    %634 = arith.addf %629, %633 : vector<1x1xf32>
    %cst_230 = arith.constant dense<0.000000e+00> : vector<8xf32>
    %635 = vector.multi_reduction <add>, %606, %cst_230 [1] : vector<8x1xf32> to vector<8xf32>
    %636 = vector.shape_cast %635 : vector<8xf32> to vector<8x1xf32>
    %cst_231 = arith.constant dense<0.000000e+00> : vector<1xf32>
    %637 = vector.multi_reduction <add>, %636, %cst_231 [0] : vector<8x1xf32> to vector<1xf32>
    %638 = vector.shape_cast %637 : vector<1xf32> to vector<1x1xf32>
    %cst_232 = arith.constant 2.000000e+00 : f32
    %639 = vector.broadcast %cst_232 : f32 to vector<1x1xf32>
    %640 = arith.mulf %639, %638 : vector<1x1xf32>
    %641 = arith.subf %634, %640 : vector<1x1xf32>
    %cst_233 = arith.constant dense<0.000000e+00> : vector<8x8xf32>
    %642 = tpu.matmul %128, %129, %cst_233 {dimension_numbers = #tpu.dot_dimension_numbers<[1], [1], [0], [0], [0, 0, 1, 0], [], []>} : vector<8x16xf32>, vector<8x16xf32>, vector<8x8xf32> -> vector<8x8xf32>
    %cst_234 = arith.constant 5.000000e+00 : f32
    %643 = vector.broadcast %cst_234 : f32 to vector<8x8xf32>
    %644 = arith.mulf %642, %643 : vector<8x8xf32>
    %645 = arith.mulf %128, %129 : vector<8x16xf32>
    %cst_235 = arith.constant dense<0.000000e+00> : vector<8xf32>
    %646 = vector.multi_reduction <add>, %645, %cst_235 [1] : vector<8x16xf32> to vector<8xf32>
    %647 = vector.shape_cast %646 : vector<8xf32> to vector<8x1xf32>
    %cst_236 = arith.constant 5.000000e+00 : f32
    %648 = vector.broadcast %cst_236 : f32 to vector<8x1xf32>
    %649 = arith.mulf %647, %648 : vector<8x1xf32>
    %cst_237 = arith.constant dense<0xFF800000> : vector<8xf32>
    %650 = vector.multi_reduction <maximumf>, %644, %cst_237 [1] : vector<8x8xf32> to vector<8xf32>
    %651 = vector.shape_cast %650 : vector<8xf32> to vector<8x1xf32>
    %652 = vector.broadcast %651 : vector<8x1xf32> to vector<8x8xf32>
    %653 = arith.subf %644, %652 : vector<8x8xf32>
    %654 = math.exp %653 : vector<8x8xf32>
    %cst_238 = arith.constant dense<0.000000e+00> : vector<8xf32>
    %655 = vector.multi_reduction <add>, %654, %cst_238 [1] : vector<8x8xf32> to vector<8xf32>
    %656 = vector.shape_cast %655 : vector<8xf32> to vector<8x1xf32>
    %657 = math.log %656 : vector<8x1xf32>
    %658 = arith.addf %657, %651 : vector<8x1xf32>
    %cst_239 = arith.constant dense<0xFF800000> : vector<8xf32>
    %659 = vector.multi_reduction <maximumf>, %644, %cst_239 [0] : vector<8x8xf32> to vector<8xf32>
    %660 = vector.shape_cast %659 : vector<8xf32> to vector<1x8xf32>
    %661 = vector.broadcast %660 : vector<1x8xf32> to vector<8x8xf32>
    %662 = arith.subf %644, %661 : vector<8x8xf32>
    %663 = math.exp %662 : vector<8x8xf32>
    %cst_240 = arith.constant dense<0.000000e+00> : vector<8xf32>
    %664 = vector.multi_reduction <add>, %663, %cst_240 [0] : vector<8x8xf32> to vector<8xf32>
    %665 = vector.shape_cast %664 : vector<8xf32> to vector<1x8xf32>
    %666 = math.log %665 : vector<1x8xf32>
    %667 = arith.addf %666, %660 : vector<1x8xf32>
    %cst_241 = arith.constant dense<0.000000e+00> : vector<8xf32>
    %668 = vector.multi_reduction <add>, %658, %cst_241 [1] : vector<8x1xf32> to vector<8xf32>
    %669 = vector.shape_cast %668 : vector<8xf32> to vector<8x1xf32>
    %cst_242 = arith.constant dense<0.000000e+00> : vector<1xf32>
    %670 = vector.multi_reduction <add>, %669, %cst_242 [0] : vector<8x1xf32> to vector<1xf32>
    %671 = vector.shape_cast %670 : vector<1xf32> to vector<1x1xf32>
    %672 = arith.addf %641, %671 : vector<1x1xf32>
    %cst_243 = arith.constant dense<0.000000e+00> : vector<1xf32>
    %673 = vector.multi_reduction <add>, %667, %cst_243 [1] : vector<1x8xf32> to vector<1xf32>
    %674 = vector.shape_cast %673 : vector<1xf32> to vector<1x1xf32>
    %cst_244 = arith.constant dense<0.000000e+00> : vector<1xf32>
    %675 = vector.multi_reduction <add>, %674, %cst_244 [0] : vector<1x1xf32> to vector<1xf32>
    %676 = vector.shape_cast %675 : vector<1xf32> to vector<1x1xf32>
    %677 = arith.addf %672, %676 : vector<1x1xf32>
    %cst_245 = arith.constant dense<0.000000e+00> : vector<8xf32>
    %678 = vector.multi_reduction <add>, %649, %cst_245 [1] : vector<8x1xf32> to vector<8xf32>
    %679 = vector.shape_cast %678 : vector<8xf32> to vector<8x1xf32>
    %cst_246 = arith.constant dense<0.000000e+00> : vector<1xf32>
    %680 = vector.multi_reduction <add>, %679, %cst_246 [0] : vector<8x1xf32> to vector<1xf32>
    %681 = vector.shape_cast %680 : vector<1xf32> to vector<1x1xf32>
    %cst_247 = arith.constant 2.000000e+00 : f32
    %682 = vector.broadcast %cst_247 : f32 to vector<1x1xf32>
    %683 = arith.mulf %682, %681 : vector<1x1xf32>
    %684 = arith.subf %677, %683 : vector<1x1xf32>
    %cst_248 = arith.constant dense<0.000000e+00> : vector<8x8xf32>
    %685 = tpu.matmul %128, %130, %cst_248 {dimension_numbers = #tpu.dot_dimension_numbers<[1], [1], [0], [0], [0, 0, 1, 0], [], []>} : vector<8x16xf32>, vector<8x16xf32>, vector<8x8xf32> -> vector<8x8xf32>
    %cst_249 = arith.constant 5.000000e+00 : f32
    %686 = vector.broadcast %cst_249 : f32 to vector<8x8xf32>
    %687 = arith.mulf %685, %686 : vector<8x8xf32>
    %688 = arith.mulf %128, %130 : vector<8x16xf32>
    %cst_250 = arith.constant dense<0.000000e+00> : vector<8xf32>
    %689 = vector.multi_reduction <add>, %688, %cst_250 [1] : vector<8x16xf32> to vector<8xf32>
    %690 = vector.shape_cast %689 : vector<8xf32> to vector<8x1xf32>
    %cst_251 = arith.constant 5.000000e+00 : f32
    %691 = vector.broadcast %cst_251 : f32 to vector<8x1xf32>
    %692 = arith.mulf %690, %691 : vector<8x1xf32>
    %cst_252 = arith.constant dense<0xFF800000> : vector<8xf32>
    %693 = vector.multi_reduction <maximumf>, %687, %cst_252 [1] : vector<8x8xf32> to vector<8xf32>
    %694 = vector.shape_cast %693 : vector<8xf32> to vector<8x1xf32>
    %695 = vector.broadcast %694 : vector<8x1xf32> to vector<8x8xf32>
    %696 = arith.subf %687, %695 : vector<8x8xf32>
    %697 = math.exp %696 : vector<8x8xf32>
    %cst_253 = arith.constant dense<0.000000e+00> : vector<8xf32>
    %698 = vector.multi_reduction <add>, %697, %cst_253 [1] : vector<8x8xf32> to vector<8xf32>
    %699 = vector.shape_cast %698 : vector<8xf32> to vector<8x1xf32>
    %700 = math.log %699 : vector<8x1xf32>
    %701 = arith.addf %700, %694 : vector<8x1xf32>
    %cst_254 = arith.constant dense<0xFF800000> : vector<8xf32>
    %702 = vector.multi_reduction <maximumf>, %687, %cst_254 [0] : vector<8x8xf32> to vector<8xf32>
    %703 = vector.shape_cast %702 : vector<8xf32> to vector<1x8xf32>
    %704 = vector.broadcast %703 : vector<1x8xf32> to vector<8x8xf32>
    %705 = arith.subf %687, %704 : vector<8x8xf32>
    %706 = math.exp %705 : vector<8x8xf32>
    %cst_255 = arith.constant dense<0.000000e+00> : vector<8xf32>
    %707 = vector.multi_reduction <add>, %706, %cst_255 [0] : vector<8x8xf32> to vector<8xf32>
    %708 = vector.shape_cast %707 : vector<8xf32> to vector<1x8xf32>
    %709 = math.log %708 : vector<1x8xf32>
    %710 = arith.addf %709, %703 : vector<1x8xf32>
    %cst_256 = arith.constant dense<0.000000e+00> : vector<8xf32>
    %711 = vector.multi_reduction <add>, %701, %cst_256 [1] : vector<8x1xf32> to vector<8xf32>
    %712 = vector.shape_cast %711 : vector<8xf32> to vector<8x1xf32>
    %cst_257 = arith.constant dense<0.000000e+00> : vector<1xf32>
    %713 = vector.multi_reduction <add>, %712, %cst_257 [0] : vector<8x1xf32> to vector<1xf32>
    %714 = vector.shape_cast %713 : vector<1xf32> to vector<1x1xf32>
    %715 = arith.addf %684, %714 : vector<1x1xf32>
    %cst_258 = arith.constant dense<0.000000e+00> : vector<1xf32>
    %716 = vector.multi_reduction <add>, %710, %cst_258 [1] : vector<1x8xf32> to vector<1xf32>
    %717 = vector.shape_cast %716 : vector<1xf32> to vector<1x1xf32>
    %cst_259 = arith.constant dense<0.000000e+00> : vector<1xf32>
    %718 = vector.multi_reduction <add>, %717, %cst_259 [0] : vector<1x1xf32> to vector<1xf32>
    %719 = vector.shape_cast %718 : vector<1xf32> to vector<1x1xf32>
    %720 = arith.addf %715, %719 : vector<1x1xf32>
    %cst_260 = arith.constant dense<0.000000e+00> : vector<8xf32>
    %721 = vector.multi_reduction <add>, %692, %cst_260 [1] : vector<8x1xf32> to vector<8xf32>
    %722 = vector.shape_cast %721 : vector<8xf32> to vector<8x1xf32>
    %cst_261 = arith.constant dense<0.000000e+00> : vector<1xf32>
    %723 = vector.multi_reduction <add>, %722, %cst_261 [0] : vector<8x1xf32> to vector<1xf32>
    %724 = vector.shape_cast %723 : vector<1xf32> to vector<1x1xf32>
    %cst_262 = arith.constant 2.000000e+00 : f32
    %725 = vector.broadcast %cst_262 : f32 to vector<1x1xf32>
    %726 = arith.mulf %725, %724 : vector<1x1xf32>
    %727 = arith.subf %720, %726 : vector<1x1xf32>
    %cst_263 = arith.constant dense<0.000000e+00> : vector<8x8xf32>
    %728 = tpu.matmul %128, %131, %cst_263 {dimension_numbers = #tpu.dot_dimension_numbers<[1], [1], [0], [0], [0, 0, 1, 0], [], []>} : vector<8x16xf32>, vector<8x16xf32>, vector<8x8xf32> -> vector<8x8xf32>
    %cst_264 = arith.constant 5.000000e+00 : f32
    %729 = vector.broadcast %cst_264 : f32 to vector<8x8xf32>
    %730 = arith.mulf %728, %729 : vector<8x8xf32>
    %731 = arith.mulf %128, %131 : vector<8x16xf32>
    %cst_265 = arith.constant dense<0.000000e+00> : vector<8xf32>
    %732 = vector.multi_reduction <add>, %731, %cst_265 [1] : vector<8x16xf32> to vector<8xf32>
    %733 = vector.shape_cast %732 : vector<8xf32> to vector<8x1xf32>
    %cst_266 = arith.constant 5.000000e+00 : f32
    %734 = vector.broadcast %cst_266 : f32 to vector<8x1xf32>
    %735 = arith.mulf %733, %734 : vector<8x1xf32>
    %cst_267 = arith.constant dense<0xFF800000> : vector<8xf32>
    %736 = vector.multi_reduction <maximumf>, %730, %cst_267 [1] : vector<8x8xf32> to vector<8xf32>
    %737 = vector.shape_cast %736 : vector<8xf32> to vector<8x1xf32>
    %738 = vector.broadcast %737 : vector<8x1xf32> to vector<8x8xf32>
    %739 = arith.subf %730, %738 : vector<8x8xf32>
    %740 = math.exp %739 : vector<8x8xf32>
    %cst_268 = arith.constant dense<0.000000e+00> : vector<8xf32>
    %741 = vector.multi_reduction <add>, %740, %cst_268 [1] : vector<8x8xf32> to vector<8xf32>
    %742 = vector.shape_cast %741 : vector<8xf32> to vector<8x1xf32>
    %743 = math.log %742 : vector<8x1xf32>
    %744 = arith.addf %743, %737 : vector<8x1xf32>
    %cst_269 = arith.constant dense<0xFF800000> : vector<8xf32>
    %745 = vector.multi_reduction <maximumf>, %730, %cst_269 [0] : vector<8x8xf32> to vector<8xf32>
    %746 = vector.shape_cast %745 : vector<8xf32> to vector<1x8xf32>
    %747 = vector.broadcast %746 : vector<1x8xf32> to vector<8x8xf32>
    %748 = arith.subf %730, %747 : vector<8x8xf32>
    %749 = math.exp %748 : vector<8x8xf32>
    %cst_270 = arith.constant dense<0.000000e+00> : vector<8xf32>
    %750 = vector.multi_reduction <add>, %749, %cst_270 [0] : vector<8x8xf32> to vector<8xf32>
    %751 = vector.shape_cast %750 : vector<8xf32> to vector<1x8xf32>
    %752 = math.log %751 : vector<1x8xf32>
    %753 = arith.addf %752, %746 : vector<1x8xf32>
    %cst_271 = arith.constant dense<0.000000e+00> : vector<8xf32>
    %754 = vector.multi_reduction <add>, %744, %cst_271 [1] : vector<8x1xf32> to vector<8xf32>
    %755 = vector.shape_cast %754 : vector<8xf32> to vector<8x1xf32>
    %cst_272 = arith.constant dense<0.000000e+00> : vector<1xf32>
    %756 = vector.multi_reduction <add>, %755, %cst_272 [0] : vector<8x1xf32> to vector<1xf32>
    %757 = vector.shape_cast %756 : vector<1xf32> to vector<1x1xf32>
    %758 = arith.addf %727, %757 : vector<1x1xf32>
    %cst_273 = arith.constant dense<0.000000e+00> : vector<1xf32>
    %759 = vector.multi_reduction <add>, %753, %cst_273 [1] : vector<1x8xf32> to vector<1xf32>
    %760 = vector.shape_cast %759 : vector<1xf32> to vector<1x1xf32>
    %cst_274 = arith.constant dense<0.000000e+00> : vector<1xf32>
    %761 = vector.multi_reduction <add>, %760, %cst_274 [0] : vector<1x1xf32> to vector<1xf32>
    %762 = vector.shape_cast %761 : vector<1xf32> to vector<1x1xf32>
    %763 = arith.addf %758, %762 : vector<1x1xf32>
    %cst_275 = arith.constant dense<0.000000e+00> : vector<8xf32>
    %764 = vector.multi_reduction <add>, %735, %cst_275 [1] : vector<8x1xf32> to vector<8xf32>
    %765 = vector.shape_cast %764 : vector<8xf32> to vector<8x1xf32>
    %cst_276 = arith.constant dense<0.000000e+00> : vector<1xf32>
    %766 = vector.multi_reduction <add>, %765, %cst_276 [0] : vector<8x1xf32> to vector<1xf32>
    %767 = vector.shape_cast %766 : vector<1xf32> to vector<1x1xf32>
    %cst_277 = arith.constant 2.000000e+00 : f32
    %768 = vector.broadcast %cst_277 : f32 to vector<1x1xf32>
    %769 = arith.mulf %768, %767 : vector<1x1xf32>
    %770 = arith.subf %763, %769 : vector<1x1xf32>
    %cst_278 = arith.constant dense<0.000000e+00> : vector<8x8xf32>
    %771 = tpu.matmul %129, %130, %cst_278 {dimension_numbers = #tpu.dot_dimension_numbers<[1], [1], [0], [0], [0, 0, 1, 0], [], []>} : vector<8x16xf32>, vector<8x16xf32>, vector<8x8xf32> -> vector<8x8xf32>
    %cst_279 = arith.constant 5.000000e+00 : f32
    %772 = vector.broadcast %cst_279 : f32 to vector<8x8xf32>
    %773 = arith.mulf %771, %772 : vector<8x8xf32>
    %774 = arith.mulf %129, %130 : vector<8x16xf32>
    %cst_280 = arith.constant dense<0.000000e+00> : vector<8xf32>
    %775 = vector.multi_reduction <add>, %774, %cst_280 [1] : vector<8x16xf32> to vector<8xf32>
    %776 = vector.shape_cast %775 : vector<8xf32> to vector<8x1xf32>
    %cst_281 = arith.constant 5.000000e+00 : f32
    %777 = vector.broadcast %cst_281 : f32 to vector<8x1xf32>
    %778 = arith.mulf %776, %777 : vector<8x1xf32>
    %cst_282 = arith.constant dense<0xFF800000> : vector<8xf32>
    %779 = vector.multi_reduction <maximumf>, %773, %cst_282 [1] : vector<8x8xf32> to vector<8xf32>
    %780 = vector.shape_cast %779 : vector<8xf32> to vector<8x1xf32>
    %781 = vector.broadcast %780 : vector<8x1xf32> to vector<8x8xf32>
    %782 = arith.subf %773, %781 : vector<8x8xf32>
    %783 = math.exp %782 : vector<8x8xf32>
    %cst_283 = arith.constant dense<0.000000e+00> : vector<8xf32>
    %784 = vector.multi_reduction <add>, %783, %cst_283 [1] : vector<8x8xf32> to vector<8xf32>
    %785 = vector.shape_cast %784 : vector<8xf32> to vector<8x1xf32>
    %786 = math.log %785 : vector<8x1xf32>
    %787 = arith.addf %786, %780 : vector<8x1xf32>
    %cst_284 = arith.constant dense<0xFF800000> : vector<8xf32>
    %788 = vector.multi_reduction <maximumf>, %773, %cst_284 [0] : vector<8x8xf32> to vector<8xf32>
    %789 = vector.shape_cast %788 : vector<8xf32> to vector<1x8xf32>
    %790 = vector.broadcast %789 : vector<1x8xf32> to vector<8x8xf32>
    %791 = arith.subf %773, %790 : vector<8x8xf32>
    %792 = math.exp %791 : vector<8x8xf32>
    %cst_285 = arith.constant dense<0.000000e+00> : vector<8xf32>
    %793 = vector.multi_reduction <add>, %792, %cst_285 [0] : vector<8x8xf32> to vector<8xf32>
    %794 = vector.shape_cast %793 : vector<8xf32> to vector<1x8xf32>
    %795 = math.log %794 : vector<1x8xf32>
    %796 = arith.addf %795, %789 : vector<1x8xf32>
    %cst_286 = arith.constant dense<0.000000e+00> : vector<8xf32>
    %797 = vector.multi_reduction <add>, %787, %cst_286 [1] : vector<8x1xf32> to vector<8xf32>
    %798 = vector.shape_cast %797 : vector<8xf32> to vector<8x1xf32>
    %cst_287 = arith.constant dense<0.000000e+00> : vector<1xf32>
    %799 = vector.multi_reduction <add>, %798, %cst_287 [0] : vector<8x1xf32> to vector<1xf32>
    %800 = vector.shape_cast %799 : vector<1xf32> to vector<1x1xf32>
    %801 = arith.addf %770, %800 : vector<1x1xf32>
    %cst_288 = arith.constant dense<0.000000e+00> : vector<1xf32>
    %802 = vector.multi_reduction <add>, %796, %cst_288 [1] : vector<1x8xf32> to vector<1xf32>
    %803 = vector.shape_cast %802 : vector<1xf32> to vector<1x1xf32>
    %cst_289 = arith.constant dense<0.000000e+00> : vector<1xf32>
    %804 = vector.multi_reduction <add>, %803, %cst_289 [0] : vector<1x1xf32> to vector<1xf32>
    %805 = vector.shape_cast %804 : vector<1xf32> to vector<1x1xf32>
    %806 = arith.addf %801, %805 : vector<1x1xf32>
    %cst_290 = arith.constant dense<0.000000e+00> : vector<8xf32>
    %807 = vector.multi_reduction <add>, %778, %cst_290 [1] : vector<8x1xf32> to vector<8xf32>
    %808 = vector.shape_cast %807 : vector<8xf32> to vector<8x1xf32>
    %cst_291 = arith.constant dense<0.000000e+00> : vector<1xf32>
    %809 = vector.multi_reduction <add>, %808, %cst_291 [0] : vector<8x1xf32> to vector<1xf32>
    %810 = vector.shape_cast %809 : vector<1xf32> to vector<1x1xf32>
    %cst_292 = arith.constant 2.000000e+00 : f32
    %811 = vector.broadcast %cst_292 : f32 to vector<1x1xf32>
    %812 = arith.mulf %811, %810 : vector<1x1xf32>
    %813 = arith.subf %806, %812 : vector<1x1xf32>
    %cst_293 = arith.constant dense<0.000000e+00> : vector<8x8xf32>
    %814 = tpu.matmul %129, %131, %cst_293 {dimension_numbers = #tpu.dot_dimension_numbers<[1], [1], [0], [0], [0, 0, 1, 0], [], []>} : vector<8x16xf32>, vector<8x16xf32>, vector<8x8xf32> -> vector<8x8xf32>
    %cst_294 = arith.constant 5.000000e+00 : f32
    %815 = vector.broadcast %cst_294 : f32 to vector<8x8xf32>
    %816 = arith.mulf %814, %815 : vector<8x8xf32>
    %817 = arith.mulf %129, %131 : vector<8x16xf32>
    %cst_295 = arith.constant dense<0.000000e+00> : vector<8xf32>
    %818 = vector.multi_reduction <add>, %817, %cst_295 [1] : vector<8x16xf32> to vector<8xf32>
    %819 = vector.shape_cast %818 : vector<8xf32> to vector<8x1xf32>
    %cst_296 = arith.constant 5.000000e+00 : f32
    %820 = vector.broadcast %cst_296 : f32 to vector<8x1xf32>
    %821 = arith.mulf %819, %820 : vector<8x1xf32>
    %cst_297 = arith.constant dense<0xFF800000> : vector<8xf32>
    %822 = vector.multi_reduction <maximumf>, %816, %cst_297 [1] : vector<8x8xf32> to vector<8xf32>
    %823 = vector.shape_cast %822 : vector<8xf32> to vector<8x1xf32>
    %824 = vector.broadcast %823 : vector<8x1xf32> to vector<8x8xf32>
    %825 = arith.subf %816, %824 : vector<8x8xf32>
    %826 = math.exp %825 : vector<8x8xf32>
    %cst_298 = arith.constant dense<0.000000e+00> : vector<8xf32>
    %827 = vector.multi_reduction <add>, %826, %cst_298 [1] : vector<8x8xf32> to vector<8xf32>
    %828 = vector.shape_cast %827 : vector<8xf32> to vector<8x1xf32>
    %829 = math.log %828 : vector<8x1xf32>
    %830 = arith.addf %829, %823 : vector<8x1xf32>
    %cst_299 = arith.constant dense<0xFF800000> : vector<8xf32>
    %831 = vector.multi_reduction <maximumf>, %816, %cst_299 [0] : vector<8x8xf32> to vector<8xf32>
    %832 = vector.shape_cast %831 : vector<8xf32> to vector<1x8xf32>
    %833 = vector.broadcast %832 : vector<1x8xf32> to vector<8x8xf32>
    %834 = arith.subf %816, %833 : vector<8x8xf32>
    %835 = math.exp %834 : vector<8x8xf32>
    %cst_300 = arith.constant dense<0.000000e+00> : vector<8xf32>
    %836 = vector.multi_reduction <add>, %835, %cst_300 [0] : vector<8x8xf32> to vector<8xf32>
    %837 = vector.shape_cast %836 : vector<8xf32> to vector<1x8xf32>
    %838 = math.log %837 : vector<1x8xf32>
    %839 = arith.addf %838, %832 : vector<1x8xf32>
    %cst_301 = arith.constant dense<0.000000e+00> : vector<8xf32>
    %840 = vector.multi_reduction <add>, %830, %cst_301 [1] : vector<8x1xf32> to vector<8xf32>
    %841 = vector.shape_cast %840 : vector<8xf32> to vector<8x1xf32>
    %cst_302 = arith.constant dense<0.000000e+00> : vector<1xf32>
    %842 = vector.multi_reduction <add>, %841, %cst_302 [0] : vector<8x1xf32> to vector<1xf32>
    %843 = vector.shape_cast %842 : vector<1xf32> to vector<1x1xf32>
    %844 = arith.addf %813, %843 : vector<1x1xf32>
    %cst_303 = arith.constant dense<0.000000e+00> : vector<1xf32>
    %845 = vector.multi_reduction <add>, %839, %cst_303 [1] : vector<1x8xf32> to vector<1xf32>
    %846 = vector.shape_cast %845 : vector<1xf32> to vector<1x1xf32>
    %cst_304 = arith.constant dense<0.000000e+00> : vector<1xf32>
    %847 = vector.multi_reduction <add>, %846, %cst_304 [0] : vector<1x1xf32> to vector<1xf32>
    %848 = vector.shape_cast %847 : vector<1xf32> to vector<1x1xf32>
    %849 = arith.addf %844, %848 : vector<1x1xf32>
    %cst_305 = arith.constant dense<0.000000e+00> : vector<8xf32>
    %850 = vector.multi_reduction <add>, %821, %cst_305 [1] : vector<8x1xf32> to vector<8xf32>
    %851 = vector.shape_cast %850 : vector<8xf32> to vector<8x1xf32>
    %cst_306 = arith.constant dense<0.000000e+00> : vector<1xf32>
    %852 = vector.multi_reduction <add>, %851, %cst_306 [0] : vector<8x1xf32> to vector<1xf32>
    %853 = vector.shape_cast %852 : vector<1xf32> to vector<1x1xf32>
    %cst_307 = arith.constant 2.000000e+00 : f32
    %854 = vector.broadcast %cst_307 : f32 to vector<1x1xf32>
    %855 = arith.mulf %854, %853 : vector<1x1xf32>
    %856 = arith.subf %849, %855 : vector<1x1xf32>
    %cst_308 = arith.constant dense<0.000000e+00> : vector<8x8xf32>
    %857 = tpu.matmul %130, %131, %cst_308 {dimension_numbers = #tpu.dot_dimension_numbers<[1], [1], [0], [0], [0, 0, 1, 0], [], []>} : vector<8x16xf32>, vector<8x16xf32>, vector<8x8xf32> -> vector<8x8xf32>
    %cst_309 = arith.constant 5.000000e+00 : f32
    %858 = vector.broadcast %cst_309 : f32 to vector<8x8xf32>
    %859 = arith.mulf %857, %858 : vector<8x8xf32>
    %860 = arith.mulf %130, %131 : vector<8x16xf32>
    %cst_310 = arith.constant dense<0.000000e+00> : vector<8xf32>
    %861 = vector.multi_reduction <add>, %860, %cst_310 [1] : vector<8x16xf32> to vector<8xf32>
    %862 = vector.shape_cast %861 : vector<8xf32> to vector<8x1xf32>
    %cst_311 = arith.constant 5.000000e+00 : f32
    %863 = vector.broadcast %cst_311 : f32 to vector<8x1xf32>
    %864 = arith.mulf %862, %863 : vector<8x1xf32>
    %cst_312 = arith.constant dense<0xFF800000> : vector<8xf32>
    %865 = vector.multi_reduction <maximumf>, %859, %cst_312 [1] : vector<8x8xf32> to vector<8xf32>
    %866 = vector.shape_cast %865 : vector<8xf32> to vector<8x1xf32>
    %867 = vector.broadcast %866 : vector<8x1xf32> to vector<8x8xf32>
    %868 = arith.subf %859, %867 : vector<8x8xf32>
    %869 = math.exp %868 : vector<8x8xf32>
    %cst_313 = arith.constant dense<0.000000e+00> : vector<8xf32>
    %870 = vector.multi_reduction <add>, %869, %cst_313 [1] : vector<8x8xf32> to vector<8xf32>
    %871 = vector.shape_cast %870 : vector<8xf32> to vector<8x1xf32>
    %872 = math.log %871 : vector<8x1xf32>
    %873 = arith.addf %872, %866 : vector<8x1xf32>
    %cst_314 = arith.constant dense<0xFF800000> : vector<8xf32>
    %874 = vector.multi_reduction <maximumf>, %859, %cst_314 [0] : vector<8x8xf32> to vector<8xf32>
    %875 = vector.shape_cast %874 : vector<8xf32> to vector<1x8xf32>
    %876 = vector.broadcast %875 : vector<1x8xf32> to vector<8x8xf32>
    %877 = arith.subf %859, %876 : vector<8x8xf32>
    %878 = math.exp %877 : vector<8x8xf32>
    %cst_315 = arith.constant dense<0.000000e+00> : vector<8xf32>
    %879 = vector.multi_reduction <add>, %878, %cst_315 [0] : vector<8x8xf32> to vector<8xf32>
    %880 = vector.shape_cast %879 : vector<8xf32> to vector<1x8xf32>
    %881 = math.log %880 : vector<1x8xf32>
    %882 = arith.addf %881, %875 : vector<1x8xf32>
    %cst_316 = arith.constant dense<0.000000e+00> : vector<8xf32>
    %883 = vector.multi_reduction <add>, %873, %cst_316 [1] : vector<8x1xf32> to vector<8xf32>
    %884 = vector.shape_cast %883 : vector<8xf32> to vector<8x1xf32>
    %cst_317 = arith.constant dense<0.000000e+00> : vector<1xf32>
    %885 = vector.multi_reduction <add>, %884, %cst_317 [0] : vector<8x1xf32> to vector<1xf32>
    %886 = vector.shape_cast %885 : vector<1xf32> to vector<1x1xf32>
    %887 = arith.addf %856, %886 : vector<1x1xf32>
    %cst_318 = arith.constant dense<0.000000e+00> : vector<1xf32>
    %888 = vector.multi_reduction <add>, %882, %cst_318 [1] : vector<1x8xf32> to vector<1xf32>
    %889 = vector.shape_cast %888 : vector<1xf32> to vector<1x1xf32>
    %cst_319 = arith.constant dense<0.000000e+00> : vector<1xf32>
    %890 = vector.multi_reduction <add>, %889, %cst_319 [0] : vector<1x1xf32> to vector<1xf32>
    %891 = vector.shape_cast %890 : vector<1xf32> to vector<1x1xf32>
    %892 = arith.addf %887, %891 : vector<1x1xf32>
    %cst_320 = arith.constant dense<0.000000e+00> : vector<8xf32>
    %893 = vector.multi_reduction <add>, %864, %cst_320 [1] : vector<8x1xf32> to vector<8xf32>
    %894 = vector.shape_cast %893 : vector<8xf32> to vector<8x1xf32>
    %cst_321 = arith.constant dense<0.000000e+00> : vector<1xf32>
    %895 = vector.multi_reduction <add>, %894, %cst_321 [0] : vector<8x1xf32> to vector<1xf32>
    %896 = vector.shape_cast %895 : vector<1xf32> to vector<1x1xf32>
    %cst_322 = arith.constant 2.000000e+00 : f32
    %897 = vector.broadcast %cst_322 : f32 to vector<1x1xf32>
    %898 = arith.mulf %897, %896 : vector<1x1xf32>
    %899 = arith.subf %892, %898 : vector<1x1xf32>
    %cst_323 = arith.constant 1.250000e-02 : f32
    %900 = vector.broadcast %cst_323 : f32 to vector<1x1xf32>
    %901 = arith.mulf %900, %899 : vector<1x1xf32>
    %902 = arith.addf %253, %901 : vector<1x1xf32>
    %cst_324 = arith.constant 0.000000e+00 : f32
    %903 = vector.broadcast %cst_324 : f32 to vector<8x1xf32>
    %904 = arith.subf %903, %40 : vector<8x1xf32>
    %905 = math.exp %904 : vector<8x1xf32>
    %cst_325 = arith.constant 1.000000e+00 : f32
    %906 = vector.broadcast %cst_325 : f32 to vector<8x1xf32>
    %907 = arith.addf %906, %905 : vector<8x1xf32>
    %cst_326 = arith.constant 1.000000e+00 : f32
    %908 = vector.broadcast %cst_326 : f32 to vector<8x1xf32>
    %909 = arith.divf %908, %907 : vector<8x1xf32>
    %cst_327 = arith.constant 0.000000e+00 : f32
    %910 = vector.broadcast %cst_327 : f32 to vector<8x1xf32>
    %911 = arith.maximumf %42, %910 : vector<8x1xf32>
    %912 = math.absf %42 : vector<8x1xf32>
    %cst_328 = arith.constant 0.000000e+00 : f32
    %913 = vector.broadcast %cst_328 : f32 to vector<8x1xf32>
    %914 = arith.subf %913, %912 : vector<8x1xf32>
    %915 = math.exp %914 : vector<8x1xf32>
    %cst_329 = arith.constant 1.000000e+00 : f32
    %916 = vector.broadcast %cst_329 : f32 to vector<8x1xf32>
    %917 = arith.addf %916, %915 : vector<8x1xf32>
    %918 = math.log %917 : vector<8x1xf32>
    %919 = arith.addf %911, %918 : vector<8x1xf32>
    %cst_330 = arith.constant 5.000000e-01 : f32
    %920 = vector.broadcast %cst_330 : f32 to vector<8x1xf32>
    %921 = arith.mulf %920, %919 : vector<8x1xf32>
    %922 = arith.mulf %921, %919 : vector<8x1xf32>
    %923 = arith.addf %41, %922 : vector<8x1xf32>
    %924 = math.exp %923 : vector<8x1xf32>
    %925 = arith.mulf %909, %924 : vector<8x1xf32>
    %926 = tpu.iota {dimensions = array<i32: 1>} : vector<8x128xi32>
    %c0_i32 = arith.constant 0 : i32
    %927 = vector.broadcast %c0_i32 : i32 to vector<8x128xi32>
    %928 = arith.cmpi eq, %926, %927 : vector<8x128xi32>
    %c1_i32 = arith.constant 1 : i32
    %929 = vector.broadcast %c1_i32 : i32 to vector<8x128xi32>
    %930 = arith.cmpi eq, %926, %929 : vector<8x128xi32>
    %c2_i32 = arith.constant 2 : i32
    %931 = vector.broadcast %c2_i32 : i32 to vector<8x128xi32>
    %932 = arith.cmpi eq, %926, %931 : vector<8x128xi32>
    %c3_i32 = arith.constant 3 : i32
    %933 = vector.broadcast %c3_i32 : i32 to vector<8x128xi32>
    %934 = arith.cmpi eq, %926, %933 : vector<8x128xi32>
    %c4_i32 = arith.constant 4 : i32
    %935 = vector.broadcast %c4_i32 : i32 to vector<8x128xi32>
    %936 = arith.cmpi eq, %926, %935 : vector<8x128xi32>
    %cst_331 = arith.constant 0.000000e+00 : f32
    %937 = vector.shape_cast %925 : vector<8x1xf32> to vector<8x1xf32>
    %938 = vector.broadcast %937 : vector<8x1xf32> to vector<8x128xf32>
    %939 = vector.broadcast %cst_331 : f32 to vector<8x128xf32>
    %940 = arith.select %936, %938, %939 : vector<8x128xi1>, vector<8x128xf32>
    %941 = vector.shape_cast %909 : vector<8x1xf32> to vector<8x1xf32>
    %942 = vector.broadcast %941 : vector<8x1xf32> to vector<8x128xf32>
    %943 = arith.select %934, %942, %940 : vector<8x128xi1>, vector<8x128xf32>
    %944 = vector.shape_cast %42 : vector<8x1xf32> to vector<8x1xf32>
    %945 = vector.broadcast %944 : vector<8x1xf32> to vector<8x128xf32>
    %946 = arith.select %932, %945, %943 : vector<8x128xi1>, vector<8x128xf32>
    %947 = vector.shape_cast %41 : vector<8x1xf32> to vector<8x1xf32>
    %948 = vector.broadcast %947 : vector<8x1xf32> to vector<8x128xf32>
    %949 = arith.select %930, %948, %946 : vector<8x128xi1>, vector<8x128xf32>
    %950 = vector.shape_cast %40 : vector<8x1xf32> to vector<8x1xf32>
    %951 = vector.broadcast %950 : vector<8x1xf32> to vector<8x128xf32>
    %952 = arith.select %928, %951, %949 : vector<8x128xi1>, vector<8x128xf32>
    %c0_332 = arith.constant 0 : index
    %c0_333 = arith.constant 0 : index
    %953 = vector.load %arg19[%c0_332, %c0_333] : memref<8x128xf32, #tpu.memory_space<vmem>>, vector<8x128xf32>
    tpu.vector_store %arg19[%c0_332, %c0_333], %952 {strides = array<i32>} : memref<8x128xf32, #tpu.memory_space<vmem>>, vector<8x128xf32>,
    %c0_334 = arith.constant 0 : index
    %c0_335 = arith.constant 0 : index
    %954 = vector.load %arg20[%c0_334, %c0_335] : memref<1x1xf32, #tpu.memory_space<vmem>>, vector<1x1xf32>
    tpu.vector_store %arg20[%c0_334, %c0_335], %902 {strides = array<i32>} : memref<1x1xf32, #tpu.memory_space<vmem>>, vector<1x1xf32>,
    return
  }
}

</mosaic_0001>

<llo_original>
// kernel: msmodel_forward_fused.1
$region0: #{msmodel_forward_fused.1}
  #allocation0 [shape = 'u32[]', space=smem, size = 0x4, offset = 0x4, fixed_abs, tag = 'smem constant byte address 0x4 - core index']
  #allocation1 [shape = 'u32[144,128]{1,0:T(1,128)}', space=vmem, size = 0x12000, scoped, tag = 'internal scratch']
  %s0 = inlined_call_operand.vmem [shape: f32[8,64], index: 0, kind: input, shape index: {}]
  %s1 = inlined_call_operand.vmem [shape: f32[8,1], index: 1, kind: input, shape index: {}]
  %s2 = inlined_call_operand.vmem [shape: f32[64,224], index: 2, kind: input, shape index: {}]
  %s3 = inlined_call_operand.vmem [shape: f32[1,224], index: 3, kind: input, shape index: {}]
  %s4 = inlined_call_operand.vmem [shape: f32[224,112], index: 4, kind: input, shape index: {}]
  %s5 = inlined_call_operand.vmem [shape: f32[1,112], index: 5, kind: input, shape index: {}]
  %s6 = inlined_call_operand.vmem [shape: f32[112,56], index: 6, kind: input, shape index: {}]
  %s7 = inlined_call_operand.vmem [shape: f32[1,56], index: 7, kind: input, shape index: {}]
  %s8 = inlined_call_operand.vmem [shape: f32[56,28], index: 8, kind: input, shape index: {}]
  %s9 = inlined_call_operand.vmem [shape: f32[1,28], index: 9, kind: input, shape index: {}]
  %s10 = inlined_call_operand.vmem [shape: f32[28,14], index: 10, kind: input, shape index: {}]
  %s11 = inlined_call_operand.vmem [shape: f32[1,14], index: 11, kind: input, shape index: {}]
  %s12 = inlined_call_operand.vmem [shape: f32[14,3], index: 12, kind: input, shape index: {}]
  %s13 = inlined_call_operand.vmem [shape: f32[1,3], index: 13, kind: input, shape index: {}]
  %s14 = inlined_call_operand.vmem [shape: f32[112,192], index: 14, kind: input, shape index: {}]
  %s15 = inlined_call_operand.vmem [shape: f32[1,192], index: 15, kind: input, shape index: {}]
  %s16 = inlined_call_operand.vmem [shape: f32[192,64], index: 16, kind: input, shape index: {}]
  %s17 = inlined_call_operand.vmem [shape: f32[1,64], index: 17, kind: input, shape index: {}]
  %s18 = inlined_call_operand.vmem [shape: f32[1,64], index: 18, kind: input, shape index: {}]
  %s19 = inlined_call_operand.vmem [shape: f32[8,128], index: 19, kind: output, shape index: {0}]
  %s20 = inlined_call_operand.hbm [shape: f32[1,1], index: 20, kind: output, shape index: {1}]
  %21 = xla_tuple %s19, %s20
  %s22 = sld [smem:[#allocation0]]
  $region94: #{msmodel_forward_fused.1} parent=0
    _
  %s24 = ssub.s32 1, %s22
  %s25 = scalar_select 0, %s24, %s22
  $region1: #{msmodel_forward_fused.1} parent=0
    #allocation2 [shape = 'u8[512]{0}', space=vmem, size = 0x400, scoped, tag = 'output window, operand 1, single buffered']
    #allocation3 [shape = 's32[1]{0}', space=sflag, size = 0x4, scoped, tag = 'scoped memory for msmodel_forward_fused.1']
    %26 = vsyncpa [#allocation3], 0
    // Predicated region
    $region2: #{msmodel_forward_fused.1} parent=1 // pred_check
      _
    $region3: #{msmodel_forward_fused.1} parent=1 // pred_check_branch
      %28 = sbr.rel (0) target = $region5
    $region4: #{msmodel_forward_fused.1} parent=1 // pred_region
      _
    $region5: #{msmodel_forward_fused.1} parent=1 // pred_fallthru
      _
    // Predicated region
    $region6: #{msmodel_forward_fused.1} parent=1 // pred_check
      _
    $region7: #{msmodel_forward_fused.1} parent=1 // pred_check_branch
      %30 = sbr.rel (0) target = $region9
    $region8: #{msmodel_forward_fused.1} parent=1 // pred_region
      _
    $region9: #{msmodel_forward_fused.1} parent=1 // pred_fallthru
      _
    // Predicated region
    $region10: #{msmodel_forward_fused.1} parent=1 // pred_check
      _
    $region11: #{msmodel_forward_fused.1} parent=1 // pred_check_branch
      %32 = sbr.rel (0) target = $region13
    $region12: #{msmodel_forward_fused.1} parent=1 // pred_region
      _
    $region13: #{msmodel_forward_fused.1} parent=1 // pred_fallthru
      _
    // Predicated region
    $region14: #{msmodel_forward_fused.1} parent=1 // pred_check
      _
    $region15: #{msmodel_forward_fused.1} parent=1 // pred_check_branch
      %34 = sbr.rel (0) target = $region17
    $region16: #{msmodel_forward_fused.1} parent=1 // pred_region
      _
    $region17: #{msmodel_forward_fused.1} parent=1 // pred_fallthru
      _
    // Predicated region
    $region18: #{msmodel_forward_fused.1} parent=1 // pred_check
      _
    $region19: #{msmodel_forward_fused.1} parent=1 // pred_check_branch
      %36 = sbr.rel (0) target = $region21
    $region20: #{msmodel_forward_fused.1} parent=1 // pred_region
      _
    $region21: #{msmodel_forward_fused.1} parent=1 // pred_fallthru
      _
    // Predicated region
    $region22: #{msmodel_forward_fused.1} parent=1 // pred_check
      _
    $region23: #{msmodel_forward_fused.1} parent=1 // pred_check_branch
      %38 = sbr.rel (0) target = $region25
    $region24: #{msmodel_forward_fused.1} parent=1 // pred_region
      _
    $region25: #{msmodel_forward_fused.1} parent=1 // pred_fallthru
      _
    // Predicated region
    $region26: #{msmodel_forward_fused.1} parent=1 // pred_check
      _
    $region27: #{msmodel_forward_fused.1} parent=1 // pred_check_branch
      %40 = sbr.rel (0) target = $region29
    $region28: #{msmodel_forward_fused.1} parent=1 // pred_region
      _
    $region29: #{msmodel_forward_fused.1} parent=1 // pred_fallthru
      _
    // Predicated region
    $region30: #{msmodel_forward_fused.1} parent=1 // pred_check
      _
    $region31: #{msmodel_forward_fused.1} parent=1 // pred_check_branch
      %42 = sbr.rel (0) target = $region33
    $region32: #{msmodel_forward_fused.1} parent=1 // pred_region
      _
    $region33: #{msmodel_forward_fused.1} parent=1 // pred_fallthru
      _
    // Predicated region
    $region34: #{msmodel_forward_fused.1} parent=1 // pred_check
      _
    $region35: #{msmodel_forward_fused.1} parent=1 // pred_check_branch
      %44 = sbr.rel (0) target = $region37
    $region36: #{msmodel_forward_fused.1} parent=1 // pred_region
      _
    $region37: #{msmodel_forward_fused.1} parent=1 // pred_fallthru
      _
    // Predicated region
    $region38: #{msmodel_forward_fused.1} parent=1 // pred_check
      _
    $region39: #{msmodel_forward_fused.1} parent=1 // pred_check_branch
      %46 = sbr.rel (0) target = $region41
    $region40: #{msmodel_forward_fused.1} parent=1 // pred_region
      _
    $region41: #{msmodel_forward_fused.1} parent=1 // pred_fallthru
      _
    // Predicated region
    $region42: #{msmodel_forward_fused.1} parent=1 // pred_check
      _
    $region43: #{msmodel_forward_fused.1} parent=1 // pred_check_branch
      %48 = sbr.rel (0) target = $region45
    $region44: #{msmodel_forward_fused.1} parent=1 // pred_region
      _
    $region45: #{msmodel_forward_fused.1} parent=1 // pred_fallthru
      _
    // Predicated region
    $region46: #{msmodel_forward_fused.1} parent=1 // pred_check
      _
    $region47: #{msmodel_forward_fused.1} parent=1 // pred_check_branch
      %50 = sbr.rel (0) target = $region49
    $region48: #{msmodel_forward_fused.1} parent=1 // pred_region
      _
    $region49: #{msmodel_forward_fused.1} parent=1 // pred_fallthru
      _
    // Predicated region
    $region50: #{msmodel_forward_fused.1} parent=1 // pred_check
      _
    $region51: #{msmodel_forward_fused.1} parent=1 // pred_check_branch
      %52 = sbr.rel (0) target = $region53
    $region52: #{msmodel_forward_fused.1} parent=1 // pred_region
      _
    $region53: #{msmodel_forward_fused.1} parent=1 // pred_fallthru
      _
    // Predicated region
    $region54: #{msmodel_forward_fused.1} parent=1 // pred_check
      _
    $region55: #{msmodel_forward_fused.1} parent=1 // pred_check_branch
      %54 = sbr.rel (0) target = $region57
    $region56: #{msmodel_forward_fused.1} parent=1 // pred_region
      _
    $region57: #{msmodel_forward_fused.1} parent=1 // pred_fallthru
      _
    // Predicated region
    $region58: #{msmodel_forward_fused.1} parent=1 // pred_check
      _
    $region59: #{msmodel_forward_fused.1} parent=1 // pred_check_branch
      %56 = sbr.rel (0) target = $region61
    $region60: #{msmodel_forward_fused.1} parent=1 // pred_region
      _
    $region61: #{msmodel_forward_fused.1} parent=1 // pred_fallthru
      _
    // Predicated region
    $region62: #{msmodel_forward_fused.1} parent=1 // pred_check
      _
    $region63: #{msmodel_forward_fused.1} parent=1 // pred_check_branch
      %58 = sbr.rel (0) target = $region65
    $region64: #{msmodel_forward_fused.1} parent=1 // pred_region
      _
    $region65: #{msmodel_forward_fused.1} parent=1 // pred_fallthru
      _
    // Predicated region
    $region66: #{msmodel_forward_fused.1} parent=1 // pred_check
      _
    $region67: #{msmodel_forward_fused.1} parent=1 // pred_check_branch
      %60 = sbr.rel (0) target = $region69
    $region68: #{msmodel_forward_fused.1} parent=1 // pred_region
      _
    $region69: #{msmodel_forward_fused.1} parent=1 // pred_fallthru
      _
    // Predicated region
    $region70: #{msmodel_forward_fused.1} parent=1 // pred_check
      _
    $region71: #{msmodel_forward_fused.1} parent=1 // pred_check_branch
      %62 = sbr.rel (0) target = $region73
    $region72: #{msmodel_forward_fused.1} parent=1 // pred_region
      _
    $region73: #{msmodel_forward_fused.1} parent=1 // pred_fallthru
      _
    // Predicated region
    $region74: #{msmodel_forward_fused.1} parent=1 // pred_check
      _
    $region75: #{msmodel_forward_fused.1} parent=1 // pred_check_branch
      %64 = sbr.rel (0) target = $region77
    $region76: #{msmodel_forward_fused.1} parent=1 // pred_region
      _
    $region77: #{msmodel_forward_fused.1} parent=1 // pred_fallthru
      _
    %v65 = vld [vmem:[%s0] sm:$0xff]
    %v66 = vld [vmem:[%s2] sm:$0xff]
    %v67 = vld [vmem:[%s2 + $0x8] sm:$0xff]
    %v68 = vld [vmem:[%s2 + $0x10] sm:$0xff]
    %v69 = vld [vmem:[%s2 + $0x18] sm:$0xff]
    %v70 = vld [vmem:[%s2 + $0x20] sm:$0xff]
    %v71 = vld [vmem:[%s2 + $0x28] sm:$0xff]
    %v72 = vld [vmem:[%s2 + $0x30] sm:$0xff]
    %v73 = vld [vmem:[%s2 + $0x38] sm:$0xff]
    %v74 = vld [vmem:[%s2 + $0x40] sm:$0xff]
    %v75 = vld [vmem:[%s2 + $0x48] sm:$0xff]
    %v76 = vld [vmem:[%s2 + $0x50] sm:$0xff]
    %v77 = vld [vmem:[%s2 + $0x58] sm:$0xff]
    %v78 = vld [vmem:[%s2 + $0x60] sm:$0xff]
    %v79 = vld [vmem:[%s2 + $0x68] sm:$0xff]
    %v80 = vld [vmem:[%s2 + $0x70] sm:$0xff]
    %v81 = vld [vmem:[%s2 + $0x78] sm:$0xff]
    %v82 = vld [vmem:[%s3] sm:$0x3]
    %v84 = vlaneseq
    %v85 = vshrl.u32 %v84, 7
    %v86 = vsub.s32 0, %v85
    %v87 = vrot.slane %v82, %v86
    %v88 = vlaneseq
    %v89 = vshrl.u32 %v88, 7
    %v90 = vsub.s32 1, %v89
    %v91 = vrot.slane %v82, %v90
    %vm94 = vcmask 523264
    %v96 = vsel %vm94, %v65, 0
    %98 = vmatprep.subr.mxu0 %v67
    %99 = vmatpush1.msra.mxu0 %v66
    %100 = vmatprep.subr.mxu0 %v69
    %101 = vmatpush1.msra.mxu0 %v68
    %102 = vmatprep.subr.mxu0 %v71
    %103 = vmatpush1.msra.mxu0 %v70
    %104 = vmatprep.subr.mxu0 %v73
    %105 = vmatpush1.msra.mxu0 %v72
    %106 = vmatprep.subr.mxu0 %v75
    %107 = vmatpush1.msra.mxu0 %v74
    %108 = vmatprep.subr.mxu0 %v77
    %109 = vmatpush1.msra.mxu0 %v76
    %110 = vmatprep.subr.mxu0 %v79
    %111 = vmatpush1.msra.mxu0 %v78
    %112 = vmatprep.subr.mxu0 %v81
    %113 = vmatpush1.msra.mxu0 %v80
    %114 = vmatprep.subr.mxu0 0.0
    %115 = vmatpush1.msra.mxu0 0.0
    %116 = vmatprep.subr.mxu0 0.0
    %117 = vmatpush1.msra.mxu0 0.0
    %118 = vmatprep.subr.mxu0 0.0
    %119 = vmatpush1.msra.mxu0 0.0
    %120 = vmatprep.subr.mxu0 0.0
    %121 = vmatpush1.msra.mxu0 0.0
    %122 = vmatprep.subr.mxu0 0.0
    %123 = vmatpush1.msra.mxu0 0.0
    %124 = vmatprep.subr.mxu0 0.0
    %125 = vmatpush1.msra.mxu0 0.0
    %126 = vmatprep.subr.mxu0 0.0
    %127 = vmatpush1.msra.mxu0 0.0
    %128 = vmatprep.subr.mxu0 0.0
    %129 = vmatpush1.msra.mxu0 0.0
    %130 = vmatprep.subr.mxu0 0.0
    %131 = vmatpush1.msra.mxu0 0.0
    %132 = vmatprep.subr.mxu0 0.0
    %133 = vmatpush1.msra.mxu0 0.0
    %134 = vmatprep.subr.mxu0 0.0
    %135 = vmatpush1.msra.mxu0 0.0
    %136 = vmatprep.subr.mxu0 0.0
    %137 = vmatpush1.msra.mxu0 0.0
    %138 = vmatprep.subr.mxu0 0.0
    %139 = vmatpush1.msra.mxu0 0.0
    %140 = vmatprep.subr.mxu0 0.0
    %141 = vmatpush1.msra.mxu0 0.0
    %142 = vmatprep.subr.mxu0 0.0
    %143 = vmatpush1.msra.mxu0 0.0
    %144 = vmatprep.subr.mxu0 0.0
    %145 = vmatpush1.msra.mxu0 0.0
    %146 = vmatprep.subr.mxu0 0.0
    %147 = vmatpush1.msra.mxu0 0.0
    %148 = vmatprep.subr.mxu0 0.0
    %149 = vmatpush1.msra.mxu0 0.0
    %150 = vmatprep.subr.mxu0 0.0
    %151 = vmatpush1.msra.mxu0 0.0
    %152 = vmatprep.subr.mxu0 0.0
    %153 = vmatpush1.msra.mxu0 0.0
    %154 = vmatprep.subr.mxu0 0.0
    %155 = vmatpush1.msra.mxu0 0.0
    %156 = vmatprep.subr.mxu0 0.0
    %157 = vmatpush1.msra.mxu0 0.0
    %158 = vmatprep.subr.mxu0 0.0
    %159 = vmatpush1.msra.mxu0 0.0
    %160 = vmatprep.subr.mxu0 0.0
    %161 = vmatpush1.msra.mxu0 0.0
    %162 = vmatprep.mubr.f32.mxu0 0.0
    %163 = vmatmul.mubr.f32.gmra.mrb[0].mxu0 %v96
    %v164 = vpop.f32.mrb[0].mxu0
    %v165 = vadd.f32 %v87, %v164
    %v166 = vpop.f32.mrb[0].mxu0
    %v167 = vadd.f32 %v91, %v166
    %168 = vdwg.mxu0
    %v169 = vmax.f32 %v165, 0.0
    %v170 = vmax.f32 %v167, 0.0
    %v171 = vld [vmem:[%s4] sm:$0xff]
    %v172 = vld [vmem:[%s4 + $0x8] sm:$0xff]
    %v173 = vld [vmem:[%s4 + $0x10] sm:$0xff]
    %v174 = vld [vmem:[%s4 + $0x18] sm:$0xff]
    %v175 = vld [vmem:[%s4 + $0x20] sm:$0xff]
    %v176 = vld [vmem:[%s4 + $0x28] sm:$0xff]
    %v177 = vld [vmem:[%s4 + $0x30] sm:$0xff]
    %v178 = vld [vmem:[%s4 + $0x38] sm:$0xff]
    %v179 = vld [vmem:[%s4 + $0x40] sm:$0xff]
    %v180 = vld [vmem:[%s4 + $0x48] sm:$0xff]
    %v181 = vld [vmem:[%s4 + $0x50] sm:$0xff]
    %v182 = vld [vmem:[%s4 + $0x58] sm:$0xff]
    %v183 = vld [vmem:[%s4 + $0x60] sm:$0xff]
    %v184 = vld [vmem:[%s4 + $0x68] sm:$0xff]
    %v185 = vld [vmem:[%s4 + $0x70] sm:$0xff]
    %v186 = vld [vmem:[%s4 + $0x78] sm:$0xff]
    %v187 = vld [vmem:[%s4 + $0x80] sm:$0xff]
    %v188 = vld [vmem:[%s4 + $0x88] sm:$0xff]
    %v189 = vld [vmem:[%s4 + $0x90] sm:$0xff]
    %v190 = vld [vmem:[%s4 + $0x98] sm:$0xff]
    %v191 = vld [vmem:[%s4 + $0xa0] sm:$0xff]
    %v192 = vld [vmem:[%s4 + $0xa8] sm:$0xff]
    %v193 = vld [vmem:[%s4 + $0xb0] sm:$0xff]
    %v194 = vld [vmem:[%s4 + $0xb8] sm:$0xff]
    %v195 = vld [vmem:[%s4 + $0xc0] sm:$0xff]
    %v196 = vld [vmem:[%s4 + $0xc8] sm:$0xff]
    %v197 = vld [vmem:[%s4 + $0xd0] sm:$0xff]
    %v198 = vld [vmem:[%s4 + $0xd8] sm:$0xff]
    %v199 = vld [vmem:[%s5] sm:$0x1]
    %v201 = vlaneseq
    %v202 = vshrl.u32 %v201, 7
    %v203 = vsub.s32 0, %v202
    %v204 = vrot.slane %v199, %v203
    %vm206 = vcmask 785408
    %v208 = vsel %vm206, %v170, 0
    %210 = vmatprep.subr.mxu0 0.0
    %211 = vmatpush1.msra.mxu0 %v171
    %212 = vmatprep.subr.mxu0 0.0
    %213 = vmatpush1.msra.mxu0 %v172
    %214 = vmatprep.subr.mxu0 0.0
    %215 = vmatpush1.msra.mxu0 %v173
    %216 = vmatprep.subr.mxu0 0.0
    %217 = vmatpush1.msra.mxu0 %v174
    %218 = vmatprep.subr.mxu0 0.0
    %219 = vmatpush1.msra.mxu0 %v175
    %220 = vmatprep.subr.mxu0 0.0
    %221 = vmatpush1.msra.mxu0 %v176
    %222 = vmatprep.subr.mxu0 0.0
    %223 = vmatpush1.msra.mxu0 %v177
    %224 = vmatprep.subr.mxu0 0.0
    %225 = vmatpush1.msra.mxu0 %v178
    %226 = vmatprep.subr.mxu0 0.0
    %227 = vmatpush1.msra.mxu0 %v179
    %228 = vmatprep.subr.mxu0 0.0
    %229 = vmatpush1.msra.mxu0 %v180
    %230 = vmatprep.subr.mxu0 0.0
    %231 = vmatpush1.msra.mxu0 %v181
    %232 = vmatprep.subr.mxu0 0.0
    %233 = vmatpush1.msra.mxu0 %v182
    %234 = vmatprep.subr.mxu0 0.0
    %235 = vmatpush1.msra.mxu0 %v183
    %236 = vmatprep.subr.mxu0 0.0
    %237 = vmatpush1.msra.mxu0 %v184
    %238 = vmatprep.subr.mxu0 0.0
    %239 = vmatpush1.msra.mxu0 %v185
    %240 = vmatprep.subr.mxu0 0.0
    %241 = vmatpush1.msra.mxu0 %v186
    %242 = vmatprep.subr.mxu0 0.0
    %243 = vmatpush1.msra.mxu0 %v187
    %244 = vmatprep.subr.mxu0 0.0
    %245 = vmatpush1.msra.mxu0 %v188
    %246 = vmatprep.subr.mxu0 0.0
    %247 = vmatpush1.msra.mxu0 %v189
    %248 = vmatprep.subr.mxu0 0.0
    %249 = vmatpush1.msra.mxu0 %v190
    %250 = vmatprep.subr.mxu0 0.0
    %251 = vmatpush1.msra.mxu0 %v191
    %252 = vmatprep.subr.mxu0 0.0
    %253 = vmatpush1.msra.mxu0 %v192
    %254 = vmatprep.subr.mxu0 0.0
    %255 = vmatpush1.msra.mxu0 %v193
    %256 = vmatprep.subr.mxu0 0.0
    %257 = vmatpush1.msra.mxu0 %v194
    %258 = vmatprep.subr.mxu0 0.0
    %259 = vmatpush1.msra.mxu0 %v195
    %260 = vmatprep.subr.mxu0 0.0
    %261 = vmatpush1.msra.mxu0 %v196
    %262 = vmatprep.subr.mxu0 0.0
    %263 = vmatpush1.msra.mxu0 %v197
    %264 = vmatprep.subr.mxu0 0.0
    %265 = vmatpush1.msra.mxu0 %v198
    %266 = vmatprep.subr.mxu0 0.0
    %267 = vmatpush1.msra.mxu0 0.0
    %268 = vmatprep.subr.mxu0 0.0
    %269 = vmatpush1.msra.mxu0 0.0
    %270 = vmatprep.subr.mxu0 0.0
    %271 = vmatpush1.msra.mxu0 0.0
    %272 = vmatprep.subr.mxu0 0.0
    %273 = vmatpush1.msra.mxu0 0.0
    %274 = vmatprep.mubr.f32.mxu0 %v208
    %275 = vmatmul.mubr.f32.gmra.mrb[0].mxu0 %v169
    %v276 = vpop.f32.mrb[0].mxu0
    %v277 = vadd.f32 %v204, %v276
    %v278 = vpop.f32.mrb[0].mxu0
    %279 = vdwg.mxu0
    %v280 = vld [vmem:[%s6] sm:$0xff]
    %v281 = vld [vmem:[%s6 + $0x8] sm:$0xff]
    %v282 = vld [vmem:[%s6 + $0x10] sm:$0xff]
    %v283 = vld [vmem:[%s6 + $0x18] sm:$0xff]
    %v284 = vld [vmem:[%s6 + $0x20] sm:$0xff]
    %v285 = vld [vmem:[%s6 + $0x28] sm:$0xff]
    %v286 = vld [vmem:[%s6 + $0x30] sm:$0xff]
    %v287 = vld [vmem:[%s6 + $0x38] sm:$0xff]
    %v288 = vld [vmem:[%s6 + $0x40] sm:$0xff]
    %v289 = vld [vmem:[%s6 + $0x48] sm:$0xff]
    %v290 = vld [vmem:[%s6 + $0x50] sm:$0xff]
    %v291 = vld [vmem:[%s6 + $0x58] sm:$0xff]
    %v292 = vld [vmem:[%s6 + $0x60] sm:$0xff]
    %v293 = vld [vmem:[%s6 + $0x68] sm:$0xff]
    %v294 = vld [vmem:[%s7] sm:$0x1]
    %v296 = vlaneseq
    %v297 = vshrl.u32 %v296, 7
    %v298 = vsub.s32 0, %v297
    %v299 = vrot.slane %v294, %v298
    %vm301 = vcmask 916480
    %v303 = vsel %vm301, %v277, 0
    %305 = vmatprep.subr.mxu0 0.0
    %306 = vmatpush1.msra.mxu0 %v280
    %307 = vmatprep.subr.mxu0 0.0
    %308 = vmatpush1.msra.mxu0 %v281
    %309 = vmatprep.subr.mxu0 0.0
    %310 = vmatpush1.msra.mxu0 %v282
    %311 = vmatprep.subr.mxu0 0.0
    %312 = vmatpush1.msra.mxu0 %v283
    %313 = vmatprep.subr.mxu0 0.0
    %314 = vmatpush1.msra.mxu0 %v284
    %315 = vmatprep.subr.mxu0 0.0
    %316 = vmatpush1.msra.mxu0 %v285
    %317 = vmatprep.subr.mxu0 0.0
    %318 = vmatpush1.msra.mxu0 %v286
    %319 = vmatprep.subr.mxu0 0.0
    %320 = vmatpush1.msra.mxu0 %v287
    %321 = vmatprep.subr.mxu0 0.0
    %322 = vmatpush1.msra.mxu0 %v288
    %323 = vmatprep.subr.mxu0 0.0
    %324 = vmatpush1.msra.mxu0 %v289
    %325 = vmatprep.subr.mxu0 0.0
    %326 = vmatpush1.msra.mxu0 %v290
    %327 = vmatprep.subr.mxu0 0.0
    %328 = vmatpush1.msra.mxu0 %v291
    %329 = vmatprep.subr.mxu0 0.0
    %330 = vmatpush1.msra.mxu0 %v292
    %331 = vmatprep.subr.mxu0 0.0
    %332 = vmatpush1.msra.mxu0 %v293
    %333 = vmatprep.subr.mxu0 0.0
    %334 = vmatpush1.msra.mxu0 0.0
    %335 = vmatprep.subr.mxu0 0.0
    %336 = vmatpush1.msra.mxu0 0.0
    %337 = vmatprep.subr.mxu0 0.0
    %338 = vmatpush1.msra.mxu0 0.0
    %339 = vmatprep.subr.mxu0 0.0
    %340 = vmatpush1.msra.mxu0 0.0
    %341 = vmatprep.subr.mxu0 0.0
    %342 = vmatpush1.msra.mxu0 0.0
    %343 = vmatprep.subr.mxu0 0.0
    %344 = vmatpush1.msra.mxu0 0.0
    %345 = vmatprep.subr.mxu0 0.0
    %346 = vmatpush1.msra.mxu0 0.0
    %347 = vmatprep.subr.mxu0 0.0
    %348 = vmatpush1.msra.mxu0 0.0
    %349 = vmatprep.subr.mxu0 0.0
    %350 = vmatpush1.msra.mxu0 0.0
    %351 = vmatprep.subr.mxu0 0.0
    %352 = vmatpush1.msra.mxu0 0.0
    %353 = vmatprep.subr.mxu0 0.0
    %354 = vmatpush1.msra.mxu0 0.0
    %355 = vmatprep.subr.mxu0 0.0
    %356 = vmatpush1.msra.mxu0 0.0
    %357 = vmatprep.subr.mxu0 0.0
    %358 = vmatpush1.msra.mxu0 0.0
    %359 = vmatprep.subr.mxu0 0.0
    %360 = vmatpush1.msra.mxu0 0.0
    %361 = vmatprep.subr.mxu0 0.0
    %362 = vmatpush1.msra.mxu0 0.0
    %363 = vmatprep.subr.mxu0 0.0
    %364 = vmatpush1.msra.mxu0 0.0
    %365 = vmatprep.subr.mxu0 0.0
    %366 = vmatpush1.msra.mxu0 0.0
    %367 = vmatprep.subr.mxu0 0.0
    %368 = vmatpush1.msra.mxu0 0.0
    %369 = vmatprep.mubr.f32.mxu0 0.0
    %370 = vmatmul.mubr.f32.gmra.mrb[0].mxu0 %v303
    %v371 = vpop.f32.mrb[0].mxu0
    %v372 = vadd.f32 %v299, %v371
    %v373 = vpop.f32.mrb[0].mxu0
    %374 = vdwg.mxu0
    %v375 = vmax.f32 %v372, 0.0
    %v376 = vld [vmem:[%s8] sm:$0xff]
    %v377 = vld [vmem:[%s8 + $0x8] sm:$0xff]
    %v378 = vld [vmem:[%s8 + $0x10] sm:$0xff]
    %v379 = vld [vmem:[%s8 + $0x18] sm:$0xff]
    %v380 = vld [vmem:[%s8 + $0x20] sm:$0xff]
    %v381 = vld [vmem:[%s8 + $0x28] sm:$0xff]
    %v382 = vld [vmem:[%s8 + $0x30] sm:$0xff]
    %v383 = vld [vmem:[%s9] sm:$0x1]
    %v385 = vlaneseq
    %v386 = vshrl.u32 %v385, 7
    %v387 = vsub.s32 0, %v386
    %v388 = vrot.slane %v383, %v387
    %vm390 = vcmask 457728
    %v392 = vsel %vm390, %v375, 0
    %394 = vmatprep.subr.mxu0 0.0
    %395 = vmatpush1.msra.mxu0 %v376
    %396 = vmatprep.subr.mxu0 0.0
    %397 = vmatpush1.msra.mxu0 %v377
    %398 = vmatprep.subr.mxu0 0.0
    %399 = vmatpush1.msra.mxu0 %v378
    %400 = vmatprep.subr.mxu0 0.0
    %401 = vmatpush1.msra.mxu0 %v379
    %402 = vmatprep.subr.mxu0 0.0
    %403 = vmatpush1.msra.mxu0 %v380
    %404 = vmatprep.subr.mxu0 0.0
    %405 = vmatpush1.msra.mxu0 %v381
    %406 = vmatprep.subr.mxu0 0.0
    %407 = vmatpush1.msra.mxu0 %v382
    %408 = vmatprep.subr.mxu0 0.0
    %409 = vmatpush1.msra.mxu0 0.0
    %410 = vmatprep.subr.mxu0 0.0
    %411 = vmatpush1.msra.mxu0 0.0
    %412 = vmatprep.subr.mxu0 0.0
    %413 = vmatpush1.msra.mxu0 0.0
    %414 = vmatprep.subr.mxu0 0.0
    %415 = vmatpush1.msra.mxu0 0.0
    %416 = vmatprep.subr.mxu0 0.0
    %417 = vmatpush1.msra.mxu0 0.0
    %418 = vmatprep.subr.mxu0 0.0
    %419 = vmatpush1.msra.mxu0 0.0
    %420 = vmatprep.subr.mxu0 0.0
    %421 = vmatpush1.msra.mxu0 0.0
    %422 = vmatprep.subr.mxu0 0.0
    %423 = vmatpush1.msra.mxu0 0.0
    %424 = vmatprep.subr.mxu0 0.0
    %425 = vmatpush1.msra.mxu0 0.0
    %426 = vmatprep.subr.mxu0 0.0
    %427 = vmatpush1.msra.mxu0 0.0
    %428 = vmatprep.subr.mxu0 0.0
    %429 = vmatpush1.msra.mxu0 0.0
    %430 = vmatprep.subr.mxu0 0.0
    %431 = vmatpush1.msra.mxu0 0.0
    %432 = vmatprep.subr.mxu0 0.0
    %433 = vmatpush1.msra.mxu0 0.0
    %434 = vmatprep.subr.mxu0 0.0
    %435 = vmatpush1.msra.mxu0 0.0
    %436 = vmatprep.subr.mxu0 0.0
    %437 = vmatpush1.msra.mxu0 0.0
    %438 = vmatprep.subr.mxu0 0.0
    %439 = vmatpush1.msra.mxu0 0.0
    %440 = vmatprep.subr.mxu0 0.0
    %441 = vmatpush1.msra.mxu0 0.0
    %442 = vmatprep.subr.mxu0 0.0
    %443 = vmatpush1.msra.mxu0 0.0
    %444 = vmatprep.subr.mxu0 0.0
    %445 = vmatpush1.msra.mxu0 0.0
    %446 = vmatprep.subr.mxu0 0.0
    %447 = vmatpush1.msra.mxu0 0.0
    %448 = vmatprep.subr.mxu0 0.0
    %449 = vmatpush1.msra.mxu0 0.0
    %450 = vmatprep.subr.mxu0 0.0
    %451 = vmatpush1.msra.mxu0 0.0
    %452 = vmatprep.subr.mxu0 0.0
    %453 = vmatpush1.msra.mxu0 0.0
    %454 = vmatprep.subr.mxu0 0.0
    %455 = vmatpush1.msra.mxu0 0.0
    %456 = vmatprep.subr.mxu0 0.0
    %457 = vmatpush1.msra.mxu0 0.0
    %458 = vmatprep.mubr.f32.mxu0 0.0
    %459 = vmatmul.mubr.f32.gmra.mrb[0].mxu0 %v392
    %v460 = vpop.f32.mrb[0].mxu0
    %v461 = vadd.f32 %v388, %v460
    %v462 = vpop.f32.mrb[0].mxu0
    %463 = vdwg.mxu0
    %v464 = vmax.f32 %v461, 0.0
    %v465 = vld [vmem:[%s10] sm:$0xff]
    %v466 = vld [vmem:[%s10 + $0x8] sm:$0xff]
    %v467 = vld [vmem:[%s10 + $0x10] sm:$0xff]
    %v468 = vld [vmem:[%s10 + $0x18] sm:$0xf]
    %v469 = vld [vmem:[%s11] sm:$0x1]
    %v471 = vlaneseq
    %v472 = vshrl.u32 %v471, 7
    %v473 = vsub.s32 0, %v472
    %v474 = vrot.slane %v469, %v473
    %vm476 = vcmask 228352
    %v478 = vsel %vm476, %v464, 0
    %vm480 = vcmask 1043456
    %v482 = vsel %vm480, %v468, 0
    %484 = vmatprep.subr.mxu0 0.0
    %485 = vmatpush1.msra.mxu0 %v465
    %486 = vmatprep.subr.mxu0 0.0
    %487 = vmatpush1.msra.mxu0 %v466
    %488 = vmatprep.subr.mxu0 0.0
    %489 = vmatpush1.msra.mxu0 %v467
    %490 = vmatprep.subr.mxu0 0.0
    %491 = vmatpush1.msra.mxu0 %v482
    %492 = vmatprep.subr.mxu0 0.0
    %493 = vmatpush1.msra.mxu0 0.0
    %494 = vmatprep.subr.mxu0 0.0
    %495 = vmatpush1.msra.mxu0 0.0
    %496 = vmatprep.subr.mxu0 0.0
    %497 = vmatpush1.msra.mxu0 0.0
    %498 = vmatprep.subr.mxu0 0.0
    %499 = vmatpush1.msra.mxu0 0.0
    %500 = vmatprep.subr.mxu0 0.0
    %501 = vmatpush1.msra.mxu0 0.0
    %502 = vmatprep.subr.mxu0 0.0
    %503 = vmatpush1.msra.mxu0 0.0
    %504 = vmatprep.subr.mxu0 0.0
    %505 = vmatpush1.msra.mxu0 0.0
    %506 = vmatprep.subr.mxu0 0.0
    %507 = vmatpush1.msra.mxu0 0.0
    %508 = vmatprep.subr.mxu0 0.0
    %509 = vmatpush1.msra.mxu0 0.0
    %510 = vmatprep.subr.mxu0 0.0
    %511 = vmatpush1.msra.mxu0 0.0
    %512 = vmatprep.subr.mxu0 0.0
    %513 = vmatpush1.msra.mxu0 0.0
    %514 = vmatprep.subr.mxu0 0.0
    %515 = vmatpush1.msra.mxu0 0.0
    %516 = vmatprep.subr.mxu0 0.0
    %517 = vmatpush1.msra.mxu0 0.0
    %518 = vmatprep.subr.mxu0 0.0
    %519 = vmatpush1.msra.mxu0 0.0
    %520 = vmatprep.subr.mxu0 0.0
    %521 = vmatpush1.msra.mxu0 0.0
    %522 = vmatprep.subr.mxu0 0.0
    %523 = vmatpush1.msra.mxu0 0.0
    %524 = vmatprep.subr.mxu0 0.0
    %525 = vmatpush1.msra.mxu0 0.0
    %526 = vmatprep.subr.mxu0 0.0
    %527 = vmatpush1.msra.mxu0 0.0
    %528 = vmatprep.subr.mxu0 0.0
    %529 = vmatpush1.msra.mxu0 0.0
    %530 = vmatprep.subr.mxu0 0.0
    %531 = vmatpush1.msra.mxu0 0.0
    %532 = vmatprep.subr.mxu0 0.0
    %533 = vmatpush1.msra.mxu0 0.0
    %534 = vmatprep.subr.mxu0 0.0
    %535 = vmatpush1.msra.mxu0 0.0
    %536 = vmatprep.subr.mxu0 0.0
    %537 = vmatpush1.msra.mxu0 0.0
    %538 = vmatprep.subr.mxu0 0.0
    %539 = vmatpush1.msra.mxu0 0.0
    %540 = vmatprep.subr.mxu0 0.0
    %541 = vmatpush1.msra.mxu0 0.0
    %542 = vmatprep.subr.mxu0 0.0
    %543 = vmatpush1.msra.mxu0 0.0
    %544 = vmatprep.subr.mxu0 0.0
    %545 = vmatpush1.msra.mxu0 0.0
    %546 = vmatprep.subr.mxu0 0.0
    %547 = vmatpush1.msra.mxu0 0.0
    %548 = vmatprep.mubr.f32.mxu0 0.0
    %549 = vmatmul.mubr.f32.gmra.mrb[0].mxu0 %v478
    %v550 = vpop.f32.mrb[0].mxu0
    %v551 = vadd.f32 %v474, %v550
    %v552 = vpop.f32.mrb[0].mxu0
    %553 = vdwg.mxu0
    %v554 = vmax.f32 %v551, 0.0
    %v555 = vld [vmem:[%s12] sm:$0xff]
    %v556 = vld [vmem:[%s12 + $0x8] sm:$0x3f]
    %v557 = vld [vmem:[%s13] sm:$0x1]
    %v559 = vlaneseq
    %v560 = vshrl.u32 %v559, 7
    %v561 = vsub.s32 0, %v560
    %v562 = vrot.slane %v557, %v561
    %vm564 = vcmask 113664
    %v566 = vsel %vm564, %v554, 0
    %vm568 = vcmask 1045504
    %v570 = vsel %vm568, %v556, 0
    %572 = vmatprep.subr.mxu0 0.0
    %573 = vmatpush1.msra.mxu0 %v555
    %574 = vmatprep.subr.mxu0 0.0
    %575 = vmatpush1.msra.mxu0 %v570
    %576 = vmatprep.subr.mxu0 0.0
    %577 = vmatpush1.msra.mxu0 0.0
    %578 = vmatprep.subr.mxu0 0.0
    %579 = vmatpush1.msra.mxu0 0.0
    %580 = vmatprep.subr.mxu0 0.0
    %581 = vmatpush1.msra.mxu0 0.0
    %582 = vmatprep.subr.mxu0 0.0
    %583 = vmatpush1.msra.mxu0 0.0
    %584 = vmatprep.subr.mxu0 0.0
    %585 = vmatpush1.msra.mxu0 0.0
    %586 = vmatprep.subr.mxu0 0.0
    %587 = vmatpush1.msra.mxu0 0.0
    %588 = vmatprep.subr.mxu0 0.0
    %589 = vmatpush1.msra.mxu0 0.0
    %590 = vmatprep.subr.mxu0 0.0
    %591 = vmatpush1.msra.mxu0 0.0
    %592 = vmatprep.subr.mxu0 0.0
    %593 = vmatpush1.msra.mxu0 0.0
    %594 = vmatprep.subr.mxu0 0.0
    %595 = vmatpush1.msra.mxu0 0.0
    %596 = vmatprep.subr.mxu0 0.0
    %597 = vmatpush1.msra.mxu0 0.0
    %598 = vmatprep.subr.mxu0 0.0
    %599 = vmatpush1.msra.mxu0 0.0
    %600 = vmatprep.subr.mxu0 0.0
    %601 = vmatpush1.msra.mxu0 0.0
    %602 = vmatprep.subr.mxu0 0.0
    %603 = vmatpush1.msra.mxu0 0.0
    %604 = vmatprep.subr.mxu0 0.0
    %605 = vmatpush1.msra.mxu0 0.0
    %606 = vmatprep.subr.mxu0 0.0
    %607 = vmatpush1.msra.mxu0 0.0
    %608 = vmatprep.subr.mxu0 0.0
    %609 = vmatpush1.msra.mxu0 0.0
    %610 = vmatprep.subr.mxu0 0.0
    %611 = vmatpush1.msra.mxu0 0.0
    %612 = vmatprep.subr.mxu0 0.0
    %613 = vmatpush1.msra.mxu0 0.0
    %614 = vmatprep.subr.mxu0 0.0
    %615 = vmatpush1.msra.mxu0 0.0
    %616 = vmatprep.subr.mxu0 0.0
    %617 = vmatpush1.msra.mxu0 0.0
    %618 = vmatprep.subr.mxu0 0.0
    %619 = vmatpush1.msra.mxu0 0.0
    %620 = vmatprep.subr.mxu0 0.0
    %621 = vmatpush1.msra.mxu0 0.0
    %622 = vmatprep.subr.mxu0 0.0
    %623 = vmatpush1.msra.mxu0 0.0
    %624 = vmatprep.subr.mxu0 0.0
    %625 = vmatpush1.msra.mxu0 0.0
    %626 = vmatprep.subr.mxu0 0.0
    %627 = vmatpush1.msra.mxu0 0.0
    %628 = vmatprep.subr.mxu0 0.0
    %629 = vmatpush1.msra.mxu0 0.0
    %630 = vmatprep.subr.mxu0 0.0
    %631 = vmatpush1.msra.mxu0 0.0
    %632 = vmatprep.subr.mxu0 0.0
    %633 = vmatpush1.msra.mxu0 0.0
    %634 = vmatprep.subr.mxu0 0.0
    %635 = vmatpush1.msra.mxu0 0.0
    %636 = vmatprep.mubr.f32.mxu0 0.0
    %637 = vmatmul.mubr.f32.gmra.mrb[0].mxu0 %v566
    %v638 = vpop.f32.mrb[0].mxu0
    %v639 = vadd.f32 %v562, %v638
    %v640 = vpop.f32.mrb[0].mxu0
    %641 = vdwg.mxu0
    %v642 = vld [vmem:[%s1] sm:$0xff]
    %vm643 = vcmp.gt.f32.partialorder %v642, 0.0
    %v644 = vsel %vm643, 1, 0
    %v645 = vcvt.s32.f32 %v644
    %v646 = vmax.f32 %v639, 0.0
    %v647 = vmul.f32 %v639, %v645
    %v648 = vsub.f32 %v646, %v647
    %v649 = vand.u32 2147483647, %v639
    %v650 = vsub.f32 0.0, %v649
    %v651 = vmul.f32 %v650, 1.442695
    %v652 = vpow.pop %v651
    %v653 = vadd.f32 %v652, 1.0
    %v654 = vlog2.pop %v653
    %v655 = vmul.f32 %v654, 0.6931472
    %v656 = vadd.f32 %v648, %v655
    %v657 = vadd.f32 %v646, %v655
    %v658 = vmax.f32 %v657, 0.00034526698
    %v659 = vmul.f32 %v645, %v642
    %v660 = vsub.f32 1.0, %v645
    %v661 = vadd.f32 %v659, %v660
    %v662 = vlog2.pop %v661
    %v663 = vmul.f32 %v662, 0.6931472
    %v664 = vsub.f32 0.0, %v663
    %v665 = vlog2.pop %v658
    %v666 = vmul.f32 %v665, 0.6931472
    %668 = vrot.lane.b32.xlu0 %v666, 126
    %v669 = vpop.permute.xlu0 %668
    %v671 = vsub.f32 %v664, %v669
    %v672 = vsub.f32 %v671, 0.9189385
    %674 = vrot.lane.b32.xlu0 %v639, 127
    %v675 = vpop.permute.xlu0 %674
    %v677 = vsub.f32 %v663, %v675
    %v678 = vmul.f32 %v677, %v677
    %v679 = vmul.f32 %v658, 2.0
    %v680 = vmul.f32 %v679, %v658
    %682 = vrot.lane.b32.xlu0 %v680, 126
    %v683 = vpop.permute.xlu0 %682
    %v685 = vrcp.pop %v683
    %v686 = vmul.f32 %v678, %v685
    %v687 = vsub.f32 %v672, %v686
    %v688 = vsub.f32 0.0, %v645
    %v689 = vmul.f32 %v688, %v687
    %v690 = vadd.f32 %v656, %v689
    %v691 = vadd.f32 %v690, 0.0
    %vm692 = vcmask 7168
    %v693 = vsel %vm692, %v691, 0.0
    %v694 = vrot.slane %v693, 4
    %v695 = vadd.f32 %v693, %v694
    %v696 = vrot.slane %v695, 2
    %v697 = vadd.f32 %v695, %v696
    %v698 = vrot.slane %v697, 1
    %v699 = vadd.f32 %v697, %v698
    %v700 = vmul.f32 %v699, 0.125
    %v701 = vld [vmem:[%s14] sm:$0xff]
    %v702 = vld [vmem:[%s14 + $0x8] sm:$0xff]
    %v703 = vld [vmem:[%s14 + $0x10] sm:$0xff]
    %v704 = vld [vmem:[%s14 + $0x18] sm:$0xff]
    %v705 = vld [vmem:[%s14 + $0x20] sm:$0xff]
    %v706 = vld [vmem:[%s14 + $0x28] sm:$0xff]
    %v707 = vld [vmem:[%s14 + $0x30] sm:$0xff]
    %v708 = vld [vmem:[%s14 + $0x38] sm:$0xff]
    %v709 = vld [vmem:[%s14 + $0x40] sm:$0xff]
    %v710 = vld [vmem:[%s14 + $0x48] sm:$0xff]
    %v711 = vld [vmem:[%s14 + $0x50] sm:$0xff]
    %v712 = vld [vmem:[%s14 + $0x58] sm:$0xff]
    %v713 = vld [vmem:[%s14 + $0x60] sm:$0xff]
    %v714 = vld [vmem:[%s14 + $0x68] sm:$0xff]
    %v715 = vld [vmem:[%s14 + $0x70] sm:$0xff]
    %v716 = vld [vmem:[%s14 + $0x78] sm:$0xff]
    %v717 = vld [vmem:[%s14 + $0x80] sm:$0xff]
    %v718 = vld [vmem:[%s14 + $0x88] sm:$0xff]
    %v719 = vld [vmem:[%s14 + $0x90] sm:$0xff]
    %v720 = vld [vmem:[%s14 + $0x98] sm:$0xff]
    %v721 = vld [vmem:[%s14 + $0xa0] sm:$0xff]
    %v722 = vld [vmem:[%s14 + $0xa8] sm:$0xff]
    %v723 = vld [vmem:[%s14 + $0xb0] sm:$0xff]
    %v724 = vld [vmem:[%s14 + $0xb8] sm:$0xff]
    %v725 = vld [vmem:[%s14 + $0xc0] sm:$0xff]
    %v726 = vld [vmem:[%s14 + $0xc8] sm:$0xff]
    %v727 = vld [vmem:[%s14 + $0xd0] sm:$0xff]
    %v728 = vld [vmem:[%s14 + $0xd8] sm:$0xff]
    %v729 = vld [vmem:[%s15] sm:$0x3]
    %v731 = vlaneseq
    %v732 = vshrl.u32 %v731, 7
    %v733 = vsub.s32 0, %v732
    %v734 = vrot.slane %v729, %v733
    %v735 = vlaneseq
    %v736 = vshrl.u32 %v735, 7
    %v737 = vsub.s32 1, %v736
    %v738 = vrot.slane %v729, %v737
    %741 = vmatprep.subr.mxu0 %v702
    %742 = vmatpush1.msra.mxu0 %v701
    %743 = vmatprep.subr.mxu0 %v704
    %744 = vmatpush1.msra.mxu0 %v703
    %745 = vmatprep.subr.mxu0 %v706
    %746 = vmatpush1.msra.mxu0 %v705
    %747 = vmatprep.subr.mxu0 %v708
    %748 = vmatpush1.msra.mxu0 %v707
    %749 = vmatprep.subr.mxu0 %v710
    %750 = vmatpush1.msra.mxu0 %v709
    %751 = vmatprep.subr.mxu0 %v712
    %752 = vmatpush1.msra.mxu0 %v711
    %753 = vmatprep.subr.mxu0 %v714
    %754 = vmatpush1.msra.mxu0 %v713
    %755 = vmatprep.subr.mxu0 %v716
    %756 = vmatpush1.msra.mxu0 %v715
    %757 = vmatprep.subr.mxu0 %v718
    %758 = vmatpush1.msra.mxu0 %v717
    %759 = vmatprep.subr.mxu0 %v720
    %760 = vmatpush1.msra.mxu0 %v719
    %761 = vmatprep.subr.mxu0 %v722
    %762 = vmatpush1.msra.mxu0 %v721
    %763 = vmatprep.subr.mxu0 %v724
    %764 = vmatpush1.msra.mxu0 %v723
    %765 = vmatprep.subr.mxu0 %v726
    %766 = vmatpush1.msra.mxu0 %v725
    %767 = vmatprep.subr.mxu0 %v728
    %768 = vmatpush1.msra.mxu0 %v727
    %769 = vmatprep.subr.mxu0 0.0
    %770 = vmatpush1.msra.mxu0 0.0
    %771 = vmatprep.subr.mxu0 0.0
    %772 = vmatpush1.msra.mxu0 0.0
    %773 = vmatprep.subr.mxu0 0.0
    %774 = vmatpush1.msra.mxu0 0.0
    %775 = vmatprep.subr.mxu0 0.0
    %776 = vmatpush1.msra.mxu0 0.0
    %777 = vmatprep.subr.mxu0 0.0
    %778 = vmatpush1.msra.mxu0 0.0
    %779 = vmatprep.subr.mxu0 0.0
    %780 = vmatpush1.msra.mxu0 0.0
    %781 = vmatprep.subr.mxu0 0.0
    %782 = vmatpush1.msra.mxu0 0.0
    %783 = vmatprep.subr.mxu0 0.0
    %784 = vmatpush1.msra.mxu0 0.0
    %785 = vmatprep.subr.mxu0 0.0
    %786 = vmatpush1.msra.mxu0 0.0
    %787 = vmatprep.subr.mxu0 0.0
    %788 = vmatpush1.msra.mxu0 0.0
    %789 = vmatprep.subr.mxu0 0.0
    %790 = vmatpush1.msra.mxu0 0.0
    %791 = vmatprep.subr.mxu0 0.0
    %792 = vmatpush1.msra.mxu0 0.0
    %793 = vmatprep.subr.mxu0 0.0
    %794 = vmatpush1.msra.mxu0 0.0
    %795 = vmatprep.subr.mxu0 0.0
    %796 = vmatpush1.msra.mxu0 0.0
    %797 = vmatprep.subr.mxu0 0.0
    %798 = vmatpush1.msra.mxu0 0.0
    %799 = vmatprep.subr.mxu0 0.0
    %800 = vmatpush1.msra.mxu0 0.0
    %801 = vmatprep.subr.mxu0 0.0
    %802 = vmatpush1.msra.mxu0 0.0
    %803 = vmatprep.subr.mxu0 0.0
    %804 = vmatpush1.msra.mxu0 0.0
    %805 = vmatprep.mubr.f32.mxu0 0.0
    %806 = vmatmul.mubr.f32.gmra.mrb[0].mxu0 %v303
    %v807 = vpop.f32.mrb[0].mxu0
    %v808 = vadd.f32 %v734, %v807
    %v809 = vpop.f32.mrb[0].mxu0
    %v810 = vadd.f32 %v738, %v809
    %811 = vdwg.mxu0
    %v812 = vmax.f32 %v808, 0.0
    %v813 = vmax.f32 %v810, 0.0
    %v814 = vld [vmem:[%s16] sm:$0xff]
    %v815 = vld [vmem:[%s16 + $0x8] sm:$0xff]
    %v816 = vld [vmem:[%s16 + $0x10] sm:$0xff]
    %v817 = vld [vmem:[%s16 + $0x18] sm:$0xff]
    %v818 = vld [vmem:[%s16 + $0x20] sm:$0xff]
    %v819 = vld [vmem:[%s16 + $0x28] sm:$0xff]
    %v820 = vld [vmem:[%s16 + $0x30] sm:$0xff]
    %v821 = vld [vmem:[%s16 + $0x38] sm:$0xff]
    %v822 = vld [vmem:[%s16 + $0x40] sm:$0xff]
    %v823 = vld [vmem:[%s16 + $0x48] sm:$0xff]
    %v824 = vld [vmem:[%s16 + $0x50] sm:$0xff]
    %v825 = vld [vmem:[%s16 + $0x58] sm:$0xff]
    %v826 = vld [vmem:[%s16 + $0x60] sm:$0xff]
    %v827 = vld [vmem:[%s16 + $0x68] sm:$0xff]
    %v828 = vld [vmem:[%s16 + $0x70] sm:$0xff]
    %v829 = vld [vmem:[%s16 + $0x78] sm:$0xff]
    %v830 = vld [vmem:[%s16 + $0x80] sm:$0xff]
    %v831 = vld [vmem:[%s16 + $0x88] sm:$0xff]
    %v832 = vld [vmem:[%s16 + $0x90] sm:$0xff]
    %v833 = vld [vmem:[%s16 + $0x98] sm:$0xff]
    %v834 = vld [vmem:[%s16 + $0xa0] sm:$0xff]
    %v835 = vld [vmem:[%s16 + $0xa8] sm:$0xff]
    %v836 = vld [vmem:[%s16 + $0xb0] sm:$0xff]
    %v837 = vld [vmem:[%s16 + $0xb8] sm:$0xff]
    %v838 = vld [vmem:[%s17] sm:$0x1]
    %v840 = vlaneseq
    %v841 = vshrl.u32 %v840, 7
    %v842 = vsub.s32 0, %v841
    %v843 = vrot.slane %v838, %v842
    %v846 = vsel %vm94, %v813, 0
    %848 = vmatprep.subr.mxu0 0.0
    %849 = vmatpush1.msra.mxu0 %v814
    %850 = vmatprep.subr.mxu0 0.0
    %851 = vmatpush1.msra.mxu0 %v815
    %852 = vmatprep.subr.mxu0 0.0
    %853 = vmatpush1.msra.mxu0 %v816
    %854 = vmatprep.subr.mxu0 0.0
    %855 = vmatpush1.msra.mxu0 %v817
    %856 = vmatprep.subr.mxu0 0.0
    %857 = vmatpush1.msra.mxu0 %v818
    %858 = vmatprep.subr.mxu0 0.0
    %859 = vmatpush1.msra.mxu0 %v819
    %860 = vmatprep.subr.mxu0 0.0
    %861 = vmatpush1.msra.mxu0 %v820
    %862 = vmatprep.subr.mxu0 0.0
    %863 = vmatpush1.msra.mxu0 %v821
    %864 = vmatprep.subr.mxu0 0.0
    %865 = vmatpush1.msra.mxu0 %v822
    %866 = vmatprep.subr.mxu0 0.0
    %867 = vmatpush1.msra.mxu0 %v823
    %868 = vmatprep.subr.mxu0 0.0
    %869 = vmatpush1.msra.mxu0 %v824
    %870 = vmatprep.subr.mxu0 0.0
    %871 = vmatpush1.msra.mxu0 %v825
    %872 = vmatprep.subr.mxu0 0.0
    %873 = vmatpush1.msra.mxu0 %v826
    %874 = vmatprep.subr.mxu0 0.0
    %875 = vmatpush1.msra.mxu0 %v827
    %876 = vmatprep.subr.mxu0 0.0
    %877 = vmatpush1.msra.mxu0 %v828
    %878 = vmatprep.subr.mxu0 0.0
    %879 = vmatpush1.msra.mxu0 %v829
    %880 = vmatprep.subr.mxu0 0.0
    %881 = vmatpush1.msra.mxu0 %v830
    %882 = vmatprep.subr.mxu0 0.0
    %883 = vmatpush1.msra.mxu0 %v831
    %884 = vmatprep.subr.mxu0 0.0
    %885 = vmatpush1.msra.mxu0 %v832
    %886 = vmatprep.subr.mxu0 0.0
    %887 = vmatpush1.msra.mxu0 %v833
    %888 = vmatprep.subr.mxu0 0.0
    %889 = vmatpush1.msra.mxu0 %v834
    %890 = vmatprep.subr.mxu0 0.0
    %891 = vmatpush1.msra.mxu0 %v835
    %892 = vmatprep.subr.mxu0 0.0
    %893 = vmatpush1.msra.mxu0 %v836
    %894 = vmatprep.subr.mxu0 0.0
    %895 = vmatpush1.msra.mxu0 %v837
    %896 = vmatprep.subr.mxu0 0.0
    %897 = vmatpush1.msra.mxu0 0.0
    %898 = vmatprep.subr.mxu0 0.0
    %899 = vmatpush1.msra.mxu0 0.0
    %900 = vmatprep.subr.mxu0 0.0
    %901 = vmatpush1.msra.mxu0 0.0
    %902 = vmatprep.subr.mxu0 0.0
    %903 = vmatpush1.msra.mxu0 0.0
    %904 = vmatprep.subr.mxu0 0.0
    %905 = vmatpush1.msra.mxu0 0.0
    %906 = vmatprep.subr.mxu0 0.0
    %907 = vmatpush1.msra.mxu0 0.0
    %908 = vmatprep.subr.mxu0 0.0
    %909 = vmatpush1.msra.mxu0 0.0
    %910 = vmatprep.subr.mxu0 0.0
    %911 = vmatpush1.msra.mxu0 0.0
    %912 = vmatprep.mubr.f32.mxu0 %v846
    %913 = vmatmul.mubr.f32.gmra.mrb[0].mxu0 %v812
    %v914 = vpop.f32.mrb[0].mxu0
    %v915 = vadd.f32 %v843, %v914
    %v916 = vpop.f32.mrb[0].mxu0
    %917 = vdwg.mxu0
    %v918 = vsub.f32 %v65, %v915
    %v919 = vmul.f32 %v918, %v918
    %v920 = vld [vmem:[%s18] sm:$0x1]
    %v922 = vlaneseq
    %v923 = vshrl.u32 %v922, 7
    %v924 = vsub.s32 0, %v923
    %v925 = vrot.slane %v920, %v924
    %v927 = vmul.f32 %v919, %v925
    %v928 = vsel %vm94, %v927, 0.0
    %929 = vadd.xlane.f32.xlu0 %v928
    %v930 = vpop.xlane.xlu0 %929
    %v931 = vrot.slane %v930, 4
    %v932 = vadd.f32 %v930, %v931
    %v933 = vrot.slane %v932, 2
    %v934 = vadd.f32 %v932, %v933
    %v935 = vrot.slane %v934, 1
    %v936 = vadd.f32 %v934, %v935
    %v937 = vmul.f32 %v936, 0.125
    %v938 = vmul.f32 %v937, 0.01
    %v939 = vadd.f32 %v700, %v938
    %vm940 = vcmask 130048
    %v941 = vsel %vm940, %v277, -inf
    %942 = vmax.xlane.f32.xlu0 %v941
    %v943 = vpop.xlane.xlu0 %942
    %v944 = vsub.f32 %v277, %v943
    %v945 = vmul.f32 %v944, 1.442695
    %v946 = vpow.pop %v945
    %v947 = vsel %vm940, %v946, 0.0
    %948 = vadd.xlane.f32.xlu0 %v947
    %v949 = vpop.xlane.xlu0 %948
    %v950 = vlog2.pop %v949
    %v951 = vmul.f32 %v950, 0.6931472
    %v952 = vsub.f32 %v944, %v951
    %vm953 = vcmask 261248
    %v954 = vsel %vm953, %v277, -inf
    %955 = vmax.xlane.f32.xlu0 %v954
    %v956 = vpop.xlane.xlu0 %955
    %v957 = vsub.f32 %v277, %v956
    %v958 = vmul.f32 %v957, 1.442695
    %v959 = vpow.pop %v958
    %961 = vrot.lane.b32.xlu0 %v959, 112
    %v962 = vpop.permute.xlu0 %961
    %v964 = vsel %vm940, %v962, 0.0
    %965 = vadd.xlane.f32.xlu0 %v964
    %v966 = vpop.xlane.xlu0 %965
    %v967 = vlog2.pop %v966
    %v968 = vmul.f32 %v967, 0.6931472
    %v969 = vsub.f32 %v957, %v968
    %v970 = vmul.f32 %v969, 1.442695
    %v971 = vpow.pop %v970
    %973 = vrot.lane.b32.xlu0 %v952, 16
    %v974 = vpop.permute.xlu0 %973
    %v976 = vsub.f32 %v969, %v974
    %v977 = vmul.f32 %v971, %v976
    %979 = vrot.lane.b32.xlu0 %v977, 112
    %v980 = vpop.permute.xlu0 %979
    %v982 = vsel %vm940, %v980, 0.0
    %983 = vadd.xlane.f32.xlu0 %v982
    %v984 = vpop.xlane.xlu0 %983
    %v985 = vrot.slane %v984, 4
    %v986 = vadd.f32 %v984, %v985
    %v987 = vrot.slane %v986, 2
    %v988 = vadd.f32 %v986, %v987
    %v989 = vrot.slane %v988, 1
    %v990 = vadd.f32 %v988, %v989
    %v991 = vadd.f32 %v990, 0.0
    %vm992 = vcmask 392448
    %v993 = vsel %vm992, %v277, -inf
    %994 = vmax.xlane.f32.xlu0 %v993
    %v995 = vpop.xlane.xlu0 %994
    %v996 = vsub.f32 %v277, %v995
    %v997 = vmul.f32 %v996, 1.442695
    %v998 = vpow.pop %v997
    %1000 = vrot.lane.b32.xlu0 %v998, 96
    %v1001 = vpop.permute.xlu0 %1000
    %v1003 = vsel %vm940, %v1001, 0.0
    %1004 = vadd.xlane.f32.xlu0 %v1003
    %v1005 = vpop.xlane.xlu0 %1004
    %v1006 = vlog2.pop %v1005
    %v1007 = vmul.f32 %v1006, 0.6931472
    %v1008 = vsub.f32 %v996, %v1007
    %v1009 = vmul.f32 %v1008, 1.442695
    %v1010 = vpow.pop %v1009
    %1011 = vrot.lane.b32.xlu0 %v952, 32
    %v1012 = vpop.permute.xlu0 %1011
    %v1014 = vsub.f32 %v1008, %v1012
    %v1015 = vmul.f32 %v1010, %v1014
    %1017 = vrot.lane.b32.xlu0 %v1015, 96
    %v1018 = vpop.permute.xlu0 %1017
    %v1020 = vsel %vm940, %v1018, 0.0
    %1021 = vadd.xlane.f32.xlu0 %v1020
    %v1022 = vpop.xlane.xlu0 %1021
    %v1023 = vrot.slane %v1022, 4
    %v1024 = vadd.f32 %v1022, %v1023
    %v1025 = vrot.slane %v1024, 2
    %v1026 = vadd.f32 %v1024, %v1025
    %v1027 = vrot.slane %v1026, 1
    %v1028 = vadd.f32 %v1026, %v1027
    %v1029 = vadd.f32 %v991, %v1028
    %vm1030 = vcmask 523648
    %v1031 = vsel %vm1030, %v277, -inf
    %1032 = vmax.xlane.f32.xlu0 %v1031
    %v1033 = vpop.xlane.xlu0 %1032
    %v1034 = vsub.f32 %v277, %v1033
    %v1035 = vmul.f32 %v1034, 1.442695
    %v1036 = vpow.pop %v1035
    %1038 = vrot.lane.b32.xlu0 %v1036, 80
    %v1039 = vpop.permute.xlu0 %1038
    %v1041 = vsel %vm940, %v1039, 0.0
    %1042 = vadd.xlane.f32.xlu0 %v1041
    %v1043 = vpop.xlane.xlu0 %1042
    %v1044 = vlog2.pop %v1043
    %v1045 = vmul.f32 %v1044, 0.6931472
    %v1046 = vsub.f32 %v1034, %v1045
    %v1047 = vmul.f32 %v1046, 1.442695
    %v1048 = vpow.pop %v1047
    %1049 = vrot.lane.b32.xlu0 %v952, 48
    %v1050 = vpop.permute.xlu0 %1049
    %v1052 = vsub.f32 %v1046, %v1050
    %v1053 = vmul.f32 %v1048, %v1052
    %1055 = vrot.lane.b32.xlu0 %v1053, 80
    %v1056 = vpop.permute.xlu0 %1055
    %v1058 = vsel %vm940, %v1056, 0.0
    %1059 = vadd.xlane.f32.xlu0 %v1058
    %v1060 = vpop.xlane.xlu0 %1059
    %v1061 = vrot.slane %v1060, 4
    %v1062 = vadd.f32 %v1060, %v1061
    %v1063 = vrot.slane %v1062, 2
    %v1064 = vadd.f32 %v1062, %v1063
    %v1065 = vrot.slane %v1064, 1
    %v1066 = vadd.f32 %v1064, %v1065
    %v1067 = vadd.f32 %v1029, %v1066
    %vm1068 = vcmask 654848
    %v1069 = vsel %vm1068, %v277, -inf
    %1070 = vmax.xlane.f32.xlu0 %v1069
    %v1071 = vpop.xlane.xlu0 %1070
    %v1072 = vsub.f32 %v277, %v1071
    %v1073 = vmul.f32 %v1072, 1.442695
    %v1074 = vpow.pop %v1073
    %1076 = vrot.lane.b32.xlu0 %v1074, 64
    %v1077 = vpop.permute.xlu0 %1076
    %v1079 = vsel %vm940, %v1077, 0.0
    %1080 = vadd.xlane.f32.xlu0 %v1079
    %v1081 = vpop.xlane.xlu0 %1080
    %v1082 = vlog2.pop %v1081
    %v1083 = vmul.f32 %v1082, 0.6931472
    %v1084 = vsub.f32 %v1072, %v1083
    %v1085 = vmul.f32 %v1084, 1.442695
    %v1086 = vpow.pop %v1085
    %1087 = vrot.lane.b32.xlu0 %v952, 64
    %v1088 = vpop.permute.xlu0 %1087
    %v1090 = vsub.f32 %v1084, %v1088
    %v1091 = vmul.f32 %v1086, %v1090
    %1093 = vrot.lane.b32.xlu0 %v1091, 64
    %v1094 = vpop.permute.xlu0 %1093
    %v1096 = vsel %vm940, %v1094, 0.0
    %1097 = vadd.xlane.f32.xlu0 %v1096
    %v1098 = vpop.xlane.xlu0 %1097
    %v1099 = vrot.slane %v1098, 4
    %v1100 = vadd.f32 %v1098, %v1099
    %v1101 = vrot.slane %v1100, 2
    %v1102 = vadd.f32 %v1100, %v1101
    %v1103 = vrot.slane %v1102, 1
    %v1104 = vadd.f32 %v1102, %v1103
    %v1105 = vadd.f32 %v1067, %v1104
    %vm1106 = vcmask 786048
    %v1107 = vsel %vm1106, %v277, -inf
    %1108 = vmax.xlane.f32.xlu0 %v1107
    %v1109 = vpop.xlane.xlu0 %1108
    %v1110 = vsub.f32 %v277, %v1109
    %v1111 = vmul.f32 %v1110, 1.442695
    %v1112 = vpow.pop %v1111
    %1114 = vrot.lane.b32.xlu0 %v1112, 48
    %v1115 = vpop.permute.xlu0 %1114
    %v1117 = vsel %vm940, %v1115, 0.0
    %1118 = vadd.xlane.f32.xlu0 %v1117
    %v1119 = vpop.xlane.xlu0 %1118
    %v1120 = vlog2.pop %v1119
    %v1121 = vmul.f32 %v1120, 0.6931472
    %v1122 = vsub.f32 %v1110, %v1121
    %v1123 = vmul.f32 %v1122, 1.442695
    %v1124 = vpow.pop %v1123
    %1125 = vrot.lane.b32.xlu0 %v952, 80
    %v1126 = vpop.permute.xlu0 %1125
    %v1128 = vsub.f32 %v1122, %v1126
    %v1129 = vmul.f32 %v1124, %v1128
    %1131 = vrot.lane.b32.xlu0 %v1129, 48
    %v1132 = vpop.permute.xlu0 %1131
    %v1134 = vsel %vm940, %v1132, 0.0
    %1135 = vadd.xlane.f32.xlu0 %v1134
    %v1136 = vpop.xlane.xlu0 %1135
    %v1137 = vrot.slane %v1136, 4
    %v1138 = vadd.f32 %v1136, %v1137
    %v1139 = vrot.slane %v1138, 2
    %v1140 = vadd.f32 %v1138, %v1139
    %v1141 = vrot.slane %v1140, 1
    %v1142 = vadd.f32 %v1140, %v1141
    %v1143 = vadd.f32 %v1105, %v1142
    %vm1144 = vcmask 917248
    %v1145 = vsel %vm1144, %v277, -inf
    %1146 = vmax.xlane.f32.xlu0 %v1145
    %v1147 = vpop.xlane.xlu0 %1146
    %v1148 = vsub.f32 %v277, %v1147
    %v1149 = vmul.f32 %v1148, 1.442695
    %v1150 = vpow.pop %v1149
    %1152 = vrot.lane.b32.xlu0 %v1150, 32
    %v1153 = vpop.permute.xlu0 %1152
    %v1155 = vsel %vm940, %v1153, 0.0
    %1156 = vadd.xlane.f32.xlu0 %v1155
    %v1157 = vpop.xlane.xlu0 %1156
    %v1158 = vlog2.pop %v1157
    %v1159 = vmul.f32 %v1158, 0.6931472
    %v1160 = vsub.f32 %v1148, %v1159
    %v1161 = vmul.f32 %v1160, 1.442695
    %v1162 = vpow.pop %v1161
    %1163 = vrot.lane.b32.xlu0 %v952, 96
    %v1164 = vpop.permute.xlu0 %1163
    %v1166 = vsub.f32 %v1160, %v1164
    %v1167 = vmul.f32 %v1162, %v1166
    %1169 = vrot.lane.b32.xlu0 %v1167, 32
    %v1170 = vpop.permute.xlu0 %1169
    %v1172 = vsel %vm940, %v1170, 0.0
    %1173 = vadd.xlane.f32.xlu0 %v1172
    %v1174 = vpop.xlane.xlu0 %1173
    %v1175 = vrot.slane %v1174, 4
    %v1176 = vadd.f32 %v1174, %v1175
    %v1177 = vrot.slane %v1176, 2
    %v1178 = vadd.f32 %v1176, %v1177
    %v1179 = vrot.slane %v1178, 1
    %v1180 = vadd.f32 %v1178, %v1179
    %v1181 = vadd.f32 %v1143, %v1180
    %v1182 = vmul.f32 %v1181, 0.0125
    %v1183 = vadd.f32 %v939, %v1182
    %1184 = vrot.lane.b32.xlu0 %v277, 112
    %v1185 = vpop.permute.xlu0 %1184
    %1186 = vrot.lane.b32.xlu0 %v277, 96
    %v1187 = vpop.permute.xlu0 %1186
    %v1188 = vsel %vm940, %v1185, 0
    %v1190 = vsel %vm940, %v1187, 0
    %1192 = vmatprep.subr.mxu0 0.0
    %1193 = vmatpush1.xpose.msra.mxu0 %v1190
    %1194 = vmatprep.subr.mxu0 0.0
    %1195 = vmatpush1.xpose.msra.mxu0 0.0
    %1196 = vmatprep.subr.mxu0 0.0
    %1197 = vmatpush1.xpose.msra.mxu0 0.0
    %1198 = vmatprep.subr.mxu0 0.0
    %1199 = vmatpush1.xpose.msra.mxu0 0.0
    %1200 = vmatprep.subr.mxu0 0.0
    %1201 = vmatpush1.xpose.msra.mxu0 0.0
    %1202 = vmatprep.subr.mxu0 0.0
    %1203 = vmatpush1.xpose.msra.mxu0 0.0
    %1204 = vmatprep.subr.mxu0 0.0
    %1205 = vmatpush1.xpose.msra.mxu0 0.0
    %1206 = vmatprep.subr.mxu0 0.0
    %1207 = vmatpush1.xpose.msra.mxu0 0.0
    %1208 = vmatprep.subr.mxu0 0.0
    %1209 = vmatpush1.xpose.msra.mxu0 0.0
    %1210 = vmatprep.subr.mxu0 0.0
    %1211 = vmatpush1.xpose.msra.mxu0 0.0
    %1212 = vmatprep.subr.mxu0 0.0
    %1213 = vmatpush1.xpose.msra.mxu0 0.0
    %1214 = vmatprep.subr.mxu0 0.0
    %1215 = vmatpush1.xpose.msra.mxu0 0.0
    %1216 = vmatprep.subr.mxu0 0.0
    %1217 = vmatpush1.xpose.msra.mxu0 0.0
    %1218 = vmatprep.subr.mxu0 0.0
    %1219 = vmatpush1.xpose.msra.mxu0 0.0
    %1220 = vmatprep.subr.mxu0 0.0
    %1221 = vmatpush1.xpose.msra.mxu0 0.0
    %1222 = vmatprep.subr.mxu0 0.0
    %1223 = vmatpush1.xpose.msra.mxu0 0.0
    %1224 = vmatprep.subr.mxu0 0.0
    %1225 = vmatpush1.xpose.msra.mxu0 0.0
    %1226 = vmatprep.subr.mxu0 0.0
    %1227 = vmatpush1.xpose.msra.mxu0 0.0
    %1228 = vmatprep.subr.mxu0 0.0
    %1229 = vmatpush1.xpose.msra.mxu0 0.0
    %1230 = vmatprep.subr.mxu0 0.0
    %1231 = vmatpush1.xpose.msra.mxu0 0.0
    %1232 = vmatprep.subr.mxu0 0.0
    %1233 = vmatpush1.xpose.msra.mxu0 0.0
    %1234 = vmatprep.subr.mxu0 0.0
    %1235 = vmatpush1.xpose.msra.mxu0 0.0
    %1236 = vmatprep.subr.mxu0 0.0
    %1237 = vmatpush1.xpose.msra.mxu0 0.0
    %1238 = vmatprep.subr.mxu0 0.0
    %1239 = vmatpush1.xpose.msra.mxu0 0.0
    %1240 = vmatprep.subr.mxu0 0.0
    %1241 = vmatpush1.xpose.msra.mxu0 0.0
    %1242 = vmatprep.subr.mxu0 0.0
    %1243 = vmatpush1.xpose.msra.mxu0 0.0
    %1244 = vmatprep.subr.mxu0 0.0
    %1245 = vmatpush1.xpose.msra.mxu0 0.0
    %1246 = vmatprep.subr.mxu0 0.0
    %1247 = vmatpush1.xpose.msra.mxu0 0.0
    %1248 = vmatprep.subr.mxu0 0.0
    %1249 = vmatpush1.xpose.msra.mxu0 0.0
    %1250 = vmatprep.subr.mxu0 0.0
    %1251 = vmatpush1.xpose.msra.mxu0 0.0
    %1252 = vmatprep.subr.mxu0 0.0
    %1253 = vmatpush1.xpose.msra.mxu0 0.0
    %1254 = vmatprep.subr.mxu0 0.0
    %1255 = vmatpush1.xpose.msra.mxu0 0.0
    %1256 = vmatprep.mubr.f32.mxu0 0.0
    %1257 = vmatmul.mubr.f32.gmra.mrb[0].mxu0 %v1188
    %v1258 = vpop.f32.mrb[0].mxu0
    %v1259 = vadd.f32 0.0, %v1258
    %v1260 = vpop.f32.mrb[0].mxu0
    %1261 = vdwg.mxu0
    %v1262 = vmul.f32 %v1259, 5.0
    %v1264 = vmul.f32 %v277, %v1185
    %1266 = vrot.lane.b32.xlu0 %v1264, 112
    %v1267 = vpop.permute.xlu0 %1266
    %v1269 = vsel %vm940, %v1267, 0.0
    %1270 = vadd.xlane.f32.xlu0 %v1269
    %v1271 = vpop.xlane.xlu0 %1270
    %v1272 = vmul.f32 %v1271, 5.0
    %vm1273 = vcmask 64512
    %v1274 = vsel %vm1273, %v1262, -inf
    %1275 = vmax.xlane.f32.xlu0 %v1274
    %v1276 = vpop.xlane.xlu0 %1275
    %v1277 = vsub.f32 %v1262, %v1276
    %v1278 = vmul.f32 %v1277, 1.442695
    %v1279 = vpow.pop %v1278
    %v1280 = vsel %vm1273, %v1279, 0.0
    %1281 = vadd.xlane.f32.xlu0 %v1280
    %v1282 = vpop.xlane.xlu0 %1281
    %v1283 = vlog2.pop %v1282
    %v1284 = vmul.f32 %v1283, 0.6931472
    %v1285 = vadd.f32 %v1284, %v1276
    %v1286 = vrot.slane %v1274, 4
    %v1287 = vmax.f32 %v1274, %v1286
    %v1288 = vrot.slane %v1287, 2
    %v1289 = vmax.f32 %v1287, %v1288
    %v1290 = vrot.slane %v1289, 1
    %v1291 = vmax.f32 %v1289, %v1290
    %v1292 = vsub.f32 %v1262, %v1291
    %v1293 = vmul.f32 %v1292, 1.442695
    %v1294 = vpow.pop %v1293
    %v1295 = vsel %vm1273, %v1294, 0.0
    %v1296 = vrot.slane %v1295, 4
    %v1297 = vadd.f32 %v1295, %v1296
    %v1298 = vrot.slane %v1297, 2
    %v1299 = vadd.f32 %v1297, %v1298
    %v1300 = vrot.slane %v1299, 1
    %v1301 = vadd.f32 %v1299, %v1300
    %v1302 = vlog2.pop %v1301
    %v1303 = vmul.f32 %v1302, 0.6931472
    %v1304 = vadd.f32 %v1303, %v1291
    %v1305 = vadd.f32 %v1285, 0.0
    %v1306 = vrot.slane %v1305, 4
    %v1307 = vadd.f32 %v1305, %v1306
    %v1308 = vrot.slane %v1307, 2
    %v1309 = vadd.f32 %v1307, %v1308
    %v1310 = vrot.slane %v1309, 1
    %v1311 = vadd.f32 %v1309, %v1310
    %v1312 = vadd.f32 %v1311, 0.0
    %v1313 = vsel %vm1273, %v1304, 0.0
    %1314 = vadd.xlane.f32.xlu0 %v1313
    %v1315 = vpop.xlane.xlu0 %1314
    %v1316 = vadd.f32 %v1315, 0.0
    %v1317 = vadd.f32 %v1312, %v1316
    %v1318 = vadd.f32 %v1272, 0.0
    %v1319 = vrot.slane %v1318, 4
    %v1320 = vadd.f32 %v1318, %v1319
    %v1321 = vrot.slane %v1320, 2
    %v1322 = vadd.f32 %v1320, %v1321
    %v1323 = vrot.slane %v1322, 1
    %v1324 = vadd.f32 %v1322, %v1323
    %v1325 = vmul.f32 %v1324, 2.0
    %v1326 = vsub.f32 %v1317, %v1325
    %1327 = vrot.lane.b32.xlu0 %v277, 80
    %v1328 = vpop.permute.xlu0 %1327
    %v1329 = vsel %vm940, %v1328, 0
    %1331 = vmatprep.subr.mxu0 0.0
    %1332 = vmatpush1.xpose.msra.mxu0 %v1329
    %1333 = vmatprep.subr.mxu0 0.0
    %1334 = vmatpush1.xpose.msra.mxu0 0.0
    %1335 = vmatprep.subr.mxu0 0.0
    %1336 = vmatpush1.xpose.msra.mxu0 0.0
    %1337 = vmatprep.subr.mxu0 0.0
    %1338 = vmatpush1.xpose.msra.mxu0 0.0
    %1339 = vmatprep.subr.mxu0 0.0
    %1340 = vmatpush1.xpose.msra.mxu0 0.0
    %1341 = vmatprep.subr.mxu0 0.0
    %1342 = vmatpush1.xpose.msra.mxu0 0.0
    %1343 = vmatprep.subr.mxu0 0.0
    %1344 = vmatpush1.xpose.msra.mxu0 0.0
    %1345 = vmatprep.subr.mxu0 0.0
    %1346 = vmatpush1.xpose.msra.mxu0 0.0
    %1347 = vmatprep.subr.mxu0 0.0
    %1348 = vmatpush1.xpose.msra.mxu0 0.0
    %1349 = vmatprep.subr.mxu0 0.0
    %1350 = vmatpush1.xpose.msra.mxu0 0.0
    %1351 = vmatprep.subr.mxu0 0.0
    %1352 = vmatpush1.xpose.msra.mxu0 0.0
    %1353 = vmatprep.subr.mxu0 0.0
    %1354 = vmatpush1.xpose.msra.mxu0 0.0
    %1355 = vmatprep.subr.mxu0 0.0
    %1356 = vmatpush1.xpose.msra.mxu0 0.0
    %1357 = vmatprep.subr.mxu0 0.0
    %1358 = vmatpush1.xpose.msra.mxu0 0.0
    %1359 = vmatprep.subr.mxu0 0.0
    %1360 = vmatpush1.xpose.msra.mxu0 0.0
    %1361 = vmatprep.subr.mxu0 0.0
    %1362 = vmatpush1.xpose.msra.mxu0 0.0
    %1363 = vmatprep.subr.mxu0 0.0
    %1364 = vmatpush1.xpose.msra.mxu0 0.0
    %1365 = vmatprep.subr.mxu0 0.0
    %1366 = vmatpush1.xpose.msra.mxu0 0.0
    %1367 = vmatprep.subr.mxu0 0.0
    %1368 = vmatpush1.xpose.msra.mxu0 0.0
    %1369 = vmatprep.subr.mxu0 0.0
    %1370 = vmatpush1.xpose.msra.mxu0 0.0
    %1371 = vmatprep.subr.mxu0 0.0
    %1372 = vmatpush1.xpose.msra.mxu0 0.0
    %1373 = vmatprep.subr.mxu0 0.0
    %1374 = vmatpush1.xpose.msra.mxu0 0.0
    %1375 = vmatprep.subr.mxu0 0.0
    %1376 = vmatpush1.xpose.msra.mxu0 0.0
    %1377 = vmatprep.subr.mxu0 0.0
    %1378 = vmatpush1.xpose.msra.mxu0 0.0
    %1379 = vmatprep.subr.mxu0 0.0
    %1380 = vmatpush1.xpose.msra.mxu0 0.0
    %1381 = vmatprep.subr.mxu0 0.0
    %1382 = vmatpush1.xpose.msra.mxu0 0.0
    %1383 = vmatprep.subr.mxu0 0.0
    %1384 = vmatpush1.xpose.msra.mxu0 0.0
    %1385 = vmatprep.subr.mxu0 0.0
    %1386 = vmatpush1.xpose.msra.mxu0 0.0
    %1387 = vmatprep.subr.mxu0 0.0
    %1388 = vmatpush1.xpose.msra.mxu0 0.0
    %1389 = vmatprep.subr.mxu0 0.0
    %1390 = vmatpush1.xpose.msra.mxu0 0.0
    %1391 = vmatprep.subr.mxu0 0.0
    %1392 = vmatpush1.xpose.msra.mxu0 0.0
    %1393 = vmatprep.subr.mxu0 0.0
    %1394 = vmatpush1.xpose.msra.mxu0 0.0
    %1395 = vmatprep.mubr.f32.mxu0 0.0
    %1396 = vmatmul.mubr.f32.gmra.mrb[0].mxu0 %v1188
    %v1397 = vpop.f32.mrb[0].mxu0
    %v1398 = vadd.f32 0.0, %v1397
    %v1399 = vpop.f32.mrb[0].mxu0
    %1400 = vdwg.mxu0
    %v1401 = vmul.f32 %v1398, 5.0
    %v1403 = vmul.f32 %v277, %v1187
    %1405 = vrot.lane.b32.xlu0 %v1403, 112
    %v1406 = vpop.permute.xlu0 %1405
    %v1408 = vsel %vm940, %v1406, 0.0
    %1409 = vadd.xlane.f32.xlu0 %v1408
    %v1410 = vpop.xlane.xlu0 %1409
    %v1411 = vmul.f32 %v1410, 5.0
    %v1412 = vsel %vm1273, %v1401, -inf
    %1413 = vmax.xlane.f32.xlu0 %v1412
    %v1414 = vpop.xlane.xlu0 %1413
    %v1415 = vsub.f32 %v1401, %v1414
    %v1416 = vmul.f32 %v1415, 1.442695
    %v1417 = vpow.pop %v1416
    %v1418 = vsel %vm1273, %v1417, 0.0
    %1419 = vadd.xlane.f32.xlu0 %v1418
    %v1420 = vpop.xlane.xlu0 %1419
    %v1421 = vlog2.pop %v1420
    %v1422 = vmul.f32 %v1421, 0.6931472
    %v1423 = vadd.f32 %v1422, %v1414
    %v1424 = vrot.slane %v1412, 4
    %v1425 = vmax.f32 %v1412, %v1424
    %v1426 = vrot.slane %v1425, 2
    %v1427 = vmax.f32 %v1425, %v1426
    %v1428 = vrot.slane %v1427, 1
    %v1429 = vmax.f32 %v1427, %v1428
    %v1430 = vsub.f32 %v1401, %v1429
    %v1431 = vmul.f32 %v1430, 1.442695
    %v1432 = vpow.pop %v1431
    %v1433 = vsel %vm1273, %v1432, 0.0
    %v1434 = vrot.slane %v1433, 4
    %v1435 = vadd.f32 %v1433, %v1434
    %v1436 = vrot.slane %v1435, 2
    %v1437 = vadd.f32 %v1435, %v1436
    %v1438 = vrot.slane %v1437, 1
    %v1439 = vadd.f32 %v1437, %v1438
    %v1440 = vlog2.pop %v1439
    %v1441 = vmul.f32 %v1440, 0.6931472
    %v1442 = vadd.f32 %v1441, %v1429
    %v1443 = vadd.f32 %v1423, 0.0
    %v1444 = vrot.slane %v1443, 4
    %v1445 = vadd.f32 %v1443, %v1444
    %v1446 = vrot.slane %v1445, 2
    %v1447 = vadd.f32 %v1445, %v1446
    %v1448 = vrot.slane %v1447, 1
    %v1449 = vadd.f32 %v1447, %v1448
    %v1450 = vadd.f32 %v1326, %v1449
    %v1451 = vsel %vm1273, %v1442, 0.0
    %1452 = vadd.xlane.f32.xlu0 %v1451
    %v1453 = vpop.xlane.xlu0 %1452
    %v1454 = vadd.f32 %v1453, 0.0
    %v1455 = vadd.f32 %v1450, %v1454
    %v1456 = vadd.f32 %v1411, 0.0
    %v1457 = vrot.slane %v1456, 4
    %v1458 = vadd.f32 %v1456, %v1457
    %v1459 = vrot.slane %v1458, 2
    %v1460 = vadd.f32 %v1458, %v1459
    %v1461 = vrot.slane %v1460, 1
    %v1462 = vadd.f32 %v1460, %v1461
    %v1463 = vmul.f32 %v1462, 2.0
    %v1464 = vsub.f32 %v1455, %v1463
    %1465 = vrot.lane.b32.xlu0 %v277, 64
    %v1466 = vpop.permute.xlu0 %1465
    %v1467 = vsel %vm940, %v1466, 0
    %1469 = vmatprep.subr.mxu0 0.0
    %1470 = vmatpush1.xpose.msra.mxu0 %v1467
    %1471 = vmatprep.subr.mxu0 0.0
    %1472 = vmatpush1.xpose.msra.mxu0 0.0
    %1473 = vmatprep.subr.mxu0 0.0
    %1474 = vmatpush1.xpose.msra.mxu0 0.0
    %1475 = vmatprep.subr.mxu0 0.0
    %1476 = vmatpush1.xpose.msra.mxu0 0.0
    %1477 = vmatprep.subr.mxu0 0.0
    %1478 = vmatpush1.xpose.msra.mxu0 0.0
    %1479 = vmatprep.subr.mxu0 0.0
    %1480 = vmatpush1.xpose.msra.mxu0 0.0
    %1481 = vmatprep.subr.mxu0 0.0
    %1482 = vmatpush1.xpose.msra.mxu0 0.0
    %1483 = vmatprep.subr.mxu0 0.0
    %1484 = vmatpush1.xpose.msra.mxu0 0.0
    %1485 = vmatprep.subr.mxu0 0.0
    %1486 = vmatpush1.xpose.msra.mxu0 0.0
    %1487 = vmatprep.subr.mxu0 0.0
    %1488 = vmatpush1.xpose.msra.mxu0 0.0
    %1489 = vmatprep.subr.mxu0 0.0
    %1490 = vmatpush1.xpose.msra.mxu0 0.0
    %1491 = vmatprep.subr.mxu0 0.0
    %1492 = vmatpush1.xpose.msra.mxu0 0.0
    %1493 = vmatprep.subr.mxu0 0.0
    %1494 = vmatpush1.xpose.msra.mxu0 0.0
    %1495 = vmatprep.subr.mxu0 0.0
    %1496 = vmatpush1.xpose.msra.mxu0 0.0
    %1497 = vmatprep.subr.mxu0 0.0
    %1498 = vmatpush1.xpose.msra.mxu0 0.0
    %1499 = vmatprep.subr.mxu0 0.0
    %1500 = vmatpush1.xpose.msra.mxu0 0.0
    %1501 = vmatprep.subr.mxu0 0.0
    %1502 = vmatpush1.xpose.msra.mxu0 0.0
    %1503 = vmatprep.subr.mxu0 0.0
    %1504 = vmatpush1.xpose.msra.mxu0 0.0
    %1505 = vmatprep.subr.mxu0 0.0
    %1506 = vmatpush1.xpose.msra.mxu0 0.0
    %1507 = vmatprep.subr.mxu0 0.0
    %1508 = vmatpush1.xpose.msra.mxu0 0.0
    %1509 = vmatprep.subr.mxu0 0.0
    %1510 = vmatpush1.xpose.msra.mxu0 0.0
    %1511 = vmatprep.subr.mxu0 0.0
    %1512 = vmatpush1.xpose.msra.mxu0 0.0
    %1513 = vmatprep.subr.mxu0 0.0
    %1514 = vmatpush1.xpose.msra.mxu0 0.0
    %1515 = vmatprep.subr.mxu0 0.0
    %1516 = vmatpush1.xpose.msra.mxu0 0.0
    %1517 = vmatprep.subr.mxu0 0.0
    %1518 = vmatpush1.xpose.msra.mxu0 0.0
    %1519 = vmatprep.subr.mxu0 0.0
    %1520 = vmatpush1.xpose.msra.mxu0 0.0
    %1521 = vmatprep.subr.mxu0 0.0
    %1522 = vmatpush1.xpose.msra.mxu0 0.0
    %1523 = vmatprep.subr.mxu0 0.0
    %1524 = vmatpush1.xpose.msra.mxu0 0.0
    %1525 = vmatprep.subr.mxu0 0.0
    %1526 = vmatpush1.xpose.msra.mxu0 0.0
    %1527 = vmatprep.subr.mxu0 0.0
    %1528 = vmatpush1.xpose.msra.mxu0 0.0
    %1529 = vmatprep.subr.mxu0 0.0
    %1530 = vmatpush1.xpose.msra.mxu0 0.0
    %1531 = vmatprep.subr.mxu0 0.0
    %1532 = vmatpush1.xpose.msra.mxu0 0.0
    %1533 = vmatprep.mubr.f32.mxu0 0.0
    %1534 = vmatmul.mubr.f32.gmra.mrb[0].mxu0 %v1188
    %v1535 = vpop.f32.mrb[0].mxu0
    %v1536 = vadd.f32 0.0, %v1535
    %v1537 = vpop.f32.mrb[0].mxu0
    %1538 = vdwg.mxu0
    %v1539 = vmul.f32 %v1536, 5.0
    %v1541 = vmul.f32 %v277, %v1328
    %1543 = vrot.lane.b32.xlu0 %v1541, 112
    %v1544 = vpop.permute.xlu0 %1543
    %v1546 = vsel %vm940, %v1544, 0.0
    %1547 = vadd.xlane.f32.xlu0 %v1546
    %v1548 = vpop.xlane.xlu0 %1547
    %v1549 = vmul.f32 %v1548, 5.0
    %v1550 = vsel %vm1273, %v1539, -inf
    %1551 = vmax.xlane.f32.xlu0 %v1550
    %v1552 = vpop.xlane.xlu0 %1551
    %v1553 = vsub.f32 %v1539, %v1552
    %v1554 = vmul.f32 %v1553, 1.442695
    %v1555 = vpow.pop %v1554
    %v1556 = vsel %vm1273, %v1555, 0.0
    %1557 = vadd.xlane.f32.xlu0 %v1556
    %v1558 = vpop.xlane.xlu0 %1557
    %v1559 = vlog2.pop %v1558
    %v1560 = vmul.f32 %v1559, 0.6931472
    %v1561 = vadd.f32 %v1560, %v1552
    %v1562 = vrot.slane %v1550, 4
    %v1563 = vmax.f32 %v1550, %v1562
    %v1564 = vrot.slane %v1563, 2
    %v1565 = vmax.f32 %v1563, %v1564
    %v1566 = vrot.slane %v1565, 1
    %v1567 = vmax.f32 %v1565, %v1566
    %v1568 = vsub.f32 %v1539, %v1567
    %v1569 = vmul.f32 %v1568, 1.442695
    %v1570 = vpow.pop %v1569
    %v1571 = vsel %vm1273, %v1570, 0.0
    %v1572 = vrot.slane %v1571, 4
    %v1573 = vadd.f32 %v1571, %v1572
    %v1574 = vrot.slane %v1573, 2
    %v1575 = vadd.f32 %v1573, %v1574
    %v1576 = vrot.slane %v1575, 1
    %v1577 = vadd.f32 %v1575, %v1576
    %v1578 = vlog2.pop %v1577
    %v1579 = vmul.f32 %v1578, 0.6931472
    %v1580 = vadd.f32 %v1579, %v1567
    %v1581 = vadd.f32 %v1561, 0.0
    %v1582 = vrot.slane %v1581, 4
    %v1583 = vadd.f32 %v1581, %v1582
    %v1584 = vrot.slane %v1583, 2
    %v1585 = vadd.f32 %v1583, %v1584
    %v1586 = vrot.slane %v1585, 1
    %v1587 = vadd.f32 %v1585, %v1586
    %v1588 = vadd.f32 %v1464, %v1587
    %v1589 = vsel %vm1273, %v1580, 0.0
    %1590 = vadd.xlane.f32.xlu0 %v1589
    %v1591 = vpop.xlane.xlu0 %1590
    %v1592 = vadd.f32 %v1591, 0.0
    %v1593 = vadd.f32 %v1588, %v1592
    %v1594 = vadd.f32 %v1549, 0.0
    %v1595 = vrot.slane %v1594, 4
    %v1596 = vadd.f32 %v1594, %v1595
    %v1597 = vrot.slane %v1596, 2
    %v1598 = vadd.f32 %v1596, %v1597
    %v1599 = vrot.slane %v1598, 1
    %v1600 = vadd.f32 %v1598, %v1599
    %v1601 = vmul.f32 %v1600, 2.0
    %v1602 = vsub.f32 %v1593, %v1601
    %1603 = vrot.lane.b32.xlu0 %v277, 48
    %v1604 = vpop.permute.xlu0 %1603
    %v1605 = vsel %vm940, %v1604, 0
    %1607 = vmatprep.subr.mxu0 0.0
    %1608 = vmatpush1.xpose.msra.mxu0 %v1605
    %1609 = vmatprep.subr.mxu0 0.0
    %1610 = vmatpush1.xpose.msra.mxu0 0.0
    %1611 = vmatprep.subr.mxu0 0.0
    %1612 = vmatpush1.xpose.msra.mxu0 0.0
    %1613 = vmatprep.subr.mxu0 0.0
    %1614 = vmatpush1.xpose.msra.mxu0 0.0
    %1615 = vmatprep.subr.mxu0 0.0
    %1616 = vmatpush1.xpose.msra.mxu0 0.0
    %1617 = vmatprep.subr.mxu0 0.0
    %1618 = vmatpush1.xpose.msra.mxu0 0.0
    %1619 = vmatprep.subr.mxu0 0.0
    %1620 = vmatpush1.xpose.msra.mxu0 0.0
    %1621 = vmatprep.subr.mxu0 0.0
    %1622 = vmatpush1.xpose.msra.mxu0 0.0
    %1623 = vmatprep.subr.mxu0 0.0
    %1624 = vmatpush1.xpose.msra.mxu0 0.0
    %1625 = vmatprep.subr.mxu0 0.0
    %1626 = vmatpush1.xpose.msra.mxu0 0.0
    %1627 = vmatprep.subr.mxu0 0.0
    %1628 = vmatpush1.xpose.msra.mxu0 0.0
    %1629 = vmatprep.subr.mxu0 0.0
    %1630 = vmatpush1.xpose.msra.mxu0 0.0
    %1631 = vmatprep.subr.mxu0 0.0
    %1632 = vmatpush1.xpose.msra.mxu0 0.0
    %1633 = vmatprep.subr.mxu0 0.0
    %1634 = vmatpush1.xpose.msra.mxu0 0.0
    %1635 = vmatprep.subr.mxu0 0.0
    %1636 = vmatpush1.xpose.msra.mxu0 0.0
    %1637 = vmatprep.subr.mxu0 0.0
    %1638 = vmatpush1.xpose.msra.mxu0 0.0
    %1639 = vmatprep.subr.mxu0 0.0
    %1640 = vmatpush1.xpose.msra.mxu0 0.0
    %1641 = vmatprep.subr.mxu0 0.0
    %1642 = vmatpush1.xpose.msra.mxu0 0.0
    %1643 = vmatprep.subr.mxu0 0.0
    %1644 = vmatpush1.xpose.msra.mxu0 0.0
    %1645 = vmatprep.subr.mxu0 0.0
    %1646 = vmatpush1.xpose.msra.mxu0 0.0
    %1647 = vmatprep.subr.mxu0 0.0
    %1648 = vmatpush1.xpose.msra.mxu0 0.0
    %1649 = vmatprep.subr.mxu0 0.0
    %1650 = vmatpush1.xpose.msra.mxu0 0.0
    %1651 = vmatprep.subr.mxu0 0.0
    %1652 = vmatpush1.xpose.msra.mxu0 0.0
    %1653 = vmatprep.subr.mxu0 0.0
    %1654 = vmatpush1.xpose.msra.mxu0 0.0
    %1655 = vmatprep.subr.mxu0 0.0
    %1656 = vmatpush1.xpose.msra.mxu0 0.0
    %1657 = vmatprep.subr.mxu0 0.0
    %1658 = vmatpush1.xpose.msra.mxu0 0.0
    %1659 = vmatprep.subr.mxu0 0.0
    %1660 = vmatpush1.xpose.msra.mxu0 0.0
    %1661 = vmatprep.subr.mxu0 0.0
    %1662 = vmatpush1.xpose.msra.mxu0 0.0
    %1663 = vmatprep.subr.mxu0 0.0
    %1664 = vmatpush1.xpose.msra.mxu0 0.0
    %1665 = vmatprep.subr.mxu0 0.0
    %1666 = vmatpush1.xpose.msra.mxu0 0.0
    %1667 = vmatprep.subr.mxu0 0.0
    %1668 = vmatpush1.xpose.msra.mxu0 0.0
    %1669 = vmatprep.subr.mxu0 0.0
    %1670 = vmatpush1.xpose.msra.mxu0 0.0
    %1671 = vmatprep.mubr.f32.mxu0 0.0
    %1672 = vmatmul.mubr.f32.gmra.mrb[0].mxu0 %v1188
    %v1673 = vpop.f32.mrb[0].mxu0
    %v1674 = vadd.f32 0.0, %v1673
    %v1675 = vpop.f32.mrb[0].mxu0
    %1676 = vdwg.mxu0
    %v1677 = vmul.f32 %v1674, 5.0
    %v1679 = vmul.f32 %v277, %v1466
    %1681 = vrot.lane.b32.xlu0 %v1679, 112
    %v1682 = vpop.permute.xlu0 %1681
    %v1684 = vsel %vm940, %v1682, 0.0
    %1685 = vadd.xlane.f32.xlu0 %v1684
    %v1686 = vpop.xlane.xlu0 %1685
    %v1687 = vmul.f32 %v1686, 5.0
    %v1688 = vsel %vm1273, %v1677, -inf
    %1689 = vmax.xlane.f32.xlu0 %v1688
    %v1690 = vpop.xlane.xlu0 %1689
    %v1691 = vsub.f32 %v1677, %v1690
    %v1692 = vmul.f32 %v1691, 1.442695
    %v1693 = vpow.pop %v1692
    %v1694 = vsel %vm1273, %v1693, 0.0
    %1695 = vadd.xlane.f32.xlu0 %v1694
    %v1696 = vpop.xlane.xlu0 %1695
    %v1697 = vlog2.pop %v1696
    %v1698 = vmul.f32 %v1697, 0.6931472
    %v1699 = vadd.f32 %v1698, %v1690
    %v1700 = vrot.slane %v1688, 4
    %v1701 = vmax.f32 %v1688, %v1700
    %v1702 = vrot.slane %v1701, 2
    %v1703 = vmax.f32 %v1701, %v1702
    %v1704 = vrot.slane %v1703, 1
    %v1705 = vmax.f32 %v1703, %v1704
    %v1706 = vsub.f32 %v1677, %v1705
    %v1707 = vmul.f32 %v1706, 1.442695
    %v1708 = vpow.pop %v1707
    %v1709 = vsel %vm1273, %v1708, 0.0
    %v1710 = vrot.slane %v1709, 4
    %v1711 = vadd.f32 %v1709, %v1710
    %v1712 = vrot.slane %v1711, 2
    %v1713 = vadd.f32 %v1711, %v1712
    %v1714 = vrot.slane %v1713, 1
    %v1715 = vadd.f32 %v1713, %v1714
    %v1716 = vlog2.pop %v1715
    %v1717 = vmul.f32 %v1716, 0.6931472
    %v1718 = vadd.f32 %v1717, %v1705
    %v1719 = vadd.f32 %v1699, 0.0
    %v1720 = vrot.slane %v1719, 4
    %v1721 = vadd.f32 %v1719, %v1720
    %v1722 = vrot.slane %v1721, 2
    %v1723 = vadd.f32 %v1721, %v1722
    %v1724 = vrot.slane %v1723, 1
    %v1725 = vadd.f32 %v1723, %v1724
    %v1726 = vadd.f32 %v1602, %v1725
    %v1727 = vsel %vm1273, %v1718, 0.0
    %1728 = vadd.xlane.f32.xlu0 %v1727
    %v1729 = vpop.xlane.xlu0 %1728
    %v1730 = vadd.f32 %v1729, 0.0
    %v1731 = vadd.f32 %v1726, %v1730
    %v1732 = vadd.f32 %v1687, 0.0
    %v1733 = vrot.slane %v1732, 4
    %v1734 = vadd.f32 %v1732, %v1733
    %v1735 = vrot.slane %v1734, 2
    %v1736 = vadd.f32 %v1734, %v1735
    %v1737 = vrot.slane %v1736, 1
    %v1738 = vadd.f32 %v1736, %v1737
    %v1739 = vmul.f32 %v1738, 2.0
    %v1740 = vsub.f32 %v1731, %v1739
    %1741 = vrot.lane.b32.xlu0 %v277, 32
    %v1742 = vpop.permute.xlu0 %1741
    %v1743 = vsel %vm940, %v1742, 0
    %1745 = vmatprep.subr.mxu0 0.0
    %1746 = vmatpush1.xpose.msra.mxu0 %v1743
    %1747 = vmatprep.subr.mxu0 0.0
    %1748 = vmatpush1.xpose.msra.mxu0 0.0
    %1749 = vmatprep.subr.mxu0 0.0
    %1750 = vmatpush1.xpose.msra.mxu0 0.0
    %1751 = vmatprep.subr.mxu0 0.0
    %1752 = vmatpush1.xpose.msra.mxu0 0.0
    %1753 = vmatprep.subr.mxu0 0.0
    %1754 = vmatpush1.xpose.msra.mxu0 0.0
    %1755 = vmatprep.subr.mxu0 0.0
    %1756 = vmatpush1.xpose.msra.mxu0 0.0
    %1757 = vmatprep.subr.mxu0 0.0
    %1758 = vmatpush1.xpose.msra.mxu0 0.0
    %1759 = vmatprep.subr.mxu0 0.0
    %1760 = vmatpush1.xpose.msra.mxu0 0.0
    %1761 = vmatprep.subr.mxu0 0.0
    %1762 = vmatpush1.xpose.msra.mxu0 0.0
    %1763 = vmatprep.subr.mxu0 0.0
    %1764 = vmatpush1.xpose.msra.mxu0 0.0
    %1765 = vmatprep.subr.mxu0 0.0
    %1766 = vmatpush1.xpose.msra.mxu0 0.0
    %1767 = vmatprep.subr.mxu0 0.0
    %1768 = vmatpush1.xpose.msra.mxu0 0.0
    %1769 = vmatprep.subr.mxu0 0.0
    %1770 = vmatpush1.xpose.msra.mxu0 0.0
    %1771 = vmatprep.subr.mxu0 0.0
    %1772 = vmatpush1.xpose.msra.mxu0 0.0
    %1773 = vmatprep.subr.mxu0 0.0
    %1774 = vmatpush1.xpose.msra.mxu0 0.0
    %1775 = vmatprep.subr.mxu0 0.0
    %1776 = vmatpush1.xpose.msra.mxu0 0.0
    %1777 = vmatprep.subr.mxu0 0.0
    %1778 = vmatpush1.xpose.msra.mxu0 0.0
    %1779 = vmatprep.subr.mxu0 0.0
    %1780 = vmatpush1.xpose.msra.mxu0 0.0
    %1781 = vmatprep.subr.mxu0 0.0
    %1782 = vmatpush1.xpose.msra.mxu0 0.0
    %1783 = vmatprep.subr.mxu0 0.0
    %1784 = vmatpush1.xpose.msra.mxu0 0.0
    %1785 = vmatprep.subr.mxu0 0.0
    %1786 = vmatpush1.xpose.msra.mxu0 0.0
    %1787 = vmatprep.subr.mxu0 0.0
    %1788 = vmatpush1.xpose.msra.mxu0 0.0
    %1789 = vmatprep.subr.mxu0 0.0
    %1790 = vmatpush1.xpose.msra.mxu0 0.0
    %1791 = vmatprep.subr.mxu0 0.0
    %1792 = vmatpush1.xpose.msra.mxu0 0.0
    %1793 = vmatprep.subr.mxu0 0.0
    %1794 = vmatpush1.xpose.msra.mxu0 0.0
    %1795 = vmatprep.subr.mxu0 0.0
    %1796 = vmatpush1.xpose.msra.mxu0 0.0
    %1797 = vmatprep.subr.mxu0 0.0
    %1798 = vmatpush1.xpose.msra.mxu0 0.0
    %1799 = vmatprep.subr.mxu0 0.0
    %1800 = vmatpush1.xpose.msra.mxu0 0.0
    %1801 = vmatprep.subr.mxu0 0.0
    %1802 = vmatpush1.xpose.msra.mxu0 0.0
    %1803 = vmatprep.subr.mxu0 0.0
    %1804 = vmatpush1.xpose.msra.mxu0 0.0
    %1805 = vmatprep.subr.mxu0 0.0
    %1806 = vmatpush1.xpose.msra.mxu0 0.0
    %1807 = vmatprep.subr.mxu0 0.0
    %1808 = vmatpush1.xpose.msra.mxu0 0.0
    %1809 = vmatprep.mubr.f32.mxu0 0.0
    %1810 = vmatmul.mubr.f32.gmra.mrb[0].mxu0 %v1188
    %v1811 = vpop.f32.mrb[0].mxu0
    %v1812 = vadd.f32 0.0, %v1811
    %v1813 = vpop.f32.mrb[0].mxu0
    %1814 = vdwg.mxu0
    %v1815 = vmul.f32 %v1812, 5.0
    %v1817 = vmul.f32 %v277, %v1604
    %1819 = vrot.lane.b32.xlu0 %v1817, 112
    %v1820 = vpop.permute.xlu0 %1819
    %v1822 = vsel %vm940, %v1820, 0.0
    %1823 = vadd.xlane.f32.xlu0 %v1822
    %v1824 = vpop.xlane.xlu0 %1823
    %v1825 = vmul.f32 %v1824, 5.0
    %v1826 = vsel %vm1273, %v1815, -inf
    %1827 = vmax.xlane.f32.xlu0 %v1826
    %v1828 = vpop.xlane.xlu0 %1827
    %v1829 = vsub.f32 %v1815, %v1828
    %v1830 = vmul.f32 %v1829, 1.442695
    %v1831 = vpow.pop %v1830
    %v1832 = vsel %vm1273, %v1831, 0.0
    %1833 = vadd.xlane.f32.xlu0 %v1832
    %v1834 = vpop.xlane.xlu0 %1833
    %v1835 = vlog2.pop %v1834
    %v1836 = vmul.f32 %v1835, 0.6931472
    %v1837 = vadd.f32 %v1836, %v1828
    %v1838 = vrot.slane %v1826, 4
    %v1839 = vmax.f32 %v1826, %v1838
    %v1840 = vrot.slane %v1839, 2
    %v1841 = vmax.f32 %v1839, %v1840
    %v1842 = vrot.slane %v1841, 1
    %v1843 = vmax.f32 %v1841, %v1842
    %v1844 = vsub.f32 %v1815, %v1843
    %v1845 = vmul.f32 %v1844, 1.442695
    %v1846 = vpow.pop %v1845
    %v1847 = vsel %vm1273, %v1846, 0.0
    %v1848 = vrot.slane %v1847, 4
    %v1849 = vadd.f32 %v1847, %v1848
    %v1850 = vrot.slane %v1849, 2
    %v1851 = vadd.f32 %v1849, %v1850
    %v1852 = vrot.slane %v1851, 1
    %v1853 = vadd.f32 %v1851, %v1852
    %v1854 = vlog2.pop %v1853
    %v1855 = vmul.f32 %v1854, 0.6931472
    %v1856 = vadd.f32 %v1855, %v1843
    %v1857 = vadd.f32 %v1837, 0.0
    %v1858 = vrot.slane %v1857, 4
    %v1859 = vadd.f32 %v1857, %v1858
    %v1860 = vrot.slane %v1859, 2
    %v1861 = vadd.f32 %v1859, %v1860
    %v1862 = vrot.slane %v1861, 1
    %v1863 = vadd.f32 %v1861, %v1862
    %v1864 = vadd.f32 %v1740, %v1863
    %v1865 = vsel %vm1273, %v1856, 0.0
    %1866 = vadd.xlane.f32.xlu0 %v1865
    %v1867 = vpop.xlane.xlu0 %1866
    %v1868 = vadd.f32 %v1867, 0.0
    %v1869 = vadd.f32 %v1864, %v1868
    %v1870 = vadd.f32 %v1825, 0.0
    %v1871 = vrot.slane %v1870, 4
    %v1872 = vadd.f32 %v1870, %v1871
    %v1873 = vrot.slane %v1872, 2
    %v1874 = vadd.f32 %v1872, %v1873
    %v1875 = vrot.slane %v1874, 1
    %v1876 = vadd.f32 %v1874, %v1875
    %v1877 = vmul.f32 %v1876, 2.0
    %v1878 = vsub.f32 %v1869, %v1877
    %1879 = vmatprep.subr.mxu0 0.0
    %1880 = vmatpush1.xpose.msra.mxu0 %v1329
    %1881 = vmatprep.subr.mxu0 0.0
    %1882 = vmatpush1.xpose.msra.mxu0 0.0
    %1883 = vmatprep.subr.mxu0 0.0
    %1884 = vmatpush1.xpose.msra.mxu0 0.0
    %1885 = vmatprep.subr.mxu0 0.0
    %1886 = vmatpush1.xpose.msra.mxu0 0.0
    %1887 = vmatprep.subr.mxu0 0.0
    %1888 = vmatpush1.xpose.msra.mxu0 0.0
    %1889 = vmatprep.subr.mxu0 0.0
    %1890 = vmatpush1.xpose.msra.mxu0 0.0
    %1891 = vmatprep.subr.mxu0 0.0
    %1892 = vmatpush1.xpose.msra.mxu0 0.0
    %1893 = vmatprep.subr.mxu0 0.0
    %1894 = vmatpush1.xpose.msra.mxu0 0.0
    %1895 = vmatprep.subr.mxu0 0.0
    %1896 = vmatpush1.xpose.msra.mxu0 0.0
    %1897 = vmatprep.subr.mxu0 0.0
    %1898 = vmatpush1.xpose.msra.mxu0 0.0
    %1899 = vmatprep.subr.mxu0 0.0
    %1900 = vmatpush1.xpose.msra.mxu0 0.0
    %1901 = vmatprep.subr.mxu0 0.0
    %1902 = vmatpush1.xpose.msra.mxu0 0.0
    %1903 = vmatprep.subr.mxu0 0.0
    %1904 = vmatpush1.xpose.msra.mxu0 0.0
    %1905 = vmatprep.subr.mxu0 0.0
    %1906 = vmatpush1.xpose.msra.mxu0 0.0
    %1907 = vmatprep.subr.mxu0 0.0
    %1908 = vmatpush1.xpose.msra.mxu0 0.0
    %1909 = vmatprep.subr.mxu0 0.0
    %1910 = vmatpush1.xpose.msra.mxu0 0.0
    %1911 = vmatprep.subr.mxu0 0.0
    %1912 = vmatpush1.xpose.msra.mxu0 0.0
    %1913 = vmatprep.subr.mxu0 0.0
    %1914 = vmatpush1.xpose.msra.mxu0 0.0
    %1915 = vmatprep.subr.mxu0 0.0
    %1916 = vmatpush1.xpose.msra.mxu0 0.0
    %1917 = vmatprep.subr.mxu0 0.0
    %1918 = vmatpush1.xpose.msra.mxu0 0.0
    %1919 = vmatprep.subr.mxu0 0.0
    %1920 = vmatpush1.xpose.msra.mxu0 0.0
    %1921 = vmatprep.subr.mxu0 0.0
    %1922 = vmatpush1.xpose.msra.mxu0 0.0
    %1923 = vmatprep.subr.mxu0 0.0
    %1924 = vmatpush1.xpose.msra.mxu0 0.0
    %1925 = vmatprep.subr.mxu0 0.0
    %1926 = vmatpush1.xpose.msra.mxu0 0.0
    %1927 = vmatprep.subr.mxu0 0.0
    %1928 = vmatpush1.xpose.msra.mxu0 0.0
    %1929 = vmatprep.subr.mxu0 0.0
    %1930 = vmatpush1.xpose.msra.mxu0 0.0
    %1931 = vmatprep.subr.mxu0 0.0
    %1932 = vmatpush1.xpose.msra.mxu0 0.0
    %1933 = vmatprep.subr.mxu0 0.0
    %1934 = vmatpush1.xpose.msra.mxu0 0.0
    %1935 = vmatprep.subr.mxu0 0.0
    %1936 = vmatpush1.xpose.msra.mxu0 0.0
    %1937 = vmatprep.subr.mxu0 0.0
    %1938 = vmatpush1.xpose.msra.mxu0 0.0
    %1939 = vmatprep.subr.mxu0 0.0
    %1940 = vmatpush1.xpose.msra.mxu0 0.0
    %1941 = vmatprep.subr.mxu0 0.0
    %1942 = vmatpush1.xpose.msra.mxu0 0.0
    %1943 = vmatprep.mubr.f32.mxu0 0.0
    %1944 = vmatmul.mubr.f32.gmra.mrb[0].mxu0 %v1190
    %v1945 = vpop.f32.mrb[0].mxu0
    %v1946 = vadd.f32 0.0, %v1945
    %v1947 = vpop.f32.mrb[0].mxu0
    %1948 = vdwg.mxu0
    %v1949 = vmul.f32 %v1946, 5.0
    %1950 = vrot.lane.b32.xlu0 %v1264, 96
    %v1951 = vpop.permute.xlu0 %1950
    %v1953 = vsel %vm940, %v1951, 0.0
    %1954 = vadd.xlane.f32.xlu0 %v1953
    %v1955 = vpop.xlane.xlu0 %1954
    %v1956 = vmul.f32 %v1955, 5.0
    %v1957 = vsel %vm1273, %v1949, -inf
    %1958 = vmax.xlane.f32.xlu0 %v1957
    %v1959 = vpop.xlane.xlu0 %1958
    %v1960 = vsub.f32 %v1949, %v1959
    %v1961 = vmul.f32 %v1960, 1.442695
    %v1962 = vpow.pop %v1961
    %v1963 = vsel %vm1273, %v1962, 0.0
    %1964 = vadd.xlane.f32.xlu0 %v1963
    %v1965 = vpop.xlane.xlu0 %1964
    %v1966 = vlog2.pop %v1965
    %v1967 = vmul.f32 %v1966, 0.6931472
    %v1968 = vadd.f32 %v1967, %v1959
    %v1969 = vrot.slane %v1957, 4
    %v1970 = vmax.f32 %v1957, %v1969
    %v1971 = vrot.slane %v1970, 2
    %v1972 = vmax.f32 %v1970, %v1971
    %v1973 = vrot.slane %v1972, 1
    %v1974 = vmax.f32 %v1972, %v1973
    %v1975 = vsub.f32 %v1949, %v1974
    %v1976 = vmul.f32 %v1975, 1.442695
    %v1977 = vpow.pop %v1976
    %v1978 = vsel %vm1273, %v1977, 0.0
    %v1979 = vrot.slane %v1978, 4
    %v1980 = vadd.f32 %v1978, %v1979
    %v1981 = vrot.slane %v1980, 2
    %v1982 = vadd.f32 %v1980, %v1981
    %v1983 = vrot.slane %v1982, 1
    %v1984 = vadd.f32 %v1982, %v1983
    %v1985 = vlog2.pop %v1984
    %v1986 = vmul.f32 %v1985, 0.6931472
    %v1987 = vadd.f32 %v1986, %v1974
    %v1988 = vadd.f32 %v1968, 0.0
    %v1989 = vrot.slane %v1988, 4
    %v1990 = vadd.f32 %v1988, %v1989
    %v1991 = vrot.slane %v1990, 2
    %v1992 = vadd.f32 %v1990, %v1991
    %v1993 = vrot.slane %v1992, 1
    %v1994 = vadd.f32 %v1992, %v1993
    %v1995 = vadd.f32 %v1878, %v1994
    %v1996 = vsel %vm1273, %v1987, 0.0
    %1997 = vadd.xlane.f32.xlu0 %v1996
    %v1998 = vpop.xlane.xlu0 %1997
    %v1999 = vadd.f32 %v1998, 0.0
    %v2000 = vadd.f32 %v1995, %v1999
    %v2001 = vadd.f32 %v1956, 0.0
    %v2002 = vrot.slane %v2001, 4
    %v2003 = vadd.f32 %v2001, %v2002
    %v2004 = vrot.slane %v2003, 2
    %v2005 = vadd.f32 %v2003, %v2004
    %v2006 = vrot.slane %v2005, 1
    %v2007 = vadd.f32 %v2005, %v2006
    %v2008 = vmul.f32 %v2007, 2.0
    %v2009 = vsub.f32 %v2000, %v2008
    %2010 = vmatprep.subr.mxu0 0.0
    %2011 = vmatpush1.xpose.msra.mxu0 %v1467
    %2012 = vmatprep.subr.mxu0 0.0
    %2013 = vmatpush1.xpose.msra.mxu0 0.0
    %2014 = vmatprep.subr.mxu0 0.0
    %2015 = vmatpush1.xpose.msra.mxu0 0.0
    %2016 = vmatprep.subr.mxu0 0.0
    %2017 = vmatpush1.xpose.msra.mxu0 0.0
    %2018 = vmatprep.subr.mxu0 0.0
    %2019 = vmatpush1.xpose.msra.mxu0 0.0
    %2020 = vmatprep.subr.mxu0 0.0
    %2021 = vmatpush1.xpose.msra.mxu0 0.0
    %2022 = vmatprep.subr.mxu0 0.0
    %2023 = vmatpush1.xpose.msra.mxu0 0.0
    %2024 = vmatprep.subr.mxu0 0.0
    %2025 = vmatpush1.xpose.msra.mxu0 0.0
    %2026 = vmatprep.subr.mxu0 0.0
    %2027 = vmatpush1.xpose.msra.mxu0 0.0
    %2028 = vmatprep.subr.mxu0 0.0
    %2029 = vmatpush1.xpose.msra.mxu0 0.0
    %2030 = vmatprep.subr.mxu0 0.0
    %2031 = vmatpush1.xpose.msra.mxu0 0.0
    %2032 = vmatprep.subr.mxu0 0.0
    %2033 = vmatpush1.xpose.msra.mxu0 0.0
    %2034 = vmatprep.subr.mxu0 0.0
    %2035 = vmatpush1.xpose.msra.mxu0 0.0
    %2036 = vmatprep.subr.mxu0 0.0
    %2037 = vmatpush1.xpose.msra.mxu0 0.0
    %2038 = vmatprep.subr.mxu0 0.0
    %2039 = vmatpush1.xpose.msra.mxu0 0.0
    %2040 = vmatprep.subr.mxu0 0.0
    %2041 = vmatpush1.xpose.msra.mxu0 0.0
    %2042 = vmatprep.subr.mxu0 0.0
    %2043 = vmatpush1.xpose.msra.mxu0 0.0
    %2044 = vmatprep.subr.mxu0 0.0
    %2045 = vmatpush1.xpose.msra.mxu0 0.0
    %2046 = vmatprep.subr.mxu0 0.0
    %2047 = vmatpush1.xpose.msra.mxu0 0.0
    %2048 = vmatprep.subr.mxu0 0.0
    %2049 = vmatpush1.xpose.msra.mxu0 0.0
    %2050 = vmatprep.subr.mxu0 0.0
    %2051 = vmatpush1.xpose.msra.mxu0 0.0
    %2052 = vmatprep.subr.mxu0 0.0
    %2053 = vmatpush1.xpose.msra.mxu0 0.0
    %2054 = vmatprep.subr.mxu0 0.0
    %2055 = vmatpush1.xpose.msra.mxu0 0.0
    %2056 = vmatprep.subr.mxu0 0.0
    %2057 = vmatpush1.xpose.msra.mxu0 0.0
    %2058 = vmatprep.subr.mxu0 0.0
    %2059 = vmatpush1.xpose.msra.mxu0 0.0
    %2060 = vmatprep.subr.mxu0 0.0
    %2061 = vmatpush1.xpose.msra.mxu0 0.0
    %2062 = vmatprep.subr.mxu0 0.0
    %2063 = vmatpush1.xpose.msra.mxu0 0.0
    %2064 = vmatprep.subr.mxu0 0.0
    %2065 = vmatpush1.xpose.msra.mxu0 0.0
    %2066 = vmatprep.subr.mxu0 0.0
    %2067 = vmatpush1.xpose.msra.mxu0 0.0
    %2068 = vmatprep.subr.mxu0 0.0
    %2069 = vmatpush1.xpose.msra.mxu0 0.0
    %2070 = vmatprep.subr.mxu0 0.0
    %2071 = vmatpush1.xpose.msra.mxu0 0.0
    %2072 = vmatprep.subr.mxu0 0.0
    %2073 = vmatpush1.xpose.msra.mxu0 0.0
    %2074 = vmatprep.mubr.f32.mxu0 0.0
    %2075 = vmatmul.mubr.f32.gmra.mrb[0].mxu0 %v1190
    %v2076 = vpop.f32.mrb[0].mxu0
    %v2077 = vadd.f32 0.0, %v2076
    %v2078 = vpop.f32.mrb[0].mxu0
    %2079 = vdwg.mxu0
    %v2080 = vmul.f32 %v2077, 5.0
    %2081 = vrot.lane.b32.xlu0 %v1403, 96
    %v2082 = vpop.permute.xlu0 %2081
    %v2084 = vsel %vm940, %v2082, 0.0
    %2085 = vadd.xlane.f32.xlu0 %v2084
    %v2086 = vpop.xlane.xlu0 %2085
    %v2087 = vmul.f32 %v2086, 5.0
    %v2088 = vsel %vm1273, %v2080, -inf
    %2089 = vmax.xlane.f32.xlu0 %v2088
    %v2090 = vpop.xlane.xlu0 %2089
    %v2091 = vsub.f32 %v2080, %v2090
    %v2092 = vmul.f32 %v2091, 1.442695
    %v2093 = vpow.pop %v2092
    %v2094 = vsel %vm1273, %v2093, 0.0
    %2095 = vadd.xlane.f32.xlu0 %v2094
    %v2096 = vpop.xlane.xlu0 %2095
    %v2097 = vlog2.pop %v2096
    %v2098 = vmul.f32 %v2097, 0.6931472
    %v2099 = vadd.f32 %v2098, %v2090
    %v2100 = vrot.slane %v2088, 4
    %v2101 = vmax.f32 %v2088, %v2100
    %v2102 = vrot.slane %v2101, 2
    %v2103 = vmax.f32 %v2101, %v2102
    %v2104 = vrot.slane %v2103, 1
    %v2105 = vmax.f32 %v2103, %v2104
    %v2106 = vsub.f32 %v2080, %v2105
    %v2107 = vmul.f32 %v2106, 1.442695
    %v2108 = vpow.pop %v2107
    %v2109 = vsel %vm1273, %v2108, 0.0
    %v2110 = vrot.slane %v2109, 4
    %v2111 = vadd.f32 %v2109, %v2110
    %v2112 = vrot.slane %v2111, 2
    %v2113 = vadd.f32 %v2111, %v2112
    %v2114 = vrot.slane %v2113, 1
    %v2115 = vadd.f32 %v2113, %v2114
    %v2116 = vlog2.pop %v2115
    %v2117 = vmul.f32 %v2116, 0.6931472
    %v2118 = vadd.f32 %v2117, %v2105
    %v2119 = vadd.f32 %v2099, 0.0
    %v2120 = vrot.slane %v2119, 4
    %v2121 = vadd.f32 %v2119, %v2120
    %v2122 = vrot.slane %v2121, 2
    %v2123 = vadd.f32 %v2121, %v2122
    %v2124 = vrot.slane %v2123, 1
    %v2125 = vadd.f32 %v2123, %v2124
    %v2126 = vadd.f32 %v2009, %v2125
    %v2127 = vsel %vm1273, %v2118, 0.0
    %2128 = vadd.xlane.f32.xlu0 %v2127
    %v2129 = vpop.xlane.xlu0 %2128
    %v2130 = vadd.f32 %v2129, 0.0
    %v2131 = vadd.f32 %v2126, %v2130
    %v2132 = vadd.f32 %v2087, 0.0
    %v2133 = vrot.slane %v2132, 4
    %v2134 = vadd.f32 %v2132, %v2133
    %v2135 = vrot.slane %v2134, 2
    %v2136 = vadd.f32 %v2134, %v2135
    %v2137 = vrot.slane %v2136, 1
    %v2138 = vadd.f32 %v2136, %v2137
    %v2139 = vmul.f32 %v2138, 2.0
    %v2140 = vsub.f32 %v2131, %v2139
    %2141 = vmatprep.subr.mxu0 0.0
    %2142 = vmatpush1.xpose.msra.mxu0 %v1605
    %2143 = vmatprep.subr.mxu0 0.0
    %2144 = vmatpush1.xpose.msra.mxu0 0.0
    %2145 = vmatprep.subr.mxu0 0.0
    %2146 = vmatpush1.xpose.msra.mxu0 0.0
    %2147 = vmatprep.subr.mxu0 0.0
    %2148 = vmatpush1.xpose.msra.mxu0 0.0
    %2149 = vmatprep.subr.mxu0 0.0
    %2150 = vmatpush1.xpose.msra.mxu0 0.0
    %2151 = vmatprep.subr.mxu0 0.0
    %2152 = vmatpush1.xpose.msra.mxu0 0.0
    %2153 = vmatprep.subr.mxu0 0.0
    %2154 = vmatpush1.xpose.msra.mxu0 0.0
    %2155 = vmatprep.subr.mxu0 0.0
    %2156 = vmatpush1.xpose.msra.mxu0 0.0
    %2157 = vmatprep.subr.mxu0 0.0
    %2158 = vmatpush1.xpose.msra.mxu0 0.0
    %2159 = vmatprep.subr.mxu0 0.0
    %2160 = vmatpush1.xpose.msra.mxu0 0.0
    %2161 = vmatprep.subr.mxu0 0.0
    %2162 = vmatpush1.xpose.msra.mxu0 0.0
    %2163 = vmatprep.subr.mxu0 0.0
    %2164 = vmatpush1.xpose.msra.mxu0 0.0
    %2165 = vmatprep.subr.mxu0 0.0
    %2166 = vmatpush1.xpose.msra.mxu0 0.0
    %2167 = vmatprep.subr.mxu0 0.0
    %2168 = vmatpush1.xpose.msra.mxu0 0.0
    %2169 = vmatprep.subr.mxu0 0.0
    %2170 = vmatpush1.xpose.msra.mxu0 0.0
    %2171 = vmatprep.subr.mxu0 0.0
    %2172 = vmatpush1.xpose.msra.mxu0 0.0
    %2173 = vmatprep.subr.mxu0 0.0
    %2174 = vmatpush1.xpose.msra.mxu0 0.0
    %2175 = vmatprep.subr.mxu0 0.0
    %2176 = vmatpush1.xpose.msra.mxu0 0.0
    %2177 = vmatprep.subr.mxu0 0.0
    %2178 = vmatpush1.xpose.msra.mxu0 0.0
    %2179 = vmatprep.subr.mxu0 0.0
    %2180 = vmatpush1.xpose.msra.mxu0 0.0
    %2181 = vmatprep.subr.mxu0 0.0
    %2182 = vmatpush1.xpose.msra.mxu0 0.0
    %2183 = vmatprep.subr.mxu0 0.0
    %2184 = vmatpush1.xpose.msra.mxu0 0.0
    %2185 = vmatprep.subr.mxu0 0.0
    %2186 = vmatpush1.xpose.msra.mxu0 0.0
    %2187 = vmatprep.subr.mxu0 0.0
    %2188 = vmatpush1.xpose.msra.mxu0 0.0
    %2189 = vmatprep.subr.mxu0 0.0
    %2190 = vmatpush1.xpose.msra.mxu0 0.0
    %2191 = vmatprep.subr.mxu0 0.0
    %2192 = vmatpush1.xpose.msra.mxu0 0.0
    %2193 = vmatprep.subr.mxu0 0.0
    %2194 = vmatpush1.xpose.msra.mxu0 0.0
    %2195 = vmatprep.subr.mxu0 0.0
    %2196 = vmatpush1.xpose.msra.mxu0 0.0
    %2197 = vmatprep.subr.mxu0 0.0
    %2198 = vmatpush1.xpose.msra.mxu0 0.0
    %2199 = vmatprep.subr.mxu0 0.0
    %2200 = vmatpush1.xpose.msra.mxu0 0.0
    %2201 = vmatprep.subr.mxu0 0.0
    %2202 = vmatpush1.xpose.msra.mxu0 0.0
    %2203 = vmatprep.subr.mxu0 0.0
    %2204 = vmatpush1.xpose.msra.mxu0 0.0
    %2205 = vmatprep.mubr.f32.mxu0 0.0
    %2206 = vmatmul.mubr.f32.gmra.mrb[0].mxu0 %v1190
    %v2207 = vpop.f32.mrb[0].mxu0
    %v2208 = vadd.f32 0.0, %v2207
    %v2209 = vpop.f32.mrb[0].mxu0
    %2210 = vdwg.mxu0
    %v2211 = vmul.f32 %v2208, 5.0
    %2212 = vrot.lane.b32.xlu0 %v1541, 96
    %v2213 = vpop.permute.xlu0 %2212
    %v2215 = vsel %vm940, %v2213, 0.0
    %2216 = vadd.xlane.f32.xlu0 %v2215
    %v2217 = vpop.xlane.xlu0 %2216
    %v2218 = vmul.f32 %v2217, 5.0
    %v2219 = vsel %vm1273, %v2211, -inf
    %2220 = vmax.xlane.f32.xlu0 %v2219
    %v2221 = vpop.xlane.xlu0 %2220
    %v2222 = vsub.f32 %v2211, %v2221
    %v2223 = vmul.f32 %v2222, 1.442695
    %v2224 = vpow.pop %v2223
    %v2225 = vsel %vm1273, %v2224, 0.0
    %2226 = vadd.xlane.f32.xlu0 %v2225
    %v2227 = vpop.xlane.xlu0 %2226
    %v2228 = vlog2.pop %v2227
    %v2229 = vmul.f32 %v2228, 0.6931472
    %v2230 = vadd.f32 %v2229, %v2221
    %v2231 = vrot.slane %v2219, 4
    %v2232 = vmax.f32 %v2219, %v2231
    %v2233 = vrot.slane %v2232, 2
    %v2234 = vmax.f32 %v2232, %v2233
    %v2235 = vrot.slane %v2234, 1
    %v2236 = vmax.f32 %v2234, %v2235
    %v2237 = vsub.f32 %v2211, %v2236
    %v2238 = vmul.f32 %v2237, 1.442695
    %v2239 = vpow.pop %v2238
    %v2240 = vsel %vm1273, %v2239, 0.0
    %v2241 = vrot.slane %v2240, 4
    %v2242 = vadd.f32 %v2240, %v2241
    %v2243 = vrot.slane %v2242, 2
    %v2244 = vadd.f32 %v2242, %v2243
    %v2245 = vrot.slane %v2244, 1
    %v2246 = vadd.f32 %v2244, %v2245
    %v2247 = vlog2.pop %v2246
    %v2248 = vmul.f32 %v2247, 0.6931472
    %v2249 = vadd.f32 %v2248, %v2236
    %v2250 = vadd.f32 %v2230, 0.0
    %v2251 = vrot.slane %v2250, 4
    %v2252 = vadd.f32 %v2250, %v2251
    %v2253 = vrot.slane %v2252, 2
    %v2254 = vadd.f32 %v2252, %v2253
    %v2255 = vrot.slane %v2254, 1
    %v2256 = vadd.f32 %v2254, %v2255
    %v2257 = vadd.f32 %v2140, %v2256
    %v2258 = vsel %vm1273, %v2249, 0.0
    %2259 = vadd.xlane.f32.xlu0 %v2258
    %v2260 = vpop.xlane.xlu0 %2259
    %v2261 = vadd.f32 %v2260, 0.0
    %v2262 = vadd.f32 %v2257, %v2261
    %v2263 = vadd.f32 %v2218, 0.0
    %v2264 = vrot.slane %v2263, 4
    %v2265 = vadd.f32 %v2263, %v2264
    %v2266 = vrot.slane %v2265, 2
    %v2267 = vadd.f32 %v2265, %v2266
    %v2268 = vrot.slane %v2267, 1
    %v2269 = vadd.f32 %v2267, %v2268
    %v2270 = vmul.f32 %v2269, 2.0
    %v2271 = vsub.f32 %v2262, %v2270
    %2272 = vmatprep.subr.mxu0 0.0
    %2273 = vmatpush1.xpose.msra.mxu0 %v1743
    %2274 = vmatprep.subr.mxu0 0.0
    %2275 = vmatpush1.xpose.msra.mxu0 0.0
    %2276 = vmatprep.subr.mxu0 0.0
    %2277 = vmatpush1.xpose.msra.mxu0 0.0
    %2278 = vmatprep.subr.mxu0 0.0
    %2279 = vmatpush1.xpose.msra.mxu0 0.0
    %2280 = vmatprep.subr.mxu0 0.0
    %2281 = vmatpush1.xpose.msra.mxu0 0.0
    %2282 = vmatprep.subr.mxu0 0.0
    %2283 = vmatpush1.xpose.msra.mxu0 0.0
    %2284 = vmatprep.subr.mxu0 0.0
    %2285 = vmatpush1.xpose.msra.mxu0 0.0
    %2286 = vmatprep.subr.mxu0 0.0
    %2287 = vmatpush1.xpose.msra.mxu0 0.0
    %2288 = vmatprep.subr.mxu0 0.0
    %2289 = vmatpush1.xpose.msra.mxu0 0.0
    %2290 = vmatprep.subr.mxu0 0.0
    %2291 = vmatpush1.xpose.msra.mxu0 0.0
    %2292 = vmatprep.subr.mxu0 0.0
    %2293 = vmatpush1.xpose.msra.mxu0 0.0
    %2294 = vmatprep.subr.mxu0 0.0
    %2295 = vmatpush1.xpose.msra.mxu0 0.0
    %2296 = vmatprep.subr.mxu0 0.0
    %2297 = vmatpush1.xpose.msra.mxu0 0.0
    %2298 = vmatprep.subr.mxu0 0.0
    %2299 = vmatpush1.xpose.msra.mxu0 0.0
    %2300 = vmatprep.subr.mxu0 0.0
    %2301 = vmatpush1.xpose.msra.mxu0 0.0
    %2302 = vmatprep.subr.mxu0 0.0
    %2303 = vmatpush1.xpose.msra.mxu0 0.0
    %2304 = vmatprep.subr.mxu0 0.0
    %2305 = vmatpush1.xpose.msra.mxu0 0.0
    %2306 = vmatprep.subr.mxu0 0.0
    %2307 = vmatpush1.xpose.msra.mxu0 0.0
    %2308 = vmatprep.subr.mxu0 0.0
    %2309 = vmatpush1.xpose.msra.mxu0 0.0
    %2310 = vmatprep.subr.mxu0 0.0
    %2311 = vmatpush1.xpose.msra.mxu0 0.0
    %2312 = vmatprep.subr.mxu0 0.0
    %2313 = vmatpush1.xpose.msra.mxu0 0.0
    %2314 = vmatprep.subr.mxu0 0.0
    %2315 = vmatpush1.xpose.msra.mxu0 0.0
    %2316 = vmatprep.subr.mxu0 0.0
    %2317 = vmatpush1.xpose.msra.mxu0 0.0
    %2318 = vmatprep.subr.mxu0 0.0
    %2319 = vmatpush1.xpose.msra.mxu0 0.0
    %2320 = vmatprep.subr.mxu0 0.0
    %2321 = vmatpush1.xpose.msra.mxu0 0.0
    %2322 = vmatprep.subr.mxu0 0.0
    %2323 = vmatpush1.xpose.msra.mxu0 0.0
    %2324 = vmatprep.subr.mxu0 0.0
    %2325 = vmatpush1.xpose.msra.mxu0 0.0
    %2326 = vmatprep.subr.mxu0 0.0
    %2327 = vmatpush1.xpose.msra.mxu0 0.0
    %2328 = vmatprep.subr.mxu0 0.0
    %2329 = vmatpush1.xpose.msra.mxu0 0.0
    %2330 = vmatprep.subr.mxu0 0.0
    %2331 = vmatpush1.xpose.msra.mxu0 0.0
    %2332 = vmatprep.subr.mxu0 0.0
    %2333 = vmatpush1.xpose.msra.mxu0 0.0
    %2334 = vmatprep.subr.mxu0 0.0
    %2335 = vmatpush1.xpose.msra.mxu0 0.0
    %2336 = vmatprep.mubr.f32.mxu0 0.0
    %2337 = vmatmul.mubr.f32.gmra.mrb[0].mxu0 %v1190
    %v2338 = vpop.f32.mrb[0].mxu0
    %v2339 = vadd.f32 0.0, %v2338
    %v2340 = vpop.f32.mrb[0].mxu0
    %2341 = vdwg.mxu0
    %v2342 = vmul.f32 %v2339, 5.0
    %2343 = vrot.lane.b32.xlu0 %v1679, 96
    %v2344 = vpop.permute.xlu0 %2343
    %v2346 = vsel %vm940, %v2344, 0.0
    %2347 = vadd.xlane.f32.xlu0 %v2346
    %v2348 = vpop.xlane.xlu0 %2347
    %v2349 = vmul.f32 %v2348, 5.0
    %v2350 = vsel %vm1273, %v2342, -inf
    %2351 = vmax.xlane.f32.xlu0 %v2350
    %v2352 = vpop.xlane.xlu0 %2351
    %v2353 = vsub.f32 %v2342, %v2352
    %v2354 = vmul.f32 %v2353, 1.442695
    %v2355 = vpow.pop %v2354
    %v2356 = vsel %vm1273, %v2355, 0.0
    %2357 = vadd.xlane.f32.xlu0 %v2356
    %v2358 = vpop.xlane.xlu0 %2357
    %v2359 = vlog2.pop %v2358
    %v2360 = vmul.f32 %v2359, 0.6931472
    %v2361 = vadd.f32 %v2360, %v2352
    %v2362 = vrot.slane %v2350, 4
    %v2363 = vmax.f32 %v2350, %v2362
    %v2364 = vrot.slane %v2363, 2
    %v2365 = vmax.f32 %v2363, %v2364
    %v2366 = vrot.slane %v2365, 1
    %v2367 = vmax.f32 %v2365, %v2366
    %v2368 = vsub.f32 %v2342, %v2367
    %v2369 = vmul.f32 %v2368, 1.442695
    %v2370 = vpow.pop %v2369
    %v2371 = vsel %vm1273, %v2370, 0.0
    %v2372 = vrot.slane %v2371, 4
    %v2373 = vadd.f32 %v2371, %v2372
    %v2374 = vrot.slane %v2373, 2
    %v2375 = vadd.f32 %v2373, %v2374
    %v2376 = vrot.slane %v2375, 1
    %v2377 = vadd.f32 %v2375, %v2376
    %v2378 = vlog2.pop %v2377
    %v2379 = vmul.f32 %v2378, 0.6931472
    %v2380 = vadd.f32 %v2379, %v2367
    %v2381 = vadd.f32 %v2361, 0.0
    %v2382 = vrot.slane %v2381, 4
    %v2383 = vadd.f32 %v2381, %v2382
    %v2384 = vrot.slane %v2383, 2
    %v2385 = vadd.f32 %v2383, %v2384
    %v2386 = vrot.slane %v2385, 1
    %v2387 = vadd.f32 %v2385, %v2386
    %v2388 = vadd.f32 %v2271, %v2387
    %v2389 = vsel %vm1273, %v2380, 0.0
    %2390 = vadd.xlane.f32.xlu0 %v2389
    %v2391 = vpop.xlane.xlu0 %2390
    %v2392 = vadd.f32 %v2391, 0.0
    %v2393 = vadd.f32 %v2388, %v2392
    %v2394 = vadd.f32 %v2349, 0.0
    %v2395 = vrot.slane %v2394, 4
    %v2396 = vadd.f32 %v2394, %v2395
    %v2397 = vrot.slane %v2396, 2
    %v2398 = vadd.f32 %v2396, %v2397
    %v2399 = vrot.slane %v2398, 1
    %v2400 = vadd.f32 %v2398, %v2399
    %v2401 = vmul.f32 %v2400, 2.0
    %v2402 = vsub.f32 %v2393, %v2401
    %2403 = vmatprep.subr.mxu0 0.0
    %2404 = vmatpush1.xpose.msra.mxu0 %v1467
    %2405 = vmatprep.subr.mxu0 0.0
    %2406 = vmatpush1.xpose.msra.mxu0 0.0
    %2407 = vmatprep.subr.mxu0 0.0
    %2408 = vmatpush1.xpose.msra.mxu0 0.0
    %2409 = vmatprep.subr.mxu0 0.0
    %2410 = vmatpush1.xpose.msra.mxu0 0.0
    %2411 = vmatprep.subr.mxu0 0.0
    %2412 = vmatpush1.xpose.msra.mxu0 0.0
    %2413 = vmatprep.subr.mxu0 0.0
    %2414 = vmatpush1.xpose.msra.mxu0 0.0
    %2415 = vmatprep.subr.mxu0 0.0
    %2416 = vmatpush1.xpose.msra.mxu0 0.0
    %2417 = vmatprep.subr.mxu0 0.0
    %2418 = vmatpush1.xpose.msra.mxu0 0.0
    %2419 = vmatprep.subr.mxu0 0.0
    %2420 = vmatpush1.xpose.msra.mxu0 0.0
    %2421 = vmatprep.subr.mxu0 0.0
    %2422 = vmatpush1.xpose.msra.mxu0 0.0
    %2423 = vmatprep.subr.mxu0 0.0
    %2424 = vmatpush1.xpose.msra.mxu0 0.0
    %2425 = vmatprep.subr.mxu0 0.0
    %2426 = vmatpush1.xpose.msra.mxu0 0.0
    %2427 = vmatprep.subr.mxu0 0.0
    %2428 = vmatpush1.xpose.msra.mxu0 0.0
    %2429 = vmatprep.subr.mxu0 0.0
    %2430 = vmatpush1.xpose.msra.mxu0 0.0
    %2431 = vmatprep.subr.mxu0 0.0
    %2432 = vmatpush1.xpose.msra.mxu0 0.0
    %2433 = vmatprep.subr.mxu0 0.0
    %2434 = vmatpush1.xpose.msra.mxu0 0.0
    %2435 = vmatprep.subr.mxu0 0.0
    %2436 = vmatpush1.xpose.msra.mxu0 0.0
    %2437 = vmatprep.subr.mxu0 0.0
    %2438 = vmatpush1.xpose.msra.mxu0 0.0
    %2439 = vmatprep.subr.mxu0 0.0
    %2440 = vmatpush1.xpose.msra.mxu0 0.0
    %2441 = vmatprep.subr.mxu0 0.0
    %2442 = vmatpush1.xpose.msra.mxu0 0.0
    %2443 = vmatprep.subr.mxu0 0.0
    %2444 = vmatpush1.xpose.msra.mxu0 0.0
    %2445 = vmatprep.subr.mxu0 0.0
    %2446 = vmatpush1.xpose.msra.mxu0 0.0
    %2447 = vmatprep.subr.mxu0 0.0
    %2448 = vmatpush1.xpose.msra.mxu0 0.0
    %2449 = vmatprep.subr.mxu0 0.0
    %2450 = vmatpush1.xpose.msra.mxu0 0.0
    %2451 = vmatprep.subr.mxu0 0.0
    %2452 = vmatpush1.xpose.msra.mxu0 0.0
    %2453 = vmatprep.subr.mxu0 0.0
    %2454 = vmatpush1.xpose.msra.mxu0 0.0
    %2455 = vmatprep.subr.mxu0 0.0
    %2456 = vmatpush1.xpose.msra.mxu0 0.0
    %2457 = vmatprep.subr.mxu0 0.0
    %2458 = vmatpush1.xpose.msra.mxu0 0.0
    %2459 = vmatprep.subr.mxu0 0.0
    %2460 = vmatpush1.xpose.msra.mxu0 0.0
    %2461 = vmatprep.subr.mxu0 0.0
    %2462 = vmatpush1.xpose.msra.mxu0 0.0
    %2463 = vmatprep.subr.mxu0 0.0
    %2464 = vmatpush1.xpose.msra.mxu0 0.0
    %2465 = vmatprep.subr.mxu0 0.0
    %2466 = vmatpush1.xpose.msra.mxu0 0.0
    %2467 = vmatprep.mubr.f32.mxu0 0.0
    %2468 = vmatmul.mubr.f32.gmra.mrb[0].mxu0 %v1329
    %v2469 = vpop.f32.mrb[0].mxu0
    %v2470 = vadd.f32 0.0, %v2469
    %v2471 = vpop.f32.mrb[0].mxu0
    %2472 = vdwg.mxu0
    %v2473 = vmul.f32 %v2470, 5.0
    %2474 = vrot.lane.b32.xlu0 %v1264, 80
    %v2475 = vpop.permute.xlu0 %2474
    %v2477 = vsel %vm940, %v2475, 0.0
    %2478 = vadd.xlane.f32.xlu0 %v2477
    %v2479 = vpop.xlane.xlu0 %2478
    %v2480 = vmul.f32 %v2479, 5.0
    %v2481 = vsel %vm1273, %v2473, -inf
    %2482 = vmax.xlane.f32.xlu0 %v2481
    %v2483 = vpop.xlane.xlu0 %2482
    %v2484 = vsub.f32 %v2473, %v2483
    %v2485 = vmul.f32 %v2484, 1.442695
    %v2486 = vpow.pop %v2485
    %v2487 = vsel %vm1273, %v2486, 0.0
    %2488 = vadd.xlane.f32.xlu0 %v2487
    %v2489 = vpop.xlane.xlu0 %2488
    %v2490 = vlog2.pop %v2489
    %v2491 = vmul.f32 %v2490, 0.6931472
    %v2492 = vadd.f32 %v2491, %v2483
    %v2493 = vrot.slane %v2481, 4
    %v2494 = vmax.f32 %v2481, %v2493
    %v2495 = vrot.slane %v2494, 2
    %v2496 = vmax.f32 %v2494, %v2495
    %v2497 = vrot.slane %v2496, 1
    %v2498 = vmax.f32 %v2496, %v2497
    %v2499 = vsub.f32 %v2473, %v2498
    %v2500 = vmul.f32 %v2499, 1.442695
    %v2501 = vpow.pop %v2500
    %v2502 = vsel %vm1273, %v2501, 0.0
    %v2503 = vrot.slane %v2502, 4
    %v2504 = vadd.f32 %v2502, %v2503
    %v2505 = vrot.slane %v2504, 2
    %v2506 = vadd.f32 %v2504, %v2505
    %v2507 = vrot.slane %v2506, 1
    %v2508 = vadd.f32 %v2506, %v2507
    %v2509 = vlog2.pop %v2508
    %v2510 = vmul.f32 %v2509, 0.6931472
    %v2511 = vadd.f32 %v2510, %v2498
    %v2512 = vadd.f32 %v2492, 0.0
    %v2513 = vrot.slane %v2512, 4
    %v2514 = vadd.f32 %v2512, %v2513
    %v2515 = vrot.slane %v2514, 2
    %v2516 = vadd.f32 %v2514, %v2515
    %v2517 = vrot.slane %v2516, 1
    %v2518 = vadd.f32 %v2516, %v2517
    %v2519 = vadd.f32 %v2402, %v2518
    %v2520 = vsel %vm1273, %v2511, 0.0
    %2521 = vadd.xlane.f32.xlu0 %v2520
    %v2522 = vpop.xlane.xlu0 %2521
    %v2523 = vadd.f32 %v2522, 0.0
    %v2524 = vadd.f32 %v2519, %v2523
    %v2525 = vadd.f32 %v2480, 0.0
    %v2526 = vrot.slane %v2525, 4
    %v2527 = vadd.f32 %v2525, %v2526
    %v2528 = vrot.slane %v2527, 2
    %v2529 = vadd.f32 %v2527, %v2528
    %v2530 = vrot.slane %v2529, 1
    %v2531 = vadd.f32 %v2529, %v2530
    %v2532 = vmul.f32 %v2531, 2.0
    %v2533 = vsub.f32 %v2524, %v2532
    %2534 = vmatprep.subr.mxu0 0.0
    %2535 = vmatpush1.xpose.msra.mxu0 %v1605
    %2536 = vmatprep.subr.mxu0 0.0
    %2537 = vmatpush1.xpose.msra.mxu0 0.0
    %2538 = vmatprep.subr.mxu0 0.0
    %2539 = vmatpush1.xpose.msra.mxu0 0.0
    %2540 = vmatprep.subr.mxu0 0.0
    %2541 = vmatpush1.xpose.msra.mxu0 0.0
    %2542 = vmatprep.subr.mxu0 0.0
    %2543 = vmatpush1.xpose.msra.mxu0 0.0
    %2544 = vmatprep.subr.mxu0 0.0
    %2545 = vmatpush1.xpose.msra.mxu0 0.0
    %2546 = vmatprep.subr.mxu0 0.0
    %2547 = vmatpush1.xpose.msra.mxu0 0.0
    %2548 = vmatprep.subr.mxu0 0.0
    %2549 = vmatpush1.xpose.msra.mxu0 0.0
    %2550 = vmatprep.subr.mxu0 0.0
    %2551 = vmatpush1.xpose.msra.mxu0 0.0
    %2552 = vmatprep.subr.mxu0 0.0
    %2553 = vmatpush1.xpose.msra.mxu0 0.0
    %2554 = vmatprep.subr.mxu0 0.0
    %2555 = vmatpush1.xpose.msra.mxu0 0.0
    %2556 = vmatprep.subr.mxu0 0.0
    %2557 = vmatpush1.xpose.msra.mxu0 0.0
    %2558 = vmatprep.subr.mxu0 0.0
    %2559 = vmatpush1.xpose.msra.mxu0 0.0
    %2560 = vmatprep.subr.mxu0 0.0
    %2561 = vmatpush1.xpose.msra.mxu0 0.0
    %2562 = vmatprep.subr.mxu0 0.0
    %2563 = vmatpush1.xpose.msra.mxu0 0.0
    %2564 = vmatprep.subr.mxu0 0.0
    %2565 = vmatpush1.xpose.msra.mxu0 0.0
    %2566 = vmatprep.subr.mxu0 0.0
    %2567 = vmatpush1.xpose.msra.mxu0 0.0
    %2568 = vmatprep.subr.mxu0 0.0
    %2569 = vmatpush1.xpose.msra.mxu0 0.0
    %2570 = vmatprep.subr.mxu0 0.0
    %2571 = vmatpush1.xpose.msra.mxu0 0.0
    %2572 = vmatprep.subr.mxu0 0.0
    %2573 = vmatpush1.xpose.msra.mxu0 0.0
    %2574 = vmatprep.subr.mxu0 0.0
    %2575 = vmatpush1.xpose.msra.mxu0 0.0
    %2576 = vmatprep.subr.mxu0 0.0
    %2577 = vmatpush1.xpose.msra.mxu0 0.0
    %2578 = vmatprep.subr.mxu0 0.0
    %2579 = vmatpush1.xpose.msra.mxu0 0.0
    %2580 = vmatprep.subr.mxu0 0.0
    %2581 = vmatpush1.xpose.msra.mxu0 0.0
    %2582 = vmatprep.subr.mxu0 0.0
    %2583 = vmatpush1.xpose.msra.mxu0 0.0
    %2584 = vmatprep.subr.mxu0 0.0
    %2585 = vmatpush1.xpose.msra.mxu0 0.0
    %2586 = vmatprep.subr.mxu0 0.0
    %2587 = vmatpush1.xpose.msra.mxu0 0.0
    %2588 = vmatprep.subr.mxu0 0.0
    %2589 = vmatpush1.xpose.msra.mxu0 0.0
    %2590 = vmatprep.subr.mxu0 0.0
    %2591 = vmatpush1.xpose.msra.mxu0 0.0
    %2592 = vmatprep.subr.mxu0 0.0
    %2593 = vmatpush1.xpose.msra.mxu0 0.0
    %2594 = vmatprep.subr.mxu0 0.0
    %2595 = vmatpush1.xpose.msra.mxu0 0.0
    %2596 = vmatprep.subr.mxu0 0.0
    %2597 = vmatpush1.xpose.msra.mxu0 0.0
    %2598 = vmatprep.mubr.f32.mxu0 0.0
    %2599 = vmatmul.mubr.f32.gmra.mrb[0].mxu0 %v1329
    %v2600 = vpop.f32.mrb[0].mxu0
    %v2601 = vadd.f32 0.0, %v2600
    %v2602 = vpop.f32.mrb[0].mxu0
    %2603 = vdwg.mxu0
    %v2604 = vmul.f32 %v2601, 5.0
    %2605 = vrot.lane.b32.xlu0 %v1403, 80
    %v2606 = vpop.permute.xlu0 %2605
    %v2608 = vsel %vm940, %v2606, 0.0
    %2609 = vadd.xlane.f32.xlu0 %v2608
    %v2610 = vpop.xlane.xlu0 %2609
    %v2611 = vmul.f32 %v2610, 5.0
    %v2612 = vsel %vm1273, %v2604, -inf
    %2613 = vmax.xlane.f32.xlu0 %v2612
    %v2614 = vpop.xlane.xlu0 %2613
    %v2615 = vsub.f32 %v2604, %v2614
    %v2616 = vmul.f32 %v2615, 1.442695
    %v2617 = vpow.pop %v2616
    %v2618 = vsel %vm1273, %v2617, 0.0
    %2619 = vadd.xlane.f32.xlu0 %v2618
    %v2620 = vpop.xlane.xlu0 %2619
    %v2621 = vlog2.pop %v2620
    %v2622 = vmul.f32 %v2621, 0.6931472
    %v2623 = vadd.f32 %v2622, %v2614
    %v2624 = vrot.slane %v2612, 4
    %v2625 = vmax.f32 %v2612, %v2624
    %v2626 = vrot.slane %v2625, 2
    %v2627 = vmax.f32 %v2625, %v2626
    %v2628 = vrot.slane %v2627, 1
    %v2629 = vmax.f32 %v2627, %v2628
    %v2630 = vsub.f32 %v2604, %v2629
    %v2631 = vmul.f32 %v2630, 1.442695
    %v2632 = vpow.pop %v2631
    %v2633 = vsel %vm1273, %v2632, 0.0
    %v2634 = vrot.slane %v2633, 4
    %v2635 = vadd.f32 %v2633, %v2634
    %v2636 = vrot.slane %v2635, 2
    %v2637 = vadd.f32 %v2635, %v2636
    %v2638 = vrot.slane %v2637, 1
    %v2639 = vadd.f32 %v2637, %v2638
    %v2640 = vlog2.pop %v2639
    %v2641 = vmul.f32 %v2640, 0.6931472
    %v2642 = vadd.f32 %v2641, %v2629
    %v2643 = vadd.f32 %v2623, 0.0
    %v2644 = vrot.slane %v2643, 4
    %v2645 = vadd.f32 %v2643, %v2644
    %v2646 = vrot.slane %v2645, 2
    %v2647 = vadd.f32 %v2645, %v2646
    %v2648 = vrot.slane %v2647, 1
    %v2649 = vadd.f32 %v2647, %v2648
    %v2650 = vadd.f32 %v2533, %v2649
    %v2651 = vsel %vm1273, %v2642, 0.0
    %2652 = vadd.xlane.f32.xlu0 %v2651
    %v2653 = vpop.xlane.xlu0 %2652
    %v2654 = vadd.f32 %v2653, 0.0
    %v2655 = vadd.f32 %v2650, %v2654
    %v2656 = vadd.f32 %v2611, 0.0
    %v2657 = vrot.slane %v2656, 4
    %v2658 = vadd.f32 %v2656, %v2657
    %v2659 = vrot.slane %v2658, 2
    %v2660 = vadd.f32 %v2658, %v2659
    %v2661 = vrot.slane %v2660, 1
    %v2662 = vadd.f32 %v2660, %v2661
    %v2663 = vmul.f32 %v2662, 2.0
    %v2664 = vsub.f32 %v2655, %v2663
    %2665 = vmatprep.subr.mxu0 0.0
    %2666 = vmatpush1.xpose.msra.mxu0 %v1743
    %2667 = vmatprep.subr.mxu0 0.0
    %2668 = vmatpush1.xpose.msra.mxu0 0.0
    %2669 = vmatprep.subr.mxu0 0.0
    %2670 = vmatpush1.xpose.msra.mxu0 0.0
    %2671 = vmatprep.subr.mxu0 0.0
    %2672 = vmatpush1.xpose.msra.mxu0 0.0
    %2673 = vmatprep.subr.mxu0 0.0
    %2674 = vmatpush1.xpose.msra.mxu0 0.0
    %2675 = vmatprep.subr.mxu0 0.0
    %2676 = vmatpush1.xpose.msra.mxu0 0.0
    %2677 = vmatprep.subr.mxu0 0.0
    %2678 = vmatpush1.xpose.msra.mxu0 0.0
    %2679 = vmatprep.subr.mxu0 0.0
    %2680 = vmatpush1.xpose.msra.mxu0 0.0
    %2681 = vmatprep.subr.mxu0 0.0
    %2682 = vmatpush1.xpose.msra.mxu0 0.0
    %2683 = vmatprep.subr.mxu0 0.0
    %2684 = vmatpush1.xpose.msra.mxu0 0.0
    %2685 = vmatprep.subr.mxu0 0.0
    %2686 = vmatpush1.xpose.msra.mxu0 0.0
    %2687 = vmatprep.subr.mxu0 0.0
    %2688 = vmatpush1.xpose.msra.mxu0 0.0
    %2689 = vmatprep.subr.mxu0 0.0
    %2690 = vmatpush1.xpose.msra.mxu0 0.0
    %2691 = vmatprep.subr.mxu0 0.0
    %2692 = vmatpush1.xpose.msra.mxu0 0.0
    %2693 = vmatprep.subr.mxu0 0.0
    %2694 = vmatpush1.xpose.msra.mxu0 0.0
    %2695 = vmatprep.subr.mxu0 0.0
    %2696 = vmatpush1.xpose.msra.mxu0 0.0
    %2697 = vmatprep.subr.mxu0 0.0
    %2698 = vmatpush1.xpose.msra.mxu0 0.0
    %2699 = vmatprep.subr.mxu0 0.0
    %2700 = vmatpush1.xpose.msra.mxu0 0.0
    %2701 = vmatprep.subr.mxu0 0.0
    %2702 = vmatpush1.xpose.msra.mxu0 0.0
    %2703 = vmatprep.subr.mxu0 0.0
    %2704 = vmatpush1.xpose.msra.mxu0 0.0
    %2705 = vmatprep.subr.mxu0 0.0
    %2706 = vmatpush1.xpose.msra.mxu0 0.0
    %2707 = vmatprep.subr.mxu0 0.0
    %2708 = vmatpush1.xpose.msra.mxu0 0.0
    %2709 = vmatprep.subr.mxu0 0.0
    %2710 = vmatpush1.xpose.msra.mxu0 0.0
    %2711 = vmatprep.subr.mxu0 0.0
    %2712 = vmatpush1.xpose.msra.mxu0 0.0
    %2713 = vmatprep.subr.mxu0 0.0
    %2714 = vmatpush1.xpose.msra.mxu0 0.0
    %2715 = vmatprep.subr.mxu0 0.0
    %2716 = vmatpush1.xpose.msra.mxu0 0.0
    %2717 = vmatprep.subr.mxu0 0.0
    %2718 = vmatpush1.xpose.msra.mxu0 0.0
    %2719 = vmatprep.subr.mxu0 0.0
    %2720 = vmatpush1.xpose.msra.mxu0 0.0
    %2721 = vmatprep.subr.mxu0 0.0
    %2722 = vmatpush1.xpose.msra.mxu0 0.0
    %2723 = vmatprep.subr.mxu0 0.0
    %2724 = vmatpush1.xpose.msra.mxu0 0.0
    %2725 = vmatprep.subr.mxu0 0.0
    %2726 = vmatpush1.xpose.msra.mxu0 0.0
    %2727 = vmatprep.subr.mxu0 0.0
    %2728 = vmatpush1.xpose.msra.mxu0 0.0
    %2729 = vmatprep.mubr.f32.mxu0 0.0
    %2730 = vmatmul.mubr.f32.gmra.mrb[0].mxu0 %v1329
    %v2731 = vpop.f32.mrb[0].mxu0
    %v2732 = vadd.f32 0.0, %v2731
    %v2733 = vpop.f32.mrb[0].mxu0
    %2734 = vdwg.mxu0
    %v2735 = vmul.f32 %v2732, 5.0
    %2736 = vrot.lane.b32.xlu0 %v1541, 80
    %v2737 = vpop.permute.xlu0 %2736
    %v2739 = vsel %vm940, %v2737, 0.0
    %2740 = vadd.xlane.f32.xlu0 %v2739
    %v2741 = vpop.xlane.xlu0 %2740
    %v2742 = vmul.f32 %v2741, 5.0
    %v2743 = vsel %vm1273, %v2735, -inf
    %2744 = vmax.xlane.f32.xlu0 %v2743
    %v2745 = vpop.xlane.xlu0 %2744
    %v2746 = vsub.f32 %v2735, %v2745
    %v2747 = vmul.f32 %v2746, 1.442695
    %v2748 = vpow.pop %v2747
    %v2749 = vsel %vm1273, %v2748, 0.0
    %2750 = vadd.xlane.f32.xlu0 %v2749
    %v2751 = vpop.xlane.xlu0 %2750
    %v2752 = vlog2.pop %v2751
    %v2753 = vmul.f32 %v2752, 0.6931472
    %v2754 = vadd.f32 %v2753, %v2745
    %v2755 = vrot.slane %v2743, 4
    %v2756 = vmax.f32 %v2743, %v2755
    %v2757 = vrot.slane %v2756, 2
    %v2758 = vmax.f32 %v2756, %v2757
    %v2759 = vrot.slane %v2758, 1
    %v2760 = vmax.f32 %v2758, %v2759
    %v2761 = vsub.f32 %v2735, %v2760
    %v2762 = vmul.f32 %v2761, 1.442695
    %v2763 = vpow.pop %v2762
    %v2764 = vsel %vm1273, %v2763, 0.0
    %v2765 = vrot.slane %v2764, 4
    %v2766 = vadd.f32 %v2764, %v2765
    %v2767 = vrot.slane %v2766, 2
    %v2768 = vadd.f32 %v2766, %v2767
    %v2769 = vrot.slane %v2768, 1
    %v2770 = vadd.f32 %v2768, %v2769
    %v2771 = vlog2.pop %v2770
    %v2772 = vmul.f32 %v2771, 0.6931472
    %v2773 = vadd.f32 %v2772, %v2760
    %v2774 = vadd.f32 %v2754, 0.0
    %v2775 = vrot.slane %v2774, 4
    %v2776 = vadd.f32 %v2774, %v2775
    %v2777 = vrot.slane %v2776, 2
    %v2778 = vadd.f32 %v2776, %v2777
    %v2779 = vrot.slane %v2778, 1
    %v2780 = vadd.f32 %v2778, %v2779
    %v2781 = vadd.f32 %v2664, %v2780
    %v2782 = vsel %vm1273, %v2773, 0.0
    %2783 = vadd.xlane.f32.xlu0 %v2782
    %v2784 = vpop.xlane.xlu0 %2783
    %v2785 = vadd.f32 %v2784, 0.0
    %v2786 = vadd.f32 %v2781, %v2785
    %v2787 = vadd.f32 %v2742, 0.0
    %v2788 = vrot.slane %v2787, 4
    %v2789 = vadd.f32 %v2787, %v2788
    %v2790 = vrot.slane %v2789, 2
    %v2791 = vadd.f32 %v2789, %v2790
    %v2792 = vrot.slane %v2791, 1
    %v2793 = vadd.f32 %v2791, %v2792
    %v2794 = vmul.f32 %v2793, 2.0
    %v2795 = vsub.f32 %v2786, %v2794
    %2796 = vmatprep.subr.mxu0 0.0
    %2797 = vmatpush1.xpose.msra.mxu0 %v1605
    %2798 = vmatprep.subr.mxu0 0.0
    %2799 = vmatpush1.xpose.msra.mxu0 0.0
    %2800 = vmatprep.subr.mxu0 0.0
    %2801 = vmatpush1.xpose.msra.mxu0 0.0
    %2802 = vmatprep.subr.mxu0 0.0
    %2803 = vmatpush1.xpose.msra.mxu0 0.0
    %2804 = vmatprep.subr.mxu0 0.0
    %2805 = vmatpush1.xpose.msra.mxu0 0.0
    %2806 = vmatprep.subr.mxu0 0.0
    %2807 = vmatpush1.xpose.msra.mxu0 0.0
    %2808 = vmatprep.subr.mxu0 0.0
    %2809 = vmatpush1.xpose.msra.mxu0 0.0
    %2810 = vmatprep.subr.mxu0 0.0
    %2811 = vmatpush1.xpose.msra.mxu0 0.0
    %2812 = vmatprep.subr.mxu0 0.0
    %2813 = vmatpush1.xpose.msra.mxu0 0.0
    %2814 = vmatprep.subr.mxu0 0.0
    %2815 = vmatpush1.xpose.msra.mxu0 0.0
    %2816 = vmatprep.subr.mxu0 0.0
    %2817 = vmatpush1.xpose.msra.mxu0 0.0
    %2818 = vmatprep.subr.mxu0 0.0
    %2819 = vmatpush1.xpose.msra.mxu0 0.0
    %2820 = vmatprep.subr.mxu0 0.0
    %2821 = vmatpush1.xpose.msra.mxu0 0.0
    %2822 = vmatprep.subr.mxu0 0.0
    %2823 = vmatpush1.xpose.msra.mxu0 0.0
    %2824 = vmatprep.subr.mxu0 0.0
    %2825 = vmatpush1.xpose.msra.mxu0 0.0
    %2826 = vmatprep.subr.mxu0 0.0
    %2827 = vmatpush1.xpose.msra.mxu0 0.0
    %2828 = vmatprep.subr.mxu0 0.0
    %2829 = vmatpush1.xpose.msra.mxu0 0.0
    %2830 = vmatprep.subr.mxu0 0.0
    %2831 = vmatpush1.xpose.msra.mxu0 0.0
    %2832 = vmatprep.subr.mxu0 0.0
    %2833 = vmatpush1.xpose.msra.mxu0 0.0
    %2834 = vmatprep.subr.mxu0 0.0
    %2835 = vmatpush1.xpose.msra.mxu0 0.0
    %2836 = vmatprep.subr.mxu0 0.0
    %2837 = vmatpush1.xpose.msra.mxu0 0.0
    %2838 = vmatprep.subr.mxu0 0.0
    %2839 = vmatpush1.xpose.msra.mxu0 0.0
    %2840 = vmatprep.subr.mxu0 0.0
    %2841 = vmatpush1.xpose.msra.mxu0 0.0
    %2842 = vmatprep.subr.mxu0 0.0
    %2843 = vmatpush1.xpose.msra.mxu0 0.0
    %2844 = vmatprep.subr.mxu0 0.0
    %2845 = vmatpush1.xpose.msra.mxu0 0.0
    %2846 = vmatprep.subr.mxu0 0.0
    %2847 = vmatpush1.xpose.msra.mxu0 0.0
    %2848 = vmatprep.subr.mxu0 0.0
    %2849 = vmatpush1.xpose.msra.mxu0 0.0
    %2850 = vmatprep.subr.mxu0 0.0
    %2851 = vmatpush1.xpose.msra.mxu0 0.0
    %2852 = vmatprep.subr.mxu0 0.0
    %2853 = vmatpush1.xpose.msra.mxu0 0.0
    %2854 = vmatprep.subr.mxu0 0.0
    %2855 = vmatpush1.xpose.msra.mxu0 0.0
    %2856 = vmatprep.subr.mxu0 0.0
    %2857 = vmatpush1.xpose.msra.mxu0 0.0
    %2858 = vmatprep.subr.mxu0 0.0
    %2859 = vmatpush1.xpose.msra.mxu0 0.0
    %2860 = vmatprep.mubr.f32.mxu0 0.0
    %2861 = vmatmul.mubr.f32.gmra.mrb[0].mxu0 %v1467
    %v2862 = vpop.f32.mrb[0].mxu0
    %v2863 = vadd.f32 0.0, %v2862
    %v2864 = vpop.f32.mrb[0].mxu0
    %2865 = vdwg.mxu0
    %v2866 = vmul.f32 %v2863, 5.0
    %2867 = vrot.lane.b32.xlu0 %v1264, 64
    %v2868 = vpop.permute.xlu0 %2867
    %v2870 = vsel %vm940, %v2868, 0.0
    %2871 = vadd.xlane.f32.xlu0 %v2870
    %v2872 = vpop.xlane.xlu0 %2871
    %v2873 = vmul.f32 %v2872, 5.0
    %v2874 = vsel %vm1273, %v2866, -inf
    %2875 = vmax.xlane.f32.xlu0 %v2874
    %v2876 = vpop.xlane.xlu0 %2875
    %v2877 = vsub.f32 %v2866, %v2876
    %v2878 = vmul.f32 %v2877, 1.442695
    %v2879 = vpow.pop %v2878
    %v2880 = vsel %vm1273, %v2879, 0.0
    %2881 = vadd.xlane.f32.xlu0 %v2880
    %v2882 = vpop.xlane.xlu0 %2881
    %v2883 = vlog2.pop %v2882
    %v2884 = vmul.f32 %v2883, 0.6931472
    %v2885 = vadd.f32 %v2884, %v2876
    %v2886 = vrot.slane %v2874, 4
    %v2887 = vmax.f32 %v2874, %v2886
    %v2888 = vrot.slane %v2887, 2
    %v2889 = vmax.f32 %v2887, %v2888
    %v2890 = vrot.slane %v2889, 1
    %v2891 = vmax.f32 %v2889, %v2890
    %v2892 = vsub.f32 %v2866, %v2891
    %v2893 = vmul.f32 %v2892, 1.442695
    %v2894 = vpow.pop %v2893
    %v2895 = vsel %vm1273, %v2894, 0.0
    %v2896 = vrot.slane %v2895, 4
    %v2897 = vadd.f32 %v2895, %v2896
    %v2898 = vrot.slane %v2897, 2
    %v2899 = vadd.f32 %v2897, %v2898
    %v2900 = vrot.slane %v2899, 1
    %v2901 = vadd.f32 %v2899, %v2900
    %v2902 = vlog2.pop %v2901
    %v2903 = vmul.f32 %v2902, 0.6931472
    %v2904 = vadd.f32 %v2903, %v2891
    %v2905 = vadd.f32 %v2885, 0.0
    %v2906 = vrot.slane %v2905, 4
    %v2907 = vadd.f32 %v2905, %v2906
    %v2908 = vrot.slane %v2907, 2
    %v2909 = vadd.f32 %v2907, %v2908
    %v2910 = vrot.slane %v2909, 1
    %v2911 = vadd.f32 %v2909, %v2910
    %v2912 = vadd.f32 %v2795, %v2911
    %v2913 = vsel %vm1273, %v2904, 0.0
    %2914 = vadd.xlane.f32.xlu0 %v2913
    %v2915 = vpop.xlane.xlu0 %2914
    %v2916 = vadd.f32 %v2915, 0.0
    %v2917 = vadd.f32 %v2912, %v2916
    %v2918 = vadd.f32 %v2873, 0.0
    %v2919 = vrot.slane %v2918, 4
    %v2920 = vadd.f32 %v2918, %v2919
    %v2921 = vrot.slane %v2920, 2
    %v2922 = vadd.f32 %v2920, %v2921
    %v2923 = vrot.slane %v2922, 1
    %v2924 = vadd.f32 %v2922, %v2923
    %v2925 = vmul.f32 %v2924, 2.0
    %v2926 = vsub.f32 %v2917, %v2925
    %2927 = vmatprep.subr.mxu0 0.0
    %2928 = vmatpush1.xpose.msra.mxu0 %v1743
    %2929 = vmatprep.subr.mxu0 0.0
    %2930 = vmatpush1.xpose.msra.mxu0 0.0
    %2931 = vmatprep.subr.mxu0 0.0
    %2932 = vmatpush1.xpose.msra.mxu0 0.0
    %2933 = vmatprep.subr.mxu0 0.0
    %2934 = vmatpush1.xpose.msra.mxu0 0.0
    %2935 = vmatprep.subr.mxu0 0.0
    %2936 = vmatpush1.xpose.msra.mxu0 0.0
    %2937 = vmatprep.subr.mxu0 0.0
    %2938 = vmatpush1.xpose.msra.mxu0 0.0
    %2939 = vmatprep.subr.mxu0 0.0
    %2940 = vmatpush1.xpose.msra.mxu0 0.0
    %2941 = vmatprep.subr.mxu0 0.0
    %2942 = vmatpush1.xpose.msra.mxu0 0.0
    %2943 = vmatprep.subr.mxu0 0.0
    %2944 = vmatpush1.xpose.msra.mxu0 0.0
    %2945 = vmatprep.subr.mxu0 0.0
    %2946 = vmatpush1.xpose.msra.mxu0 0.0
    %2947 = vmatprep.subr.mxu0 0.0
    %2948 = vmatpush1.xpose.msra.mxu0 0.0
    %2949 = vmatprep.subr.mxu0 0.0
    %2950 = vmatpush1.xpose.msra.mxu0 0.0
    %2951 = vmatprep.subr.mxu0 0.0
    %2952 = vmatpush1.xpose.msra.mxu0 0.0
    %2953 = vmatprep.subr.mxu0 0.0
    %2954 = vmatpush1.xpose.msra.mxu0 0.0
    %2955 = vmatprep.subr.mxu0 0.0
    %2956 = vmatpush1.xpose.msra.mxu0 0.0
    %2957 = vmatprep.subr.mxu0 0.0
    %2958 = vmatpush1.xpose.msra.mxu0 0.0
    %2959 = vmatprep.subr.mxu0 0.0
    %2960 = vmatpush1.xpose.msra.mxu0 0.0
    %2961 = vmatprep.subr.mxu0 0.0
    %2962 = vmatpush1.xpose.msra.mxu0 0.0
    %2963 = vmatprep.subr.mxu0 0.0
    %2964 = vmatpush1.xpose.msra.mxu0 0.0
    %2965 = vmatprep.subr.mxu0 0.0
    %2966 = vmatpush1.xpose.msra.mxu0 0.0
    %2967 = vmatprep.subr.mxu0 0.0
    %2968 = vmatpush1.xpose.msra.mxu0 0.0
    %2969 = vmatprep.subr.mxu0 0.0
    %2970 = vmatpush1.xpose.msra.mxu0 0.0
    %2971 = vmatprep.subr.mxu0 0.0
    %2972 = vmatpush1.xpose.msra.mxu0 0.0
    %2973 = vmatprep.subr.mxu0 0.0
    %2974 = vmatpush1.xpose.msra.mxu0 0.0
    %2975 = vmatprep.subr.mxu0 0.0
    %2976 = vmatpush1.xpose.msra.mxu0 0.0
    %2977 = vmatprep.subr.mxu0 0.0
    %2978 = vmatpush1.xpose.msra.mxu0 0.0
    %2979 = vmatprep.subr.mxu0 0.0
    %2980 = vmatpush1.xpose.msra.mxu0 0.0
    %2981 = vmatprep.subr.mxu0 0.0
    %2982 = vmatpush1.xpose.msra.mxu0 0.0
    %2983 = vmatprep.subr.mxu0 0.0
    %2984 = vmatpush1.xpose.msra.mxu0 0.0
    %2985 = vmatprep.subr.mxu0 0.0
    %2986 = vmatpush1.xpose.msra.mxu0 0.0
    %2987 = vmatprep.subr.mxu0 0.0
    %2988 = vmatpush1.xpose.msra.mxu0 0.0
    %2989 = vmatprep.subr.mxu0 0.0
    %2990 = vmatpush1.xpose.msra.mxu0 0.0
    %2991 = vmatprep.mubr.f32.mxu0 0.0
    %2992 = vmatmul.mubr.f32.gmra.mrb[0].mxu0 %v1467
    %v2993 = vpop.f32.mrb[0].mxu0
    %v2994 = vadd.f32 0.0, %v2993
    %v2995 = vpop.f32.mrb[0].mxu0
    %2996 = vdwg.mxu0
    %v2997 = vmul.f32 %v2994, 5.0
    %2998 = vrot.lane.b32.xlu0 %v1403, 64
    %v2999 = vpop.permute.xlu0 %2998
    %v3001 = vsel %vm940, %v2999, 0.0
    %3002 = vadd.xlane.f32.xlu0 %v3001
    %v3003 = vpop.xlane.xlu0 %3002
    %v3004 = vmul.f32 %v3003, 5.0
    %v3005 = vsel %vm1273, %v2997, -inf
    %3006 = vmax.xlane.f32.xlu0 %v3005
    %v3007 = vpop.xlane.xlu0 %3006
    %v3008 = vsub.f32 %v2997, %v3007
    %v3009 = vmul.f32 %v3008, 1.442695
    %v3010 = vpow.pop %v3009
    %v3011 = vsel %vm1273, %v3010, 0.0
    %3012 = vadd.xlane.f32.xlu0 %v3011
    %v3013 = vpop.xlane.xlu0 %3012
    %v3014 = vlog2.pop %v3013
    %v3015 = vmul.f32 %v3014, 0.6931472
    %v3016 = vadd.f32 %v3015, %v3007
    %v3017 = vrot.slane %v3005, 4
    %v3018 = vmax.f32 %v3005, %v3017
    %v3019 = vrot.slane %v3018, 2
    %v3020 = vmax.f32 %v3018, %v3019
    %v3021 = vrot.slane %v3020, 1
    %v3022 = vmax.f32 %v3020, %v3021
    %v3023 = vsub.f32 %v2997, %v3022
    %v3024 = vmul.f32 %v3023, 1.442695
    %v3025 = vpow.pop %v3024
    %v3026 = vsel %vm1273, %v3025, 0.0
    %v3027 = vrot.slane %v3026, 4
    %v3028 = vadd.f32 %v3026, %v3027
    %v3029 = vrot.slane %v3028, 2
    %v3030 = vadd.f32 %v3028, %v3029
    %v3031 = vrot.slane %v3030, 1
    %v3032 = vadd.f32 %v3030, %v3031
    %v3033 = vlog2.pop %v3032
    %v3034 = vmul.f32 %v3033, 0.6931472
    %v3035 = vadd.f32 %v3034, %v3022
    %v3036 = vadd.f32 %v3016, 0.0
    %v3037 = vrot.slane %v3036, 4
    %v3038 = vadd.f32 %v3036, %v3037
    %v3039 = vrot.slane %v3038, 2
    %v3040 = vadd.f32 %v3038, %v3039
    %v3041 = vrot.slane %v3040, 1
    %v3042 = vadd.f32 %v3040, %v3041
    %v3043 = vadd.f32 %v2926, %v3042
    %v3044 = vsel %vm1273, %v3035, 0.0
    %3045 = vadd.xlane.f32.xlu0 %v3044
    %v3046 = vpop.xlane.xlu0 %3045
    %v3047 = vadd.f32 %v3046, 0.0
    %v3048 = vadd.f32 %v3043, %v3047
    %v3049 = vadd.f32 %v3004, 0.0
    %v3050 = vrot.slane %v3049, 4
    %v3051 = vadd.f32 %v3049, %v3050
    %v3052 = vrot.slane %v3051, 2
    %v3053 = vadd.f32 %v3051, %v3052
    %v3054 = vrot.slane %v3053, 1
    %v3055 = vadd.f32 %v3053, %v3054
    %v3056 = vmul.f32 %v3055, 2.0
    %v3057 = vsub.f32 %v3048, %v3056
    %3058 = vmatprep.subr.mxu0 0.0
    %3059 = vmatpush1.xpose.msra.mxu0 %v1743
    %3060 = vmatprep.subr.mxu0 0.0
    %3061 = vmatpush1.xpose.msra.mxu0 0.0
    %3062 = vmatprep.subr.mxu0 0.0
    %3063 = vmatpush1.xpose.msra.mxu0 0.0
    %3064 = vmatprep.subr.mxu0 0.0
    %3065 = vmatpush1.xpose.msra.mxu0 0.0
    %3066 = vmatprep.subr.mxu0 0.0
    %3067 = vmatpush1.xpose.msra.mxu0 0.0
    %3068 = vmatprep.subr.mxu0 0.0
    %3069 = vmatpush1.xpose.msra.mxu0 0.0
    %3070 = vmatprep.subr.mxu0 0.0
    %3071 = vmatpush1.xpose.msra.mxu0 0.0
    %3072 = vmatprep.subr.mxu0 0.0
    %3073 = vmatpush1.xpose.msra.mxu0 0.0
    %3074 = vmatprep.subr.mxu0 0.0
    %3075 = vmatpush1.xpose.msra.mxu0 0.0
    %3076 = vmatprep.subr.mxu0 0.0
    %3077 = vmatpush1.xpose.msra.mxu0 0.0
    %3078 = vmatprep.subr.mxu0 0.0
    %3079 = vmatpush1.xpose.msra.mxu0 0.0
    %3080 = vmatprep.subr.mxu0 0.0
    %3081 = vmatpush1.xpose.msra.mxu0 0.0
    %3082 = vmatprep.subr.mxu0 0.0
    %3083 = vmatpush1.xpose.msra.mxu0 0.0
    %3084 = vmatprep.subr.mxu0 0.0
    %3085 = vmatpush1.xpose.msra.mxu0 0.0
    %3086 = vmatprep.subr.mxu0 0.0
    %3087 = vmatpush1.xpose.msra.mxu0 0.0
    %3088 = vmatprep.subr.mxu0 0.0
    %3089 = vmatpush1.xpose.msra.mxu0 0.0
    %3090 = vmatprep.subr.mxu0 0.0
    %3091 = vmatpush1.xpose.msra.mxu0 0.0
    %3092 = vmatprep.subr.mxu0 0.0
    %3093 = vmatpush1.xpose.msra.mxu0 0.0
    %3094 = vmatprep.subr.mxu0 0.0
    %3095 = vmatpush1.xpose.msra.mxu0 0.0
    %3096 = vmatprep.subr.mxu0 0.0
    %3097 = vmatpush1.xpose.msra.mxu0 0.0
    %3098 = vmatprep.subr.mxu0 0.0
    %3099 = vmatpush1.xpose.msra.mxu0 0.0
    %3100 = vmatprep.subr.mxu0 0.0
    %3101 = vmatpush1.xpose.msra.mxu0 0.0
    %3102 = vmatprep.subr.mxu0 0.0
    %3103 = vmatpush1.xpose.msra.mxu0 0.0
    %3104 = vmatprep.subr.mxu0 0.0
    %3105 = vmatpush1.xpose.msra.mxu0 0.0
    %3106 = vmatprep.subr.mxu0 0.0
    %3107 = vmatpush1.xpose.msra.mxu0 0.0
    %3108 = vmatprep.subr.mxu0 0.0
    %3109 = vmatpush1.xpose.msra.mxu0 0.0
    %3110 = vmatprep.subr.mxu0 0.0
    %3111 = vmatpush1.xpose.msra.mxu0 0.0
    %3112 = vmatprep.subr.mxu0 0.0
    %3113 = vmatpush1.xpose.msra.mxu0 0.0
    %3114 = vmatprep.subr.mxu0 0.0
    %3115 = vmatpush1.xpose.msra.mxu0 0.0
    %3116 = vmatprep.subr.mxu0 0.0
    %3117 = vmatpush1.xpose.msra.mxu0 0.0
    %3118 = vmatprep.subr.mxu0 0.0
    %3119 = vmatpush1.xpose.msra.mxu0 0.0
    %3120 = vmatprep.subr.mxu0 0.0
    %3121 = vmatpush1.xpose.msra.mxu0 0.0
    %3122 = vmatprep.mubr.f32.mxu0 0.0
    %3123 = vmatmul.mubr.f32.gmra.mrb[0].mxu0 %v1605
    %v3124 = vpop.f32.mrb[0].mxu0
    %v3125 = vadd.f32 0.0, %v3124
    %v3126 = vpop.f32.mrb[0].mxu0
    %3127 = vdwg.mxu0
    %v3128 = vmul.f32 %v3125, 5.0
    %3129 = vrot.lane.b32.xlu0 %v1264, 48
    %v3130 = vpop.permute.xlu0 %3129
    %v3132 = vsel %vm940, %v3130, 0.0
    %3133 = vadd.xlane.f32.xlu0 %v3132
    %v3134 = vpop.xlane.xlu0 %3133
    %v3135 = vmul.f32 %v3134, 5.0
    %v3136 = vsel %vm1273, %v3128, -inf
    %3137 = vmax.xlane.f32.xlu0 %v3136
    %v3138 = vpop.xlane.xlu0 %3137
    %v3139 = vsub.f32 %v3128, %v3138
    %v3140 = vmul.f32 %v3139, 1.442695
    %v3141 = vpow.pop %v3140
    %v3142 = vsel %vm1273, %v3141, 0.0
    %3143 = vadd.xlane.f32.xlu0 %v3142
    %v3144 = vpop.xlane.xlu0 %3143
    %v3145 = vlog2.pop %v3144
    %v3146 = vmul.f32 %v3145, 0.6931472
    %v3147 = vadd.f32 %v3146, %v3138
    %v3148 = vrot.slane %v3136, 4
    %v3149 = vmax.f32 %v3136, %v3148
    %v3150 = vrot.slane %v3149, 2
    %v3151 = vmax.f32 %v3149, %v3150
    %v3152 = vrot.slane %v3151, 1
    %v3153 = vmax.f32 %v3151, %v3152
    %v3154 = vsub.f32 %v3128, %v3153
    %v3155 = vmul.f32 %v3154, 1.442695
    %v3156 = vpow.pop %v3155
    %v3157 = vsel %vm1273, %v3156, 0.0
    %v3158 = vrot.slane %v3157, 4
    %v3159 = vadd.f32 %v3157, %v3158
    %v3160 = vrot.slane %v3159, 2
    %v3161 = vadd.f32 %v3159, %v3160
    %v3162 = vrot.slane %v3161, 1
    %v3163 = vadd.f32 %v3161, %v3162
    %v3164 = vlog2.pop %v3163
    %v3165 = vmul.f32 %v3164, 0.6931472
    %v3166 = vadd.f32 %v3165, %v3153
    %v3167 = vadd.f32 %v3147, 0.0
    %v3168 = vrot.slane %v3167, 4
    %v3169 = vadd.f32 %v3167, %v3168
    %v3170 = vrot.slane %v3169, 2
    %v3171 = vadd.f32 %v3169, %v3170
    %v3172 = vrot.slane %v3171, 1
    %v3173 = vadd.f32 %v3171, %v3172
    %v3174 = vadd.f32 %v3057, %v3173
    %v3175 = vsel %vm1273, %v3166, 0.0
    %3176 = vadd.xlane.f32.xlu0 %v3175
    %v3177 = vpop.xlane.xlu0 %3176
    %v3178 = vadd.f32 %v3177, 0.0
    %v3179 = vadd.f32 %v3174, %v3178
    %v3180 = vadd.f32 %v3135, 0.0
    %v3181 = vrot.slane %v3180, 4
    %v3182 = vadd.f32 %v3180, %v3181
    %v3183 = vrot.slane %v3182, 2
    %v3184 = vadd.f32 %v3182, %v3183
    %v3185 = vrot.slane %v3184, 1
    %v3186 = vadd.f32 %v3184, %v3185
    %v3187 = vmul.f32 %v3186, 2.0
    %v3188 = vsub.f32 %v3179, %v3187
    %v3189 = vmul.f32 %v3188, 0.0125
    %v3190 = vadd.f32 %v1183, %v3189
    %v3191 = vsub.f32 0.0, %v639
    %v3192 = vmul.f32 %v3191, 1.442695
    %v3193 = vpow.pop %v3192
    %v3194 = vadd.f32 %v3193, 1.0
    %v3195 = vrcp.pop %v3194
    %v3196 = vmul.f32 1.0, %v3195
    %v3197 = vmul.f32 %v657, 0.5
    %v3198 = vmul.f32 %v3197, %v657
    %3200 = vrot.lane.b32.xlu0 %v3198, 127
    %v3201 = vpop.permute.xlu0 %3200
    %v3203 = vadd.f32 %v639, %v3201
    %v3204 = vmul.f32 %v3203, 1.442695
    %v3205 = vpow.pop %v3204
    %3207 = vrot.lane.b32.xlu0 %v3205, 127
    %v3208 = vpop.permute.xlu0 %3207
    %v3210 = vmul.f32 %v3196, %v3208
    %v3211 = vlaneseq
    %v3212 = vand.u32 %v3211, 127
    %vm3213 = vcmp.eq.s32.totalorder %v3212, 0
    %vm3214 = vcmp.eq.s32.totalorder %v3212, 1
    %vm3215 = vcmp.eq.s32.totalorder %v3212, 2
    %vm3216 = vcmp.eq.s32.totalorder %v3212, 3
    %vm3217 = vcmp.eq.s32.totalorder %v3212, 4
    %3219 = vset.pattern.permute.xlu0 0
    %3220 = vperm.xlu0 %3219, %v3210
    %v3221 = vpop.permute.xlu0 %3220
    %v3223 = vsel %vm3217, %v3221, 0.0
    %3225 = vset.pattern.permute.xlu0 0
    %3226 = vperm.xlu0 %3225, %v3196
    %v3227 = vpop.permute.xlu0 %3226
    %v3229 = vsel %vm3216, %v3227, %v3223
    %3230 = vset.pattern.permute.xlu0 2
    %3231 = vperm.xlu0 %3230, %v639
    %v3232 = vpop.permute.xlu0 %3231
    %v3234 = vsel %vm3215, %v3232, %v3229
    %3235 = vset.pattern.permute.xlu0 1
    %3236 = vperm.xlu0 %3235, %v639
    %v3237 = vpop.permute.xlu0 %3236
    %v3239 = vsel %vm3214, %v3237, %v3234
    %3240 = vset.pattern.permute.xlu0 0
    %3241 = vperm.xlu0 %3240, %v639
    %v3242 = vpop.permute.xlu0 %3241
    %v3244 = vsel %vm3213, %v3242, %v3239
    %3245 = vst [vmem:[%s19] sm:$0xff] %v3244
    %vm3246 = vcmask 0
    %3247 = vst.msk [vmem:[#allocation2] sm:$0x1] %vm3246, %v3190
    // Predicated region
    $region78: #{msmodel_forward_fused.1} parent=1 // pred_check
      _
    $region79: #{msmodel_forward_fused.1} parent=1 // pred_check_branch
      %3249 = sbr.rel (0) target = $region81
    $region80: #{msmodel_forward_fused.1} parent=1 // pred_region
      _
    $region81: #{msmodel_forward_fused.1} parent=1 // pred_fallthru
      _
    // Predicated region
    $region82: #{msmodel_forward_fused.1} parent=1 // pred_check
      _
    $region83: #{msmodel_forward_fused.1} parent=1 // pred_check_branch
      %3251 = sbr.rel (0) target = $region85
    $region84: #{msmodel_forward_fused.1} parent=1 // pred_region
      %s3253 = ssub.s32 16, 16
      %3254 = vsyncadd [#allocation3], %s3253
      %s3256 = sshll.u32 [#allocation2], 4
      %s3257 = int_to_ptr.vmem [resolvable:$true] %s3256
      %3259 = dma.vmem_to_hbm [thread:$0]  %s3257, 16, %s20, [#allocation3]
    $region85: #{msmodel_forward_fused.1} parent=1 // pred_fallthru
      _
    // Predicated region
    $region86: #{msmodel_forward_fused.1} parent=1 // pred_check
      _
    $region87: #{msmodel_forward_fused.1} parent=1 // pred_check_branch
      %3261 = sbr.rel (0) target = $region89
    $region88: #{msmodel_forward_fused.1} parent=1 // pred_region
      _
    $region89: #{msmodel_forward_fused.1} parent=1 // pred_fallthru
      _
    // Predicated region
    $region90: #{msmodel_forward_fused.1} parent=1 // pred_check
      _
    $region91: #{msmodel_forward_fused.1} parent=1 // pred_check_branch
      %3263 = sbr.rel (0) target = $region93
    $region92: #{msmodel_forward_fused.1} parent=1 // pred_region
      %3264 = dma.done [#allocation3], 16
    $region93: #{msmodel_forward_fused.1} parent=1 // pred_fallthru
      _
    %3265 = vsyncpa [#allocation3], 1

</llo_original>
